<compile_context>
chip_gen: v7x
topology: tpu7x:2x2x1
jax: 0.10.0
libtpu: 0.0.40
codegen_flags: <defaults>
</compile_context>

<pallas_src>
import jax
import jax.numpy as jnp
from jax.experimental import pallas as pl
from jax.experimental.pallas import tpu as pltpu


_VMEM_SPEC = pl.BlockSpec(memory_space=pltpu.MemorySpace.VMEM)


# ----------------------------------------------------------------------------
# GRU cell math (PyTorch nn.GRU gate order r|z|n, input projections precomputed)
# ----------------------------------------------------------------------------
def _gru_gates(gi_r, gi_z, gi_n, h, u_r, u_z, u_n, b_hn):
    gh_r = jnp.dot(h, u_r, preferred_element_type=jnp.float32)
    gh_z = jnp.dot(h, u_z, preferred_element_type=jnp.float32)
    gh_n = jnp.dot(h, u_n, preferred_element_type=jnp.float32) + b_hn
    r = jax.nn.sigmoid(gi_r + gh_r)
    z = jax.nn.sigmoid(gi_z + gh_z)
    n = jnp.tanh(gi_n + r * gh_n)
    return (1.0 - z) * n + z * h


# ----------------------------------------------------------------------------
# Pallas kernels (single invocation, no grid; everything VMEM-resident)
# ----------------------------------------------------------------------------
def encoder_kernel(x_ref, lens_ref,
                   wr_ref, wz_ref, wn_ref,
                   ur_ref, uz_ref, un_ref,
                   br_ref, bz_ref, bni_ref, bnh_ref,
                   hsel_ref,
                   gir_s, giz_s, gin_s):
    TB, _ = x_ref.shape
    Bp, H = hsel_ref.shape
    T = TB // Bp

    # Batched input projections for all timesteps (one MXU pass per gate).
    x = x_ref[...]                                                        # (T*Bp, E)
    gir_s[...] = jnp.dot(x, wr_ref[...], preferred_element_type=jnp.float32) + br_ref[...]
    giz_s[...] = jnp.dot(x, wz_ref[...], preferred_element_type=jnp.float32) + bz_ref[...]
    gin_s[...] = jnp.dot(x, wn_ref[...], preferred_element_type=jnp.float32) + bni_ref[...]

    u_r = ur_ref[...]
    u_z = uz_ref[...]
    u_n = un_ref[...]
    b_hn = jnp.broadcast_to(bnh_ref[...], (Bp, H))                        # hoisted
    last_t = lens_ref[...] - 1                                            # (Bp, 1) int32

    h0 = jnp.zeros((Bp, H), jnp.float32)

    def step(t, carry):
        h, h_sel = carry
        row = pl.multiple_of(t * Bp, Bp)
        gi_r = gir_s[pl.ds(row, Bp), :]
        gi_z = giz_s[pl.ds(row, Bp), :]
        gi_n = gin_s[pl.ds(row, Bp), :]
        h_new = _gru_gates(gi_r, gi_z, gi_n, h, u_r, u_z, u_n, b_hn)
        h_sel = jnp.where(last_t == t, h_new, h_sel)   # hidden at last valid step
        return h_new, h_sel

    _, h_sel = jax.lax.fori_loop(0, T, step, (h0, h0), unroll=True)
    hsel_ref[...] = h_sel                                                 # (Bp, H) only


def decoder_kernel(y_ref, h0_ref,
                   wr_ref, wz_ref, wn_ref,
                   ur_ref, uz_ref, un_ref,
                   br_ref, bz_ref, bni_ref, bnh_ref,
                   wout_ref, bout_ref,
                   out_ref,
                   gir_s, giz_s, gin_s, hall_s):
    TB, _ = y_ref.shape
    Bp, H = h0_ref.shape
    T = TB // Bp

    y = y_ref[...]                                                        # (T*Bp, E)
    gir_s[...] = jnp.dot(y, wr_ref[...], preferred_element_type=jnp.float32) + br_ref[...]
    giz_s[...] = jnp.dot(y, wz_ref[...], preferred_element_type=jnp.float32) + bz_ref[...]
    gin_s[...] = jnp.dot(y, wn_ref[...], preferred_element_type=jnp.float32) + bni_ref[...]

    u_r = ur_ref[...]
    u_z = uz_ref[...]
    u_n = un_ref[...]
    b_hn = jnp.broadcast_to(bnh_ref[...], (Bp, H))

    def step(t, h):
        row = pl.multiple_of(t * Bp, Bp)
        gi_r = gir_s[pl.ds(row, Bp), :]
        gi_z = giz_s[pl.ds(row, Bp), :]
        gi_n = gin_s[pl.ds(row, Bp), :]
        h_new = _gru_gates(gi_r, gi_z, gi_n, h, u_r, u_z, u_n, b_hn)
        hall_s[pl.ds(row, Bp), :] = h_new
        return h_new

    jax.lax.fori_loop(0, T, step, h0_ref[...], unroll=True)

    # Batched output projection + log_softmax over all timesteps at once.
    logits = jnp.dot(hall_s[...], wout_ref[...], preferred_element_type=jnp.float32)
    logits = logits + bout_ref[...]                                       # (T*Bp, V)
    m = jnp.max(logits, axis=-1, keepdims=True)
    lse = jnp.log(jnp.sum(jnp.exp(logits - m), axis=-1, keepdims=True)) + m
    out_ref[...] = logits - lse


# ----------------------------------------------------------------------------
# pallas_call wrappers
# ----------------------------------------------------------------------------
def run_gru_encoder(x2d, lens, wr, wz, wn, ur, uz, un, br, bz, bni, bnh):
    TB = x2d.shape[0]
    Bp = lens.shape[0]
    H = ur.shape[0]
    return pl.pallas_call(
        encoder_kernel,
        out_shape=jax.ShapeDtypeStruct((Bp, H), jnp.float32),
        in_specs=[_VMEM_SPEC] * 12,
        out_specs=_VMEM_SPEC,
        scratch_shapes=[pltpu.VMEM((TB, H), jnp.float32)] * 3,
    )(x2d, lens, wr, wz, wn, ur, uz, un, br, bz, bni, bnh)


def run_gru_decoder(y2d, h0, wr, wz, wn, ur, uz, un, br, bz, bni, bnh, wout, bout):
    TB = y2d.shape[0]
    _, H = h0.shape
    V = wout.shape[1]
    return pl.pallas_call(
        decoder_kernel,
        out_shape=jax.ShapeDtypeStruct((TB, V), jnp.float32),
        in_specs=[_VMEM_SPEC] * 14,
        out_specs=_VMEM_SPEC,
        scratch_shapes=[pltpu.VMEM((TB, H), jnp.float32)] * 4,
    )(y2d, h0, wr, wz, wn, ur, uz, un, br, bz, bni, bnh, wout, bout)


# ----------------------------------------------------------------------------
# End-to-end forward (glue in plain JAX, hot path in Pallas)
# ----------------------------------------------------------------------------
def _split_gates(w, H):
    return w[:, :H], w[:, H:2 * H], w[:, 2 * H:]


@jax.jit
def e2e_forward(params, xs, x_lens, ys, start_idx):
    """xs: (B, T_x) int32, x_lens: (B,) int32, ys: (B, T_y) int32.
    Returns (B, T_y, tgt_vocab) float32 log-probabilities (teacher forcing = 1.0)."""
    B, T_x = xs.shape
    T_y = ys.shape[1]
    H = params["enc_whh"].shape[0]
    E = params["enc_embed"].shape[1]
    V = params["dec_wout"].shape[1]

    Bp = ((B + 7) // 8) * 8                      # pad batch to f32 sublane count
    pad = Bp - B

    x_lens = jnp.maximum(x_lens.astype(jnp.int32), 1)          # guard lens == 0
    lens_p = jnp.pad(x_lens, (0, pad), constant_values=1).reshape(Bp, 1)

    # ---- encoder ----
    xs_p = jnp.pad(xs, ((0, pad), (0, 0)))
    enc_emb = jnp.take(params["enc_embed"], xs_p, axis=0)       # (Bp, T_x, E)
    enc_emb = jnp.transpose(enc_emb, (1, 0, 2)).reshape(T_x * Bp, E)
    # TODO(synk): at realistic sizes, fuse the embedding gather into the kernel
    # (scalar-prefetch token ids) instead of materializing (T, B, E) in HBM.

    e_wr, e_wz, e_wn = _split_gates(params["enc_wih"], H)
    e_ur, e_uz, e_un = _split_gates(params["enc_whh"], H)
    e_bir, e_biz, e_bin = _split_gates(params["enc_bih"], H)
    e_bhr, e_bhz, e_bhn = _split_gates(params["enc_bhh"], H)

    dec_h0 = run_gru_encoder(enc_emb, lens_p,
                             e_wr, e_wz, e_wn, e_ur, e_uz, e_un,
                             e_bir + e_bhr, e_biz + e_bhz, e_bin, e_bhn)   # (Bp, H)

    # ---- decoder (always teacher-forced) ----
    ys_p = jnp.pad(ys, ((0, pad), (0, 0)))
    start_tok = jnp.full((Bp, 1), start_idx, dtype=ys.dtype)
    dec_in = jnp.concatenate([start_tok, ys_p[:, :-1]], axis=1)            # (Bp, T_y)
    dec_emb = jnp.take(params["dec_embed"], dec_in, axis=0)
    dec_emb = jnp.transpose(dec_emb, (1, 0, 2)).reshape(T_y * Bp, E)

    d_wr, d_wz, d_wn = _split_gates(params["dec_wih"], H)
    d_ur, d_uz, d_un = _split_gates(params["dec_whh"], H)
    d_bir, d_biz, d_bin = _split_gates(params["dec_bih"], H)
    d_bhr, d_bhz, d_bhn = _split_gates(params["dec_bhh"], H)

    dec_out = run_gru_decoder(dec_emb, dec_h0,
                              d_wr, d_wz, d_wn, d_ur, d_uz, d_un,
                              d_bir + d_bhr, d_biz + d_bhz, d_bin, d_bhn,
                              params["dec_wout"], params["dec_bout"])      # (T_y*Bp, V)

    out = dec_out.reshape(T_y, Bp, V)[:, :B, :]
    return jnp.transpose(out, (1, 0, 2))                                   # (B, T_y, V)


# ----------------------------------------------------------------------------
# Pure-JAX reference (for correctness check)
# ----------------------------------------------------------------------------
def reference_forward(params, xs, x_lens, ys, start_idx):
    B, T_x = xs.shape
    T_y = ys.shape[1]
    H = params["enc_whh"].shape[0]

    def gru_step(h, x, wih, whh, bih, bhh):
        gi = x @ wih + bih
        gh = h @ whh + bhh
        i_r, i_z, i_n = jnp.split(gi, 3, axis=-1)
        h_r, h_z, h_n = jnp.split(gh, 3, axis=-1)
        r = jax.nn.sigmoid(i_r + h_r)
        z = jax.nn.sigmoid(i_z + h_z)
        n = jnp.tanh(i_n + r * h_n)
        return (1.0 - z) * n + z * h

    enc_emb = jnp.take(params["enc_embed"], xs, axis=0).transpose(1, 0, 2)
    h = jnp.zeros((B, H), jnp.float32)
    enc_outs = []
    for t in range(T_x):
        h = gru_step(h, enc_emb[t], params["enc_wih"], params["enc_whh"],
                     params["enc_bih"][0], params["enc_bhh"][0])
        enc_outs.append(h)
    enc_outs = jnp.stack(enc_outs)                                   # (T_x, B, H)
    dec_h = enc_outs[jnp.maximum(x_lens, 1) - 1, jnp.arange(B), :]

    start_tok = jnp.full((B, 1), start_idx, dtype=ys.dtype)
    dec_in = jnp.concatenate([start_tok, ys[:, :-1]], axis=1)
    dec_emb = jnp.take(params["dec_embed"], dec_in, axis=0).transpose(1, 0, 2)
    outs = []
    for t in range(T_y):
        dec_h = gru_step(dec_h, dec_emb[t], params["dec_wih"], params["dec_whh"],
                         params["dec_bih"][0], params["dec_bhh"][0])
        logits = dec_h @ params["dec_wout"] + params["dec_bout"][0]
        outs.append(jax.nn.log_softmax(logits, axis=-1))
    return jnp.stack(outs).transpose(1, 0, 2)


# ----------------------------------------------------------------------------
# Deterministic parameter init + driver
# ----------------------------------------------------------------------------
def init_params(key, src_vocab, tgt_vocab, embed, hidden):
    ks = jax.random.split(key, 12)
    s = 1.0 / jnp.sqrt(hidden)
    u = lambda k, shape: jax.random.uniform(k, shape, jnp.float32, -s, s)
    return {
        "enc_embed": jax.random.normal(ks[0], (src_vocab, embed), jnp.float32) * 0.1,
        "enc_wih": u(ks[1], (embed, 3 * hidden)),
        "enc_whh": u(ks[2], (hidden, 3 * hidden)),
        "enc_bih": u(ks[3], (1, 3 * hidden)),
        "enc_bhh": u(ks[4], (1, 3 * hidden)),
        "dec_embed": jax.random.normal(ks[5], (tgt_vocab, embed), jnp.float32) * 0.1,
        "dec_wih": u(ks[6], (embed, 3 * hidden)),
        "dec_whh": u(ks[7], (hidden, 3 * hidden)),
        "dec_bih": u(ks[8], (1, 3 * hidden)),
        "dec_bhh": u(ks[9], (1, 3 * hidden)),
        "dec_wout": u(ks[10], (hidden, tgt_vocab)),
        "dec_bout": u(ks[11], (1, tgt_vocab)),
    }


if __name__ == "__main__":
    B, T_x, T_y = 2, 8, 6
    E, H = 32, 32
    SRC_VOCAB, TGT_VOCAB = 20, 16
    START_IDX = 1

    key = jax.random.PRNGKey(0)
    kp, kx, ky = jax.random.split(key, 3)
    params = init_params(kp, SRC_VOCAB, TGT_VOCAB, E, H)

    xs = jax.random.randint(kx, (B, T_x), 0, SRC_VOCAB, dtype=jnp.int32)
    ys = jax.random.randint(ky, (B, T_y), 0, TGT_VOCAB, dtype=jnp.int32)
    x_lens = jnp.array([T_x, T_x - 3], dtype=jnp.int32)

    out = e2e_forward(params, xs, x_lens, ys, START_IDX)
    out = jax.block_until_ready(out)
    assert out.shape == (B, T_y, TGT_VOCAB), out.shape

    ref = reference_forward(params, xs, x_lens, ys, START_IDX)
    err = float(jnp.max(jnp.abs(out - ref)))
    assert err < 1e-4, err

    print("KERNEL_OK")
</pallas_src>

<mosaic_0001>
module attributes {stable_mosaic.version = 11 : i64} {
  func.func @encoder_kernel(%arg0: memref<64x32xf32, #tpu.memory_space<vmem>>, %arg1: memref<8x1xi32, #tpu.memory_space<vmem>>, %arg2: memref<32x32xf32, #tpu.memory_space<vmem>>, %arg3: memref<32x32xf32, #tpu.memory_space<vmem>>, %arg4: memref<32x32xf32, #tpu.memory_space<vmem>>, %arg5: memref<32x32xf32, #tpu.memory_space<vmem>>, %arg6: memref<32x32xf32, #tpu.memory_space<vmem>>, %arg7: memref<32x32xf32, #tpu.memory_space<vmem>>, %arg8: memref<1x32xf32, #tpu.memory_space<vmem>>, %arg9: memref<1x32xf32, #tpu.memory_space<vmem>>, %arg10: memref<1x32xf32, #tpu.memory_space<vmem>>, %arg11: memref<1x32xf32, #tpu.memory_space<vmem>>, %arg12: memref<8x32xf32, #tpu.memory_space<vmem>>, %arg13: memref<64x32xf32, #tpu.memory_space<vmem>>, %arg14: memref<64x32xf32, #tpu.memory_space<vmem>>, %arg15: memref<64x32xf32, #tpu.memory_space<vmem>>) attributes {dimension_semantics = [], scalar_prefetch = 0 : i64, scratch_operands = 3 : i64, tpu.core_type = #tpu.core_type<tc>} {
    %c0 = arith.constant 0 : index
    %c0_0 = arith.constant 0 : index
    %0 = vector.load %arg0[%c0, %c0_0] : memref<64x32xf32, #tpu.memory_space<vmem>>, vector<64x32xf32>
    %c0_1 = arith.constant 0 : index
    %c0_2 = arith.constant 0 : index
    %1 = vector.load %arg2[%c0_1, %c0_2] : memref<32x32xf32, #tpu.memory_space<vmem>>, vector<32x32xf32>
    %cst = arith.constant dense<0.000000e+00> : vector<64x32xf32>
    %2 = tpu.matmul %0, %1, %cst {dimension_numbers = #tpu.dot_dimension_numbers<[1], [0], [0], [1], [0, 0, 1, 1], [], []>} : vector<64x32xf32>, vector<32x32xf32>, vector<64x32xf32> -> vector<64x32xf32>
    %c0_3 = arith.constant 0 : index
    %c0_4 = arith.constant 0 : index
    %3 = vector.load %arg8[%c0_3, %c0_4] : memref<1x32xf32, #tpu.memory_space<vmem>>, vector<1x32xf32>
    %4 = vector.broadcast %3 : vector<1x32xf32> to vector<64x32xf32>
    %5 = arith.addf %2, %4 : vector<64x32xf32>
    %c0_5 = arith.constant 0 : index
    %c0_6 = arith.constant 0 : index
    %6 = vector.load %arg13[%c0_5, %c0_6] : memref<64x32xf32, #tpu.memory_space<vmem>>, vector<64x32xf32>
    tpu.vector_store %arg13[%c0_5, %c0_6], %5 {strides = array<i32>} : memref<64x32xf32, #tpu.memory_space<vmem>>, vector<64x32xf32>,
    %c0_7 = arith.constant 0 : index
    %c0_8 = arith.constant 0 : index
    %7 = vector.load %arg3[%c0_7, %c0_8] : memref<32x32xf32, #tpu.memory_space<vmem>>, vector<32x32xf32>
    %cst_9 = arith.constant dense<0.000000e+00> : vector<64x32xf32>
    %8 = tpu.matmul %0, %7, %cst_9 {dimension_numbers = #tpu.dot_dimension_numbers<[1], [0], [0], [1], [0, 0, 1, 1], [], []>} : vector<64x32xf32>, vector<32x32xf32>, vector<64x32xf32> -> vector<64x32xf32>
    %c0_10 = arith.constant 0 : index
    %c0_11 = arith.constant 0 : index
    %9 = vector.load %arg9[%c0_10, %c0_11] : memref<1x32xf32, #tpu.memory_space<vmem>>, vector<1x32xf32>
    %10 = vector.broadcast %9 : vector<1x32xf32> to vector<64x32xf32>
    %11 = arith.addf %8, %10 : vector<64x32xf32>
    %c0_12 = arith.constant 0 : index
    %c0_13 = arith.constant 0 : index
    %12 = vector.load %arg14[%c0_12, %c0_13] : memref<64x32xf32, #tpu.memory_space<vmem>>, vector<64x32xf32>
    tpu.vector_store %arg14[%c0_12, %c0_13], %11 {strides = array<i32>} : memref<64x32xf32, #tpu.memory_space<vmem>>, vector<64x32xf32>,
    %c0_14 = arith.constant 0 : index
    %c0_15 = arith.constant 0 : index
    %13 = vector.load %arg4[%c0_14, %c0_15] : memref<32x32xf32, #tpu.memory_space<vmem>>, vector<32x32xf32>
    %cst_16 = arith.constant dense<0.000000e+00> : vector<64x32xf32>
    %14 = tpu.matmul %0, %13, %cst_16 {dimension_numbers = #tpu.dot_dimension_numbers<[1], [0], [0], [1], [0, 0, 1, 1], [], []>} : vector<64x32xf32>, vector<32x32xf32>, vector<64x32xf32> -> vector<64x32xf32>
    %c0_17 = arith.constant 0 : index
    %c0_18 = arith.constant 0 : index
    %15 = vector.load %arg10[%c0_17, %c0_18] : memref<1x32xf32, #tpu.memory_space<vmem>>, vector<1x32xf32>
    %16 = vector.broadcast %15 : vector<1x32xf32> to vector<64x32xf32>
    %17 = arith.addf %14, %16 : vector<64x32xf32>
    %c0_19 = arith.constant 0 : index
    %c0_20 = arith.constant 0 : index
    %18 = vector.load %arg15[%c0_19, %c0_20] : memref<64x32xf32, #tpu.memory_space<vmem>>, vector<64x32xf32>
    tpu.vector_store %arg15[%c0_19, %c0_20], %17 {strides = array<i32>} : memref<64x32xf32, #tpu.memory_space<vmem>>, vector<64x32xf32>,
    %c0_21 = arith.constant 0 : index
    %c0_22 = arith.constant 0 : index
    %19 = vector.load %arg5[%c0_21, %c0_22] : memref<32x32xf32, #tpu.memory_space<vmem>>, vector<32x32xf32>
    %c0_23 = arith.constant 0 : index
    %c0_24 = arith.constant 0 : index
    %20 = vector.load %arg6[%c0_23, %c0_24] : memref<32x32xf32, #tpu.memory_space<vmem>>, vector<32x32xf32>
    %c0_25 = arith.constant 0 : index
    %c0_26 = arith.constant 0 : index
    %21 = vector.load %arg7[%c0_25, %c0_26] : memref<32x32xf32, #tpu.memory_space<vmem>>, vector<32x32xf32>
    %c0_27 = arith.constant 0 : index
    %c0_28 = arith.constant 0 : index
    %22 = vector.load %arg11[%c0_27, %c0_28] : memref<1x32xf32, #tpu.memory_space<vmem>>, vector<1x32xf32>
    %23 = vector.shape_cast %22 : vector<1x32xf32> to vector<1x32xf32>
    %24 = vector.broadcast %23 : vector<1x32xf32> to vector<8x32xf32>
    %c0_29 = arith.constant 0 : index
    %c0_30 = arith.constant 0 : index
    %25 = vector.load %arg1[%c0_29, %c0_30] : memref<8x1xi32, #tpu.memory_space<vmem>>, vector<8x1xi32>
    %c1_i32 = arith.constant 1 : i32
    %26 = vector.broadcast %c1_i32 : i32 to vector<8x1xi32>
    %27 = arith.subi %25, %26 : vector<8x1xi32>
    %cst_31 = arith.constant 0.000000e+00 : f32
    %28 = vector.broadcast %cst_31 : f32 to vector<8x32xf32>
    %c0_i32 = arith.constant 0 : i32
    %c8_i32 = arith.constant 8 : i32
    %29 = arith.muli %c0_i32, %c8_i32 : i32
    %30 = tpu.assume_multiple %29, 8 : i32
    %31 = arith.index_cast %30 : i32 to index
    %c0_32 = arith.constant 0 : index
    %32 = vector.load %arg13[%31, %c0_32] : memref<64x32xf32, #tpu.memory_space<vmem>>, vector<8x32xf32>
    %33 = arith.index_cast %30 : i32 to index
    %c0_33 = arith.constant 0 : index
    %34 = vector.load %arg14[%33, %c0_33] : memref<64x32xf32, #tpu.memory_space<vmem>>, vector<8x32xf32>
    %35 = arith.index_cast %30 : i32 to index
    %c0_34 = arith.constant 0 : index
    %36 = vector.load %arg15[%35, %c0_34] : memref<64x32xf32, #tpu.memory_space<vmem>>, vector<8x32xf32>
    %cst_35 = arith.constant dense<0.000000e+00> : vector<8x32xf32>
    %37 = tpu.matmul %28, %19, %cst_35 {dimension_numbers = #tpu.dot_dimension_numbers<[1], [0], [0], [1], [0, 0, 1, 1], [], []>} : vector<8x32xf32>, vector<32x32xf32>, vector<8x32xf32> -> vector<8x32xf32>
    %cst_36 = arith.constant dense<0.000000e+00> : vector<8x32xf32>
    %38 = tpu.matmul %28, %20, %cst_36 {dimension_numbers = #tpu.dot_dimension_numbers<[1], [0], [0], [1], [0, 0, 1, 1], [], []>} : vector<8x32xf32>, vector<32x32xf32>, vector<8x32xf32> -> vector<8x32xf32>
    %cst_37 = arith.constant dense<0.000000e+00> : vector<8x32xf32>
    %39 = tpu.matmul %28, %21, %cst_37 {dimension_numbers = #tpu.dot_dimension_numbers<[1], [0], [0], [1], [0, 0, 1, 1], [], []>} : vector<8x32xf32>, vector<32x32xf32>, vector<8x32xf32> -> vector<8x32xf32>
    %40 = arith.addf %39, %24 : vector<8x32xf32>
    %41 = arith.addf %32, %37 : vector<8x32xf32>
    %42 = arith.negf %41 : vector<8x32xf32>
    %43 = math.exp %42 : vector<8x32xf32>
    %cst_38 = arith.constant 1.000000e+00 : f32
    %44 = vector.broadcast %cst_38 : f32 to vector<8x32xf32>
    %45 = arith.addf %44, %43 : vector<8x32xf32>
    %46 = arith.divf %44, %45 : vector<8x32xf32>
    %47 = arith.addf %34, %38 : vector<8x32xf32>
    %48 = arith.negf %47 : vector<8x32xf32>
    %49 = math.exp %48 : vector<8x32xf32>
    %cst_39 = arith.constant 1.000000e+00 : f32
    %50 = vector.broadcast %cst_39 : f32 to vector<8x32xf32>
    %51 = arith.addf %50, %49 : vector<8x32xf32>
    %52 = arith.divf %50, %51 : vector<8x32xf32>
    %53 = arith.mulf %46, %40 : vector<8x32xf32>
    %54 = arith.addf %36, %53 : vector<8x32xf32>
    %55 = math.tanh %54 : vector<8x32xf32>
    %cst_40 = arith.constant 1.000000e+00 : f32
    %56 = vector.broadcast %cst_40 : f32 to vector<8x32xf32>
    %57 = arith.subf %56, %52 : vector<8x32xf32>
    %58 = arith.mulf %57, %55 : vector<8x32xf32>
    %59 = arith.mulf %52, %28 : vector<8x32xf32>
    %60 = arith.addf %58, %59 : vector<8x32xf32>
    %61 = vector.broadcast %c0_i32 : i32 to vector<8x1xi32>
    %62 = arith.cmpi eq, %27, %61 : vector<8x1xi32>
    %63 = vector.shape_cast %62 : vector<8x1xi1> to vector<8x1xi1>
    %64 = vector.broadcast %63 : vector<8x1xi1> to vector<8x32xi1>
    %65 = arith.select %64, %60, %28 : vector<8x32xi1>, vector<8x32xf32>
    %c1_i32_41 = arith.constant 1 : i32
    %c8_i32_42 = arith.constant 8 : i32
    %66 = arith.muli %c1_i32_41, %c8_i32_42 : i32
    %67 = tpu.assume_multiple %66, 8 : i32
    %68 = arith.index_cast %67 : i32 to index
    %c0_43 = arith.constant 0 : index
    %69 = vector.load %arg13[%68, %c0_43] : memref<64x32xf32, #tpu.memory_space<vmem>>, vector<8x32xf32>
    %70 = arith.index_cast %67 : i32 to index
    %c0_44 = arith.constant 0 : index
    %71 = vector.load %arg14[%70, %c0_44] : memref<64x32xf32, #tpu.memory_space<vmem>>, vector<8x32xf32>
    %72 = arith.index_cast %67 : i32 to index
    %c0_45 = arith.constant 0 : index
    %73 = vector.load %arg15[%72, %c0_45] : memref<64x32xf32, #tpu.memory_space<vmem>>, vector<8x32xf32>
    %cst_46 = arith.constant dense<0.000000e+00> : vector<8x32xf32>
    %74 = tpu.matmul %60, %19, %cst_46 {dimension_numbers = #tpu.dot_dimension_numbers<[1], [0], [0], [1], [0, 0, 1, 1], [], []>} : vector<8x32xf32>, vector<32x32xf32>, vector<8x32xf32> -> vector<8x32xf32>
    %cst_47 = arith.constant dense<0.000000e+00> : vector<8x32xf32>
    %75 = tpu.matmul %60, %20, %cst_47 {dimension_numbers = #tpu.dot_dimension_numbers<[1], [0], [0], [1], [0, 0, 1, 1], [], []>} : vector<8x32xf32>, vector<32x32xf32>, vector<8x32xf32> -> vector<8x32xf32>
    %cst_48 = arith.constant dense<0.000000e+00> : vector<8x32xf32>
    %76 = tpu.matmul %60, %21, %cst_48 {dimension_numbers = #tpu.dot_dimension_numbers<[1], [0], [0], [1], [0, 0, 1, 1], [], []>} : vector<8x32xf32>, vector<32x32xf32>, vector<8x32xf32> -> vector<8x32xf32>
    %77 = arith.addf %76, %24 : vector<8x32xf32>
    %78 = arith.addf %69, %74 : vector<8x32xf32>
    %79 = arith.negf %78 : vector<8x32xf32>
    %80 = math.exp %79 : vector<8x32xf32>
    %cst_49 = arith.constant 1.000000e+00 : f32
    %81 = vector.broadcast %cst_49 : f32 to vector<8x32xf32>
    %82 = arith.addf %81, %80 : vector<8x32xf32>
    %83 = arith.divf %81, %82 : vector<8x32xf32>
    %84 = arith.addf %71, %75 : vector<8x32xf32>
    %85 = arith.negf %84 : vector<8x32xf32>
    %86 = math.exp %85 : vector<8x32xf32>
    %cst_50 = arith.constant 1.000000e+00 : f32
    %87 = vector.broadcast %cst_50 : f32 to vector<8x32xf32>
    %88 = arith.addf %87, %86 : vector<8x32xf32>
    %89 = arith.divf %87, %88 : vector<8x32xf32>
    %90 = arith.mulf %83, %77 : vector<8x32xf32>
    %91 = arith.addf %73, %90 : vector<8x32xf32>
    %92 = math.tanh %91 : vector<8x32xf32>
    %cst_51 = arith.constant 1.000000e+00 : f32
    %93 = vector.broadcast %cst_51 : f32 to vector<8x32xf32>
    %94 = arith.subf %93, %89 : vector<8x32xf32>
    %95 = arith.mulf %94, %92 : vector<8x32xf32>
    %96 = arith.mulf %89, %60 : vector<8x32xf32>
    %97 = arith.addf %95, %96 : vector<8x32xf32>
    %98 = vector.broadcast %c1_i32_41 : i32 to vector<8x1xi32>
    %99 = arith.cmpi eq, %27, %98 : vector<8x1xi32>
    %100 = vector.shape_cast %99 : vector<8x1xi1> to vector<8x1xi1>
    %101 = vector.broadcast %100 : vector<8x1xi1> to vector<8x32xi1>
    %102 = arith.select %101, %97, %65 : vector<8x32xi1>, vector<8x32xf32>
    %c2_i32 = arith.constant 2 : i32
    %c8_i32_52 = arith.constant 8 : i32
    %103 = arith.muli %c2_i32, %c8_i32_52 : i32
    %104 = tpu.assume_multiple %103, 8 : i32
    %105 = arith.index_cast %104 : i32 to index
    %c0_53 = arith.constant 0 : index
    %106 = vector.load %arg13[%105, %c0_53] : memref<64x32xf32, #tpu.memory_space<vmem>>, vector<8x32xf32>
    %107 = arith.index_cast %104 : i32 to index
    %c0_54 = arith.constant 0 : index
    %108 = vector.load %arg14[%107, %c0_54] : memref<64x32xf32, #tpu.memory_space<vmem>>, vector<8x32xf32>
    %109 = arith.index_cast %104 : i32 to index
    %c0_55 = arith.constant 0 : index
    %110 = vector.load %arg15[%109, %c0_55] : memref<64x32xf32, #tpu.memory_space<vmem>>, vector<8x32xf32>
    %cst_56 = arith.constant dense<0.000000e+00> : vector<8x32xf32>
    %111 = tpu.matmul %97, %19, %cst_56 {dimension_numbers = #tpu.dot_dimension_numbers<[1], [0], [0], [1], [0, 0, 1, 1], [], []>} : vector<8x32xf32>, vector<32x32xf32>, vector<8x32xf32> -> vector<8x32xf32>
    %cst_57 = arith.constant dense<0.000000e+00> : vector<8x32xf32>
    %112 = tpu.matmul %97, %20, %cst_57 {dimension_numbers = #tpu.dot_dimension_numbers<[1], [0], [0], [1], [0, 0, 1, 1], [], []>} : vector<8x32xf32>, vector<32x32xf32>, vector<8x32xf32> -> vector<8x32xf32>
    %cst_58 = arith.constant dense<0.000000e+00> : vector<8x32xf32>
    %113 = tpu.matmul %97, %21, %cst_58 {dimension_numbers = #tpu.dot_dimension_numbers<[1], [0], [0], [1], [0, 0, 1, 1], [], []>} : vector<8x32xf32>, vector<32x32xf32>, vector<8x32xf32> -> vector<8x32xf32>
    %114 = arith.addf %113, %24 : vector<8x32xf32>
    %115 = arith.addf %106, %111 : vector<8x32xf32>
    %116 = arith.negf %115 : vector<8x32xf32>
    %117 = math.exp %116 : vector<8x32xf32>
    %cst_59 = arith.constant 1.000000e+00 : f32
    %118 = vector.broadcast %cst_59 : f32 to vector<8x32xf32>
    %119 = arith.addf %118, %117 : vector<8x32xf32>
    %120 = arith.divf %118, %119 : vector<8x32xf32>
    %121 = arith.addf %108, %112 : vector<8x32xf32>
    %122 = arith.negf %121 : vector<8x32xf32>
    %123 = math.exp %122 : vector<8x32xf32>
    %cst_60 = arith.constant 1.000000e+00 : f32
    %124 = vector.broadcast %cst_60 : f32 to vector<8x32xf32>
    %125 = arith.addf %124, %123 : vector<8x32xf32>
    %126 = arith.divf %124, %125 : vector<8x32xf32>
    %127 = arith.mulf %120, %114 : vector<8x32xf32>
    %128 = arith.addf %110, %127 : vector<8x32xf32>
    %129 = math.tanh %128 : vector<8x32xf32>
    %cst_61 = arith.constant 1.000000e+00 : f32
    %130 = vector.broadcast %cst_61 : f32 to vector<8x32xf32>
    %131 = arith.subf %130, %126 : vector<8x32xf32>
    %132 = arith.mulf %131, %129 : vector<8x32xf32>
    %133 = arith.mulf %126, %97 : vector<8x32xf32>
    %134 = arith.addf %132, %133 : vector<8x32xf32>
    %135 = vector.broadcast %c2_i32 : i32 to vector<8x1xi32>
    %136 = arith.cmpi eq, %27, %135 : vector<8x1xi32>
    %137 = vector.shape_cast %136 : vector<8x1xi1> to vector<8x1xi1>
    %138 = vector.broadcast %137 : vector<8x1xi1> to vector<8x32xi1>
    %139 = arith.select %138, %134, %102 : vector<8x32xi1>, vector<8x32xf32>
    %c3_i32 = arith.constant 3 : i32
    %c8_i32_62 = arith.constant 8 : i32
    %140 = arith.muli %c3_i32, %c8_i32_62 : i32
    %141 = tpu.assume_multiple %140, 8 : i32
    %142 = arith.index_cast %141 : i32 to index
    %c0_63 = arith.constant 0 : index
    %143 = vector.load %arg13[%142, %c0_63] : memref<64x32xf32, #tpu.memory_space<vmem>>, vector<8x32xf32>
    %144 = arith.index_cast %141 : i32 to index
    %c0_64 = arith.constant 0 : index
    %145 = vector.load %arg14[%144, %c0_64] : memref<64x32xf32, #tpu.memory_space<vmem>>, vector<8x32xf32>
    %146 = arith.index_cast %141 : i32 to index
    %c0_65 = arith.constant 0 : index
    %147 = vector.load %arg15[%146, %c0_65] : memref<64x32xf32, #tpu.memory_space<vmem>>, vector<8x32xf32>
    %cst_66 = arith.constant dense<0.000000e+00> : vector<8x32xf32>
    %148 = tpu.matmul %134, %19, %cst_66 {dimension_numbers = #tpu.dot_dimension_numbers<[1], [0], [0], [1], [0, 0, 1, 1], [], []>} : vector<8x32xf32>, vector<32x32xf32>, vector<8x32xf32> -> vector<8x32xf32>
    %cst_67 = arith.constant dense<0.000000e+00> : vector<8x32xf32>
    %149 = tpu.matmul %134, %20, %cst_67 {dimension_numbers = #tpu.dot_dimension_numbers<[1], [0], [0], [1], [0, 0, 1, 1], [], []>} : vector<8x32xf32>, vector<32x32xf32>, vector<8x32xf32> -> vector<8x32xf32>
    %cst_68 = arith.constant dense<0.000000e+00> : vector<8x32xf32>
    %150 = tpu.matmul %134, %21, %cst_68 {dimension_numbers = #tpu.dot_dimension_numbers<[1], [0], [0], [1], [0, 0, 1, 1], [], []>} : vector<8x32xf32>, vector<32x32xf32>, vector<8x32xf32> -> vector<8x32xf32>
    %151 = arith.addf %150, %24 : vector<8x32xf32>
    %152 = arith.addf %143, %148 : vector<8x32xf32>
    %153 = arith.negf %152 : vector<8x32xf32>
    %154 = math.exp %153 : vector<8x32xf32>
    %cst_69 = arith.constant 1.000000e+00 : f32
    %155 = vector.broadcast %cst_69 : f32 to vector<8x32xf32>
    %156 = arith.addf %155, %154 : vector<8x32xf32>
    %157 = arith.divf %155, %156 : vector<8x32xf32>
    %158 = arith.addf %145, %149 : vector<8x32xf32>
    %159 = arith.negf %158 : vector<8x32xf32>
    %160 = math.exp %159 : vector<8x32xf32>
    %cst_70 = arith.constant 1.000000e+00 : f32
    %161 = vector.broadcast %cst_70 : f32 to vector<8x32xf32>
    %162 = arith.addf %161, %160 : vector<8x32xf32>
    %163 = arith.divf %161, %162 : vector<8x32xf32>
    %164 = arith.mulf %157, %151 : vector<8x32xf32>
    %165 = arith.addf %147, %164 : vector<8x32xf32>
    %166 = math.tanh %165 : vector<8x32xf32>
    %cst_71 = arith.constant 1.000000e+00 : f32
    %167 = vector.broadcast %cst_71 : f32 to vector<8x32xf32>
    %168 = arith.subf %167, %163 : vector<8x32xf32>
    %169 = arith.mulf %168, %166 : vector<8x32xf32>
    %170 = arith.mulf %163, %134 : vector<8x32xf32>
    %171 = arith.addf %169, %170 : vector<8x32xf32>
    %172 = vector.broadcast %c3_i32 : i32 to vector<8x1xi32>
    %173 = arith.cmpi eq, %27, %172 : vector<8x1xi32>
    %174 = vector.shape_cast %173 : vector<8x1xi1> to vector<8x1xi1>
    %175 = vector.broadcast %174 : vector<8x1xi1> to vector<8x32xi1>
    %176 = arith.select %175, %171, %139 : vector<8x32xi1>, vector<8x32xf32>
    %c4_i32 = arith.constant 4 : i32
    %c8_i32_72 = arith.constant 8 : i32
    %177 = arith.muli %c4_i32, %c8_i32_72 : i32
    %178 = tpu.assume_multiple %177, 8 : i32
    %179 = arith.index_cast %178 : i32 to index
    %c0_73 = arith.constant 0 : index
    %180 = vector.load %arg13[%179, %c0_73] : memref<64x32xf32, #tpu.memory_space<vmem>>, vector<8x32xf32>
    %181 = arith.index_cast %178 : i32 to index
    %c0_74 = arith.constant 0 : index
    %182 = vector.load %arg14[%181, %c0_74] : memref<64x32xf32, #tpu.memory_space<vmem>>, vector<8x32xf32>
    %183 = arith.index_cast %178 : i32 to index
    %c0_75 = arith.constant 0 : index
    %184 = vector.load %arg15[%183, %c0_75] : memref<64x32xf32, #tpu.memory_space<vmem>>, vector<8x32xf32>
    %cst_76 = arith.constant dense<0.000000e+00> : vector<8x32xf32>
    %185 = tpu.matmul %171, %19, %cst_76 {dimension_numbers = #tpu.dot_dimension_numbers<[1], [0], [0], [1], [0, 0, 1, 1], [], []>} : vector<8x32xf32>, vector<32x32xf32>, vector<8x32xf32> -> vector<8x32xf32>
    %cst_77 = arith.constant dense<0.000000e+00> : vector<8x32xf32>
    %186 = tpu.matmul %171, %20, %cst_77 {dimension_numbers = #tpu.dot_dimension_numbers<[1], [0], [0], [1], [0, 0, 1, 1], [], []>} : vector<8x32xf32>, vector<32x32xf32>, vector<8x32xf32> -> vector<8x32xf32>
    %cst_78 = arith.constant dense<0.000000e+00> : vector<8x32xf32>
    %187 = tpu.matmul %171, %21, %cst_78 {dimension_numbers = #tpu.dot_dimension_numbers<[1], [0], [0], [1], [0, 0, 1, 1], [], []>} : vector<8x32xf32>, vector<32x32xf32>, vector<8x32xf32> -> vector<8x32xf32>
    %188 = arith.addf %187, %24 : vector<8x32xf32>
    %189 = arith.addf %180, %185 : vector<8x32xf32>
    %190 = arith.negf %189 : vector<8x32xf32>
    %191 = math.exp %190 : vector<8x32xf32>
    %cst_79 = arith.constant 1.000000e+00 : f32
    %192 = vector.broadcast %cst_79 : f32 to vector<8x32xf32>
    %193 = arith.addf %192, %191 : vector<8x32xf32>
    %194 = arith.divf %192, %193 : vector<8x32xf32>
    %195 = arith.addf %182, %186 : vector<8x32xf32>
    %196 = arith.negf %195 : vector<8x32xf32>
    %197 = math.exp %196 : vector<8x32xf32>
    %cst_80 = arith.constant 1.000000e+00 : f32
    %198 = vector.broadcast %cst_80 : f32 to vector<8x32xf32>
    %199 = arith.addf %198, %197 : vector<8x32xf32>
    %200 = arith.divf %198, %199 : vector<8x32xf32>
    %201 = arith.mulf %194, %188 : vector<8x32xf32>
    %202 = arith.addf %184, %201 : vector<8x32xf32>
    %203 = math.tanh %202 : vector<8x32xf32>
    %cst_81 = arith.constant 1.000000e+00 : f32
    %204 = vector.broadcast %cst_81 : f32 to vector<8x32xf32>
    %205 = arith.subf %204, %200 : vector<8x32xf32>
    %206 = arith.mulf %205, %203 : vector<8x32xf32>
    %207 = arith.mulf %200, %171 : vector<8x32xf32>
    %208 = arith.addf %206, %207 : vector<8x32xf32>
    %209 = vector.broadcast %c4_i32 : i32 to vector<8x1xi32>
    %210 = arith.cmpi eq, %27, %209 : vector<8x1xi32>
    %211 = vector.shape_cast %210 : vector<8x1xi1> to vector<8x1xi1>
    %212 = vector.broadcast %211 : vector<8x1xi1> to vector<8x32xi1>
    %213 = arith.select %212, %208, %176 : vector<8x32xi1>, vector<8x32xf32>
    %c5_i32 = arith.constant 5 : i32
    %c8_i32_82 = arith.constant 8 : i32
    %214 = arith.muli %c5_i32, %c8_i32_82 : i32
    %215 = tpu.assume_multiple %214, 8 : i32
    %216 = arith.index_cast %215 : i32 to index
    %c0_83 = arith.constant 0 : index
    %217 = vector.load %arg13[%216, %c0_83] : memref<64x32xf32, #tpu.memory_space<vmem>>, vector<8x32xf32>
    %218 = arith.index_cast %215 : i32 to index
    %c0_84 = arith.constant 0 : index
    %219 = vector.load %arg14[%218, %c0_84] : memref<64x32xf32, #tpu.memory_space<vmem>>, vector<8x32xf32>
    %220 = arith.index_cast %215 : i32 to index
    %c0_85 = arith.constant 0 : index
    %221 = vector.load %arg15[%220, %c0_85] : memref<64x32xf32, #tpu.memory_space<vmem>>, vector<8x32xf32>
    %cst_86 = arith.constant dense<0.000000e+00> : vector<8x32xf32>
    %222 = tpu.matmul %208, %19, %cst_86 {dimension_numbers = #tpu.dot_dimension_numbers<[1], [0], [0], [1], [0, 0, 1, 1], [], []>} : vector<8x32xf32>, vector<32x32xf32>, vector<8x32xf32> -> vector<8x32xf32>
    %cst_87 = arith.constant dense<0.000000e+00> : vector<8x32xf32>
    %223 = tpu.matmul %208, %20, %cst_87 {dimension_numbers = #tpu.dot_dimension_numbers<[1], [0], [0], [1], [0, 0, 1, 1], [], []>} : vector<8x32xf32>, vector<32x32xf32>, vector<8x32xf32> -> vector<8x32xf32>
    %cst_88 = arith.constant dense<0.000000e+00> : vector<8x32xf32>
    %224 = tpu.matmul %208, %21, %cst_88 {dimension_numbers = #tpu.dot_dimension_numbers<[1], [0], [0], [1], [0, 0, 1, 1], [], []>} : vector<8x32xf32>, vector<32x32xf32>, vector<8x32xf32> -> vector<8x32xf32>
    %225 = arith.addf %224, %24 : vector<8x32xf32>
    %226 = arith.addf %217, %222 : vector<8x32xf32>
    %227 = arith.negf %226 : vector<8x32xf32>
    %228 = math.exp %227 : vector<8x32xf32>
    %cst_89 = arith.constant 1.000000e+00 : f32
    %229 = vector.broadcast %cst_89 : f32 to vector<8x32xf32>
    %230 = arith.addf %229, %228 : vector<8x32xf32>
    %231 = arith.divf %229, %230 : vector<8x32xf32>
    %232 = arith.addf %219, %223 : vector<8x32xf32>
    %233 = arith.negf %232 : vector<8x32xf32>
    %234 = math.exp %233 : vector<8x32xf32>
    %cst_90 = arith.constant 1.000000e+00 : f32
    %235 = vector.broadcast %cst_90 : f32 to vector<8x32xf32>
    %236 = arith.addf %235, %234 : vector<8x32xf32>
    %237 = arith.divf %235, %236 : vector<8x32xf32>
    %238 = arith.mulf %231, %225 : vector<8x32xf32>
    %239 = arith.addf %221, %238 : vector<8x32xf32>
    %240 = math.tanh %239 : vector<8x32xf32>
    %cst_91 = arith.constant 1.000000e+00 : f32
    %241 = vector.broadcast %cst_91 : f32 to vector<8x32xf32>
    %242 = arith.subf %241, %237 : vector<8x32xf32>
    %243 = arith.mulf %242, %240 : vector<8x32xf32>
    %244 = arith.mulf %237, %208 : vector<8x32xf32>
    %245 = arith.addf %243, %244 : vector<8x32xf32>
    %246 = vector.broadcast %c5_i32 : i32 to vector<8x1xi32>
    %247 = arith.cmpi eq, %27, %246 : vector<8x1xi32>
    %248 = vector.shape_cast %247 : vector<8x1xi1> to vector<8x1xi1>
    %249 = vector.broadcast %248 : vector<8x1xi1> to vector<8x32xi1>
    %250 = arith.select %249, %245, %213 : vector<8x32xi1>, vector<8x32xf32>
    %c6_i32 = arith.constant 6 : i32
    %c8_i32_92 = arith.constant 8 : i32
    %251 = arith.muli %c6_i32, %c8_i32_92 : i32
    %252 = tpu.assume_multiple %251, 8 : i32
    %253 = arith.index_cast %252 : i32 to index
    %c0_93 = arith.constant 0 : index
    %254 = vector.load %arg13[%253, %c0_93] : memref<64x32xf32, #tpu.memory_space<vmem>>, vector<8x32xf32>
    %255 = arith.index_cast %252 : i32 to index
    %c0_94 = arith.constant 0 : index
    %256 = vector.load %arg14[%255, %c0_94] : memref<64x32xf32, #tpu.memory_space<vmem>>, vector<8x32xf32>
    %257 = arith.index_cast %252 : i32 to index
    %c0_95 = arith.constant 0 : index
    %258 = vector.load %arg15[%257, %c0_95] : memref<64x32xf32, #tpu.memory_space<vmem>>, vector<8x32xf32>
    %cst_96 = arith.constant dense<0.000000e+00> : vector<8x32xf32>
    %259 = tpu.matmul %245, %19, %cst_96 {dimension_numbers = #tpu.dot_dimension_numbers<[1], [0], [0], [1], [0, 0, 1, 1], [], []>} : vector<8x32xf32>, vector<32x32xf32>, vector<8x32xf32> -> vector<8x32xf32>
    %cst_97 = arith.constant dense<0.000000e+00> : vector<8x32xf32>
    %260 = tpu.matmul %245, %20, %cst_97 {dimension_numbers = #tpu.dot_dimension_numbers<[1], [0], [0], [1], [0, 0, 1, 1], [], []>} : vector<8x32xf32>, vector<32x32xf32>, vector<8x32xf32> -> vector<8x32xf32>
    %cst_98 = arith.constant dense<0.000000e+00> : vector<8x32xf32>
    %261 = tpu.matmul %245, %21, %cst_98 {dimension_numbers = #tpu.dot_dimension_numbers<[1], [0], [0], [1], [0, 0, 1, 1], [], []>} : vector<8x32xf32>, vector<32x32xf32>, vector<8x32xf32> -> vector<8x32xf32>
    %262 = arith.addf %261, %24 : vector<8x32xf32>
    %263 = arith.addf %254, %259 : vector<8x32xf32>
    %264 = arith.negf %263 : vector<8x32xf32>
    %265 = math.exp %264 : vector<8x32xf32>
    %cst_99 = arith.constant 1.000000e+00 : f32
    %266 = vector.broadcast %cst_99 : f32 to vector<8x32xf32>
    %267 = arith.addf %266, %265 : vector<8x32xf32>
    %268 = arith.divf %266, %267 : vector<8x32xf32>
    %269 = arith.addf %256, %260 : vector<8x32xf32>
    %270 = arith.negf %269 : vector<8x32xf32>
    %271 = math.exp %270 : vector<8x32xf32>
    %cst_100 = arith.constant 1.000000e+00 : f32
    %272 = vector.broadcast %cst_100 : f32 to vector<8x32xf32>
    %273 = arith.addf %272, %271 : vector<8x32xf32>
    %274 = arith.divf %272, %273 : vector<8x32xf32>
    %275 = arith.mulf %268, %262 : vector<8x32xf32>
    %276 = arith.addf %258, %275 : vector<8x32xf32>
    %277 = math.tanh %276 : vector<8x32xf32>
    %cst_101 = arith.constant 1.000000e+00 : f32
    %278 = vector.broadcast %cst_101 : f32 to vector<8x32xf32>
    %279 = arith.subf %278, %274 : vector<8x32xf32>
    %280 = arith.mulf %279, %277 : vector<8x32xf32>
    %281 = arith.mulf %274, %245 : vector<8x32xf32>
    %282 = arith.addf %280, %281 : vector<8x32xf32>
    %283 = vector.broadcast %c6_i32 : i32 to vector<8x1xi32>
    %284 = arith.cmpi eq, %27, %283 : vector<8x1xi32>
    %285 = vector.shape_cast %284 : vector<8x1xi1> to vector<8x1xi1>
    %286 = vector.broadcast %285 : vector<8x1xi1> to vector<8x32xi1>
    %287 = arith.select %286, %282, %250 : vector<8x32xi1>, vector<8x32xf32>
    %c7_i32 = arith.constant 7 : i32
    %c8_i32_102 = arith.constant 8 : i32
    %288 = arith.muli %c7_i32, %c8_i32_102 : i32
    %289 = tpu.assume_multiple %288, 8 : i32
    %290 = arith.index_cast %289 : i32 to index
    %c0_103 = arith.constant 0 : index
    %291 = vector.load %arg13[%290, %c0_103] : memref<64x32xf32, #tpu.memory_space<vmem>>, vector<8x32xf32>
    %292 = arith.index_cast %289 : i32 to index
    %c0_104 = arith.constant 0 : index
    %293 = vector.load %arg14[%292, %c0_104] : memref<64x32xf32, #tpu.memory_space<vmem>>, vector<8x32xf32>
    %294 = arith.index_cast %289 : i32 to index
    %c0_105 = arith.constant 0 : index
    %295 = vector.load %arg15[%294, %c0_105] : memref<64x32xf32, #tpu.memory_space<vmem>>, vector<8x32xf32>
    %cst_106 = arith.constant dense<0.000000e+00> : vector<8x32xf32>
    %296 = tpu.matmul %282, %19, %cst_106 {dimension_numbers = #tpu.dot_dimension_numbers<[1], [0], [0], [1], [0, 0, 1, 1], [], []>} : vector<8x32xf32>, vector<32x32xf32>, vector<8x32xf32> -> vector<8x32xf32>
    %cst_107 = arith.constant dense<0.000000e+00> : vector<8x32xf32>
    %297 = tpu.matmul %282, %20, %cst_107 {dimension_numbers = #tpu.dot_dimension_numbers<[1], [0], [0], [1], [0, 0, 1, 1], [], []>} : vector<8x32xf32>, vector<32x32xf32>, vector<8x32xf32> -> vector<8x32xf32>
    %cst_108 = arith.constant dense<0.000000e+00> : vector<8x32xf32>
    %298 = tpu.matmul %282, %21, %cst_108 {dimension_numbers = #tpu.dot_dimension_numbers<[1], [0], [0], [1], [0, 0, 1, 1], [], []>} : vector<8x32xf32>, vector<32x32xf32>, vector<8x32xf32> -> vector<8x32xf32>
    %299 = arith.addf %298, %24 : vector<8x32xf32>
    %300 = arith.addf %291, %296 : vector<8x32xf32>
    %301 = arith.negf %300 : vector<8x32xf32>
    %302 = math.exp %301 : vector<8x32xf32>
    %cst_109 = arith.constant 1.000000e+00 : f32
    %303 = vector.broadcast %cst_109 : f32 to vector<8x32xf32>
    %304 = arith.addf %303, %302 : vector<8x32xf32>
    %305 = arith.divf %303, %304 : vector<8x32xf32>
    %306 = arith.addf %293, %297 : vector<8x32xf32>
    %307 = arith.negf %306 : vector<8x32xf32>
    %308 = math.exp %307 : vector<8x32xf32>
    %cst_110 = arith.constant 1.000000e+00 : f32
    %309 = vector.broadcast %cst_110 : f32 to vector<8x32xf32>
    %310 = arith.addf %309, %308 : vector<8x32xf32>
    %311 = arith.divf %309, %310 : vector<8x32xf32>
    %312 = arith.mulf %305, %299 : vector<8x32xf32>
    %313 = arith.addf %295, %312 : vector<8x32xf32>
    %314 = math.tanh %313 : vector<8x32xf32>
    %cst_111 = arith.constant 1.000000e+00 : f32
    %315 = vector.broadcast %cst_111 : f32 to vector<8x32xf32>
    %316 = arith.subf %315, %311 : vector<8x32xf32>
    %317 = arith.mulf %316, %314 : vector<8x32xf32>
    %318 = arith.mulf %311, %282 : vector<8x32xf32>
    %319 = arith.addf %317, %318 : vector<8x32xf32>
    %320 = vector.broadcast %c7_i32 : i32 to vector<8x1xi32>
    %321 = arith.cmpi eq, %27, %320 : vector<8x1xi32>
    %322 = vector.shape_cast %321 : vector<8x1xi1> to vector<8x1xi1>
    %323 = vector.broadcast %322 : vector<8x1xi1> to vector<8x32xi1>
    %324 = arith.select %323, %319, %287 : vector<8x32xi1>, vector<8x32xf32>
    %c8_i32_112 = arith.constant 8 : i32
    %c0_113 = arith.constant 0 : index
    %c0_114 = arith.constant 0 : index
    %325 = vector.load %arg12[%c0_113, %c0_114] : memref<8x32xf32, #tpu.memory_space<vmem>>, vector<8x32xf32>
    tpu.vector_store %arg12[%c0_113, %c0_114], %324 {strides = array<i32>} : memref<8x32xf32, #tpu.memory_space<vmem>>, vector<8x32xf32>,
    return
  }
}

module attributes {stable_mosaic.version = 11 : i64} {
  func.func @decoder_kernel(%arg0: memref<48x32xf32, #tpu.memory_space<vmem>>, %arg1: memref<8x32xf32, #tpu.memory_space<vmem>>, %arg2: memref<32x32xf32, #tpu.memory_space<vmem>>, %arg3: memref<32x32xf32, #tpu.memory_space<vmem>>, %arg4: memref<32x32xf32, #tpu.memory_space<vmem>>, %arg5: memref<32x32xf32, #tpu.memory_space<vmem>>, %arg6: memref<32x32xf32, #tpu.memory_space<vmem>>, %arg7: memref<32x32xf32, #tpu.memory_space<vmem>>, %arg8: memref<1x32xf32, #tpu.memory_space<vmem>>, %arg9: memref<1x32xf32, #tpu.memory_space<vmem>>, %arg10: memref<1x32xf32, #tpu.memory_space<vmem>>, %arg11: memref<1x32xf32, #tpu.memory_space<vmem>>, %arg12: memref<32x16xf32, #tpu.memory_space<vmem>>, %arg13: memref<1x16xf32, #tpu.memory_space<vmem>>, %arg14: memref<48x16xf32, #tpu.memory_space<vmem>>, %arg15: memref<48x32xf32, #tpu.memory_space<vmem>>, %arg16: memref<48x32xf32, #tpu.memory_space<vmem>>, %arg17: memref<48x32xf32, #tpu.memory_space<vmem>>, %arg18: memref<48x32xf32, #tpu.memory_space<vmem>>) attributes {dimension_semantics = [], scalar_prefetch = 0 : i64, scratch_operands = 4 : i64, tpu.core_type = #tpu.core_type<tc>} {
    %c0 = arith.constant 0 : index
    %c0_0 = arith.constant 0 : index
    %0 = vector.load %arg0[%c0, %c0_0] : memref<48x32xf32, #tpu.memory_space<vmem>>, vector<48x32xf32>
    %c0_1 = arith.constant 0 : index
    %c0_2 = arith.constant 0 : index
    %1 = vector.load %arg2[%c0_1, %c0_2] : memref<32x32xf32, #tpu.memory_space<vmem>>, vector<32x32xf32>
    %cst = arith.constant dense<0.000000e+00> : vector<48x32xf32>
    %2 = tpu.matmul %0, %1, %cst {dimension_numbers = #tpu.dot_dimension_numbers<[1], [0], [0], [1], [0, 0, 1, 1], [], []>} : vector<48x32xf32>, vector<32x32xf32>, vector<48x32xf32> -> vector<48x32xf32>
    %c0_3 = arith.constant 0 : index
    %c0_4 = arith.constant 0 : index
    %3 = vector.load %arg8[%c0_3, %c0_4] : memref<1x32xf32, #tpu.memory_space<vmem>>, vector<1x32xf32>
    %4 = vector.broadcast %3 : vector<1x32xf32> to vector<48x32xf32>
    %5 = arith.addf %2, %4 : vector<48x32xf32>
    %c0_5 = arith.constant 0 : index
    %c0_6 = arith.constant 0 : index
    %6 = vector.load %arg15[%c0_5, %c0_6] : memref<48x32xf32, #tpu.memory_space<vmem>>, vector<48x32xf32>
    tpu.vector_store %arg15[%c0_5, %c0_6], %5 {strides = array<i32>} : memref<48x32xf32, #tpu.memory_space<vmem>>, vector<48x32xf32>,
    %c0_7 = arith.constant 0 : index
    %c0_8 = arith.constant 0 : index
    %7 = vector.load %arg3[%c0_7, %c0_8] : memref<32x32xf32, #tpu.memory_space<vmem>>, vector<32x32xf32>
    %cst_9 = arith.constant dense<0.000000e+00> : vector<48x32xf32>
    %8 = tpu.matmul %0, %7, %cst_9 {dimension_numbers = #tpu.dot_dimension_numbers<[1], [0], [0], [1], [0, 0, 1, 1], [], []>} : vector<48x32xf32>, vector<32x32xf32>, vector<48x32xf32> -> vector<48x32xf32>
    %c0_10 = arith.constant 0 : index
    %c0_11 = arith.constant 0 : index
    %9 = vector.load %arg9[%c0_10, %c0_11] : memref<1x32xf32, #tpu.memory_space<vmem>>, vector<1x32xf32>
    %10 = vector.broadcast %9 : vector<1x32xf32> to vector<48x32xf32>
    %11 = arith.addf %8, %10 : vector<48x32xf32>
    %c0_12 = arith.constant 0 : index
    %c0_13 = arith.constant 0 : index
    %12 = vector.load %arg16[%c0_12, %c0_13] : memref<48x32xf32, #tpu.memory_space<vmem>>, vector<48x32xf32>
    tpu.vector_store %arg16[%c0_12, %c0_13], %11 {strides = array<i32>} : memref<48x32xf32, #tpu.memory_space<vmem>>, vector<48x32xf32>,
    %c0_14 = arith.constant 0 : index
    %c0_15 = arith.constant 0 : index
    %13 = vector.load %arg4[%c0_14, %c0_15] : memref<32x32xf32, #tpu.memory_space<vmem>>, vector<32x32xf32>
    %cst_16 = arith.constant dense<0.000000e+00> : vector<48x32xf32>
    %14 = tpu.matmul %0, %13, %cst_16 {dimension_numbers = #tpu.dot_dimension_numbers<[1], [0], [0], [1], [0, 0, 1, 1], [], []>} : vector<48x32xf32>, vector<32x32xf32>, vector<48x32xf32> -> vector<48x32xf32>
    %c0_17 = arith.constant 0 : index
    %c0_18 = arith.constant 0 : index
    %15 = vector.load %arg10[%c0_17, %c0_18] : memref<1x32xf32, #tpu.memory_space<vmem>>, vector<1x32xf32>
    %16 = vector.broadcast %15 : vector<1x32xf32> to vector<48x32xf32>
    %17 = arith.addf %14, %16 : vector<48x32xf32>
    %c0_19 = arith.constant 0 : index
    %c0_20 = arith.constant 0 : index
    %18 = vector.load %arg17[%c0_19, %c0_20] : memref<48x32xf32, #tpu.memory_space<vmem>>, vector<48x32xf32>
    tpu.vector_store %arg17[%c0_19, %c0_20], %17 {strides = array<i32>} : memref<48x32xf32, #tpu.memory_space<vmem>>, vector<48x32xf32>,
    %c0_21 = arith.constant 0 : index
    %c0_22 = arith.constant 0 : index
    %19 = vector.load %arg5[%c0_21, %c0_22] : memref<32x32xf32, #tpu.memory_space<vmem>>, vector<32x32xf32>
    %c0_23 = arith.constant 0 : index
    %c0_24 = arith.constant 0 : index
    %20 = vector.load %arg6[%c0_23, %c0_24] : memref<32x32xf32, #tpu.memory_space<vmem>>, vector<32x32xf32>
    %c0_25 = arith.constant 0 : index
    %c0_26 = arith.constant 0 : index
    %21 = vector.load %arg7[%c0_25, %c0_26] : memref<32x32xf32, #tpu.memory_space<vmem>>, vector<32x32xf32>
    %c0_27 = arith.constant 0 : index
    %c0_28 = arith.constant 0 : index
    %22 = vector.load %arg11[%c0_27, %c0_28] : memref<1x32xf32, #tpu.memory_space<vmem>>, vector<1x32xf32>
    %23 = vector.shape_cast %22 : vector<1x32xf32> to vector<1x32xf32>
    %24 = vector.broadcast %23 : vector<1x32xf32> to vector<8x32xf32>
    %c0_29 = arith.constant 0 : index
    %c0_30 = arith.constant 0 : index
    %25 = vector.load %arg1[%c0_29, %c0_30] : memref<8x32xf32, #tpu.memory_space<vmem>>, vector<8x32xf32>
    %c0_i32 = arith.constant 0 : i32
    %c8_i32 = arith.constant 8 : i32
    %26 = arith.muli %c0_i32, %c8_i32 : i32
    %27 = tpu.assume_multiple %26, 8 : i32
    %28 = arith.index_cast %27 : i32 to index
    %c0_31 = arith.constant 0 : index
    %29 = vector.load %arg15[%28, %c0_31] : memref<48x32xf32, #tpu.memory_space<vmem>>, vector<8x32xf32>
    %30 = arith.index_cast %27 : i32 to index
    %c0_32 = arith.constant 0 : index
    %31 = vector.load %arg16[%30, %c0_32] : memref<48x32xf32, #tpu.memory_space<vmem>>, vector<8x32xf32>
    %32 = arith.index_cast %27 : i32 to index
    %c0_33 = arith.constant 0 : index
    %33 = vector.load %arg17[%32, %c0_33] : memref<48x32xf32, #tpu.memory_space<vmem>>, vector<8x32xf32>
    %cst_34 = arith.constant dense<0.000000e+00> : vector<8x32xf32>
    %34 = tpu.matmul %25, %19, %cst_34 {dimension_numbers = #tpu.dot_dimension_numbers<[1], [0], [0], [1], [0, 0, 1, 1], [], []>} : vector<8x32xf32>, vector<32x32xf32>, vector<8x32xf32> -> vector<8x32xf32>
    %cst_35 = arith.constant dense<0.000000e+00> : vector<8x32xf32>
    %35 = tpu.matmul %25, %20, %cst_35 {dimension_numbers = #tpu.dot_dimension_numbers<[1], [0], [0], [1], [0, 0, 1, 1], [], []>} : vector<8x32xf32>, vector<32x32xf32>, vector<8x32xf32> -> vector<8x32xf32>
    %cst_36 = arith.constant dense<0.000000e+00> : vector<8x32xf32>
    %36 = tpu.matmul %25, %21, %cst_36 {dimension_numbers = #tpu.dot_dimension_numbers<[1], [0], [0], [1], [0, 0, 1, 1], [], []>} : vector<8x32xf32>, vector<32x32xf32>, vector<8x32xf32> -> vector<8x32xf32>
    %37 = arith.addf %36, %24 : vector<8x32xf32>
    %38 = arith.addf %29, %34 : vector<8x32xf32>
    %39 = arith.negf %38 : vector<8x32xf32>
    %40 = math.exp %39 : vector<8x32xf32>
    %cst_37 = arith.constant 1.000000e+00 : f32
    %41 = vector.broadcast %cst_37 : f32 to vector<8x32xf32>
    %42 = arith.addf %41, %40 : vector<8x32xf32>
    %43 = arith.divf %41, %42 : vector<8x32xf32>
    %44 = arith.addf %31, %35 : vector<8x32xf32>
    %45 = arith.negf %44 : vector<8x32xf32>
    %46 = math.exp %45 : vector<8x32xf32>
    %cst_38 = arith.constant 1.000000e+00 : f32
    %47 = vector.broadcast %cst_38 : f32 to vector<8x32xf32>
    %48 = arith.addf %47, %46 : vector<8x32xf32>
    %49 = arith.divf %47, %48 : vector<8x32xf32>
    %50 = arith.mulf %43, %37 : vector<8x32xf32>
    %51 = arith.addf %33, %50 : vector<8x32xf32>
    %52 = math.tanh %51 : vector<8x32xf32>
    %cst_39 = arith.constant 1.000000e+00 : f32
    %53 = vector.broadcast %cst_39 : f32 to vector<8x32xf32>
    %54 = arith.subf %53, %49 : vector<8x32xf32>
    %55 = arith.mulf %54, %52 : vector<8x32xf32>
    %56 = arith.mulf %49, %25 : vector<8x32xf32>
    %57 = arith.addf %55, %56 : vector<8x32xf32>
    %58 = arith.index_cast %27 : i32 to index
    %c0_40 = arith.constant 0 : index
    %59 = vector.load %arg18[%58, %c0_40] : memref<48x32xf32, #tpu.memory_space<vmem>>, vector<8x32xf32>
    tpu.vector_store %arg18[%58, %c0_40], %57 {strides = array<i32>} : memref<48x32xf32, #tpu.memory_space<vmem>>, vector<8x32xf32>,
    %c1_i32 = arith.constant 1 : i32
    %c8_i32_41 = arith.constant 8 : i32
    %60 = arith.muli %c1_i32, %c8_i32_41 : i32
    %61 = tpu.assume_multiple %60, 8 : i32
    %62 = arith.index_cast %61 : i32 to index
    %c0_42 = arith.constant 0 : index
    %63 = vector.load %arg15[%62, %c0_42] : memref<48x32xf32, #tpu.memory_space<vmem>>, vector<8x32xf32>
    %64 = arith.index_cast %61 : i32 to index
    %c0_43 = arith.constant 0 : index
    %65 = vector.load %arg16[%64, %c0_43] : memref<48x32xf32, #tpu.memory_space<vmem>>, vector<8x32xf32>
    %66 = arith.index_cast %61 : i32 to index
    %c0_44 = arith.constant 0 : index
    %67 = vector.load %arg17[%66, %c0_44] : memref<48x32xf32, #tpu.memory_space<vmem>>, vector<8x32xf32>
    %cst_45 = arith.constant dense<0.000000e+00> : vector<8x32xf32>
    %68 = tpu.matmul %57, %19, %cst_45 {dimension_numbers = #tpu.dot_dimension_numbers<[1], [0], [0], [1], [0, 0, 1, 1], [], []>} : vector<8x32xf32>, vector<32x32xf32>, vector<8x32xf32> -> vector<8x32xf32>
    %cst_46 = arith.constant dense<0.000000e+00> : vector<8x32xf32>
    %69 = tpu.matmul %57, %20, %cst_46 {dimension_numbers = #tpu.dot_dimension_numbers<[1], [0], [0], [1], [0, 0, 1, 1], [], []>} : vector<8x32xf32>, vector<32x32xf32>, vector<8x32xf32> -> vector<8x32xf32>
    %cst_47 = arith.constant dense<0.000000e+00> : vector<8x32xf32>
    %70 = tpu.matmul %57, %21, %cst_47 {dimension_numbers = #tpu.dot_dimension_numbers<[1], [0], [0], [1], [0, 0, 1, 1], [], []>} : vector<8x32xf32>, vector<32x32xf32>, vector<8x32xf32> -> vector<8x32xf32>
    %71 = arith.addf %70, %24 : vector<8x32xf32>
    %72 = arith.addf %63, %68 : vector<8x32xf32>
    %73 = arith.negf %72 : vector<8x32xf32>
    %74 = math.exp %73 : vector<8x32xf32>
    %cst_48 = arith.constant 1.000000e+00 : f32
    %75 = vector.broadcast %cst_48 : f32 to vector<8x32xf32>
    %76 = arith.addf %75, %74 : vector<8x32xf32>
    %77 = arith.divf %75, %76 : vector<8x32xf32>
    %78 = arith.addf %65, %69 : vector<8x32xf32>
    %79 = arith.negf %78 : vector<8x32xf32>
    %80 = math.exp %79 : vector<8x32xf32>
    %cst_49 = arith.constant 1.000000e+00 : f32
    %81 = vector.broadcast %cst_49 : f32 to vector<8x32xf32>
    %82 = arith.addf %81, %80 : vector<8x32xf32>
    %83 = arith.divf %81, %82 : vector<8x32xf32>
    %84 = arith.mulf %77, %71 : vector<8x32xf32>
    %85 = arith.addf %67, %84 : vector<8x32xf32>
    %86 = math.tanh %85 : vector<8x32xf32>
    %cst_50 = arith.constant 1.000000e+00 : f32
    %87 = vector.broadcast %cst_50 : f32 to vector<8x32xf32>
    %88 = arith.subf %87, %83 : vector<8x32xf32>
    %89 = arith.mulf %88, %86 : vector<8x32xf32>
    %90 = arith.mulf %83, %57 : vector<8x32xf32>
    %91 = arith.addf %89, %90 : vector<8x32xf32>
    %92 = arith.index_cast %61 : i32 to index
    %c0_51 = arith.constant 0 : index
    %93 = vector.load %arg18[%92, %c0_51] : memref<48x32xf32, #tpu.memory_space<vmem>>, vector<8x32xf32>
    tpu.vector_store %arg18[%92, %c0_51], %91 {strides = array<i32>} : memref<48x32xf32, #tpu.memory_space<vmem>>, vector<8x32xf32>,
    %c2_i32 = arith.constant 2 : i32
    %c8_i32_52 = arith.constant 8 : i32
    %94 = arith.muli %c2_i32, %c8_i32_52 : i32
    %95 = tpu.assume_multiple %94, 8 : i32
    %96 = arith.index_cast %95 : i32 to index
    %c0_53 = arith.constant 0 : index
    %97 = vector.load %arg15[%96, %c0_53] : memref<48x32xf32, #tpu.memory_space<vmem>>, vector<8x32xf32>
    %98 = arith.index_cast %95 : i32 to index
    %c0_54 = arith.constant 0 : index
    %99 = vector.load %arg16[%98, %c0_54] : memref<48x32xf32, #tpu.memory_space<vmem>>, vector<8x32xf32>
    %100 = arith.index_cast %95 : i32 to index
    %c0_55 = arith.constant 0 : index
    %101 = vector.load %arg17[%100, %c0_55] : memref<48x32xf32, #tpu.memory_space<vmem>>, vector<8x32xf32>
    %cst_56 = arith.constant dense<0.000000e+00> : vector<8x32xf32>
    %102 = tpu.matmul %91, %19, %cst_56 {dimension_numbers = #tpu.dot_dimension_numbers<[1], [0], [0], [1], [0, 0, 1, 1], [], []>} : vector<8x32xf32>, vector<32x32xf32>, vector<8x32xf32> -> vector<8x32xf32>
    %cst_57 = arith.constant dense<0.000000e+00> : vector<8x32xf32>
    %103 = tpu.matmul %91, %20, %cst_57 {dimension_numbers = #tpu.dot_dimension_numbers<[1], [0], [0], [1], [0, 0, 1, 1], [], []>} : vector<8x32xf32>, vector<32x32xf32>, vector<8x32xf32> -> vector<8x32xf32>
    %cst_58 = arith.constant dense<0.000000e+00> : vector<8x32xf32>
    %104 = tpu.matmul %91, %21, %cst_58 {dimension_numbers = #tpu.dot_dimension_numbers<[1], [0], [0], [1], [0, 0, 1, 1], [], []>} : vector<8x32xf32>, vector<32x32xf32>, vector<8x32xf32> -> vector<8x32xf32>
    %105 = arith.addf %104, %24 : vector<8x32xf32>
    %106 = arith.addf %97, %102 : vector<8x32xf32>
    %107 = arith.negf %106 : vector<8x32xf32>
    %108 = math.exp %107 : vector<8x32xf32>
    %cst_59 = arith.constant 1.000000e+00 : f32
    %109 = vector.broadcast %cst_59 : f32 to vector<8x32xf32>
    %110 = arith.addf %109, %108 : vector<8x32xf32>
    %111 = arith.divf %109, %110 : vector<8x32xf32>
    %112 = arith.addf %99, %103 : vector<8x32xf32>
    %113 = arith.negf %112 : vector<8x32xf32>
    %114 = math.exp %113 : vector<8x32xf32>
    %cst_60 = arith.constant 1.000000e+00 : f32
    %115 = vector.broadcast %cst_60 : f32 to vector<8x32xf32>
    %116 = arith.addf %115, %114 : vector<8x32xf32>
    %117 = arith.divf %115, %116 : vector<8x32xf32>
    %118 = arith.mulf %111, %105 : vector<8x32xf32>
    %119 = arith.addf %101, %118 : vector<8x32xf32>
    %120 = math.tanh %119 : vector<8x32xf32>
    %cst_61 = arith.constant 1.000000e+00 : f32
    %121 = vector.broadcast %cst_61 : f32 to vector<8x32xf32>
    %122 = arith.subf %121, %117 : vector<8x32xf32>
    %123 = arith.mulf %122, %120 : vector<8x32xf32>
    %124 = arith.mulf %117, %91 : vector<8x32xf32>
    %125 = arith.addf %123, %124 : vector<8x32xf32>
    %126 = arith.index_cast %95 : i32 to index
    %c0_62 = arith.constant 0 : index
    %127 = vector.load %arg18[%126, %c0_62] : memref<48x32xf32, #tpu.memory_space<vmem>>, vector<8x32xf32>
    tpu.vector_store %arg18[%126, %c0_62], %125 {strides = array<i32>} : memref<48x32xf32, #tpu.memory_space<vmem>>, vector<8x32xf32>,
    %c3_i32 = arith.constant 3 : i32
    %c8_i32_63 = arith.constant 8 : i32
    %128 = arith.muli %c3_i32, %c8_i32_63 : i32
    %129 = tpu.assume_multiple %128, 8 : i32
    %130 = arith.index_cast %129 : i32 to index
    %c0_64 = arith.constant 0 : index
    %131 = vector.load %arg15[%130, %c0_64] : memref<48x32xf32, #tpu.memory_space<vmem>>, vector<8x32xf32>
    %132 = arith.index_cast %129 : i32 to index
    %c0_65 = arith.constant 0 : index
    %133 = vector.load %arg16[%132, %c0_65] : memref<48x32xf32, #tpu.memory_space<vmem>>, vector<8x32xf32>
    %134 = arith.index_cast %129 : i32 to index
    %c0_66 = arith.constant 0 : index
    %135 = vector.load %arg17[%134, %c0_66] : memref<48x32xf32, #tpu.memory_space<vmem>>, vector<8x32xf32>
    %cst_67 = arith.constant dense<0.000000e+00> : vector<8x32xf32>
    %136 = tpu.matmul %125, %19, %cst_67 {dimension_numbers = #tpu.dot_dimension_numbers<[1], [0], [0], [1], [0, 0, 1, 1], [], []>} : vector<8x32xf32>, vector<32x32xf32>, vector<8x32xf32> -> vector<8x32xf32>
    %cst_68 = arith.constant dense<0.000000e+00> : vector<8x32xf32>
    %137 = tpu.matmul %125, %20, %cst_68 {dimension_numbers = #tpu.dot_dimension_numbers<[1], [0], [0], [1], [0, 0, 1, 1], [], []>} : vector<8x32xf32>, vector<32x32xf32>, vector<8x32xf32> -> vector<8x32xf32>
    %cst_69 = arith.constant dense<0.000000e+00> : vector<8x32xf32>
    %138 = tpu.matmul %125, %21, %cst_69 {dimension_numbers = #tpu.dot_dimension_numbers<[1], [0], [0], [1], [0, 0, 1, 1], [], []>} : vector<8x32xf32>, vector<32x32xf32>, vector<8x32xf32> -> vector<8x32xf32>
    %139 = arith.addf %138, %24 : vector<8x32xf32>
    %140 = arith.addf %131, %136 : vector<8x32xf32>
    %141 = arith.negf %140 : vector<8x32xf32>
    %142 = math.exp %141 : vector<8x32xf32>
    %cst_70 = arith.constant 1.000000e+00 : f32
    %143 = vector.broadcast %cst_70 : f32 to vector<8x32xf32>
    %144 = arith.addf %143, %142 : vector<8x32xf32>
    %145 = arith.divf %143, %144 : vector<8x32xf32>
    %146 = arith.addf %133, %137 : vector<8x32xf32>
    %147 = arith.negf %146 : vector<8x32xf32>
    %148 = math.exp %147 : vector<8x32xf32>
    %cst_71 = arith.constant 1.000000e+00 : f32
    %149 = vector.broadcast %cst_71 : f32 to vector<8x32xf32>
    %150 = arith.addf %149, %148 : vector<8x32xf32>
    %151 = arith.divf %149, %150 : vector<8x32xf32>
    %152 = arith.mulf %145, %139 : vector<8x32xf32>
    %153 = arith.addf %135, %152 : vector<8x32xf32>
    %154 = math.tanh %153 : vector<8x32xf32>
    %cst_72 = arith.constant 1.000000e+00 : f32
    %155 = vector.broadcast %cst_72 : f32 to vector<8x32xf32>
    %156 = arith.subf %155, %151 : vector<8x32xf32>
    %157 = arith.mulf %156, %154 : vector<8x32xf32>
    %158 = arith.mulf %151, %125 : vector<8x32xf32>
    %159 = arith.addf %157, %158 : vector<8x32xf32>
    %160 = arith.index_cast %129 : i32 to index
    %c0_73 = arith.constant 0 : index
    %161 = vector.load %arg18[%160, %c0_73] : memref<48x32xf32, #tpu.memory_space<vmem>>, vector<8x32xf32>
    tpu.vector_store %arg18[%160, %c0_73], %159 {strides = array<i32>} : memref<48x32xf32, #tpu.memory_space<vmem>>, vector<8x32xf32>,
    %c4_i32 = arith.constant 4 : i32
    %c8_i32_74 = arith.constant 8 : i32
    %162 = arith.muli %c4_i32, %c8_i32_74 : i32
    %163 = tpu.assume_multiple %162, 8 : i32
    %164 = arith.index_cast %163 : i32 to index
    %c0_75 = arith.constant 0 : index
    %165 = vector.load %arg15[%164, %c0_75] : memref<48x32xf32, #tpu.memory_space<vmem>>, vector<8x32xf32>
    %166 = arith.index_cast %163 : i32 to index
    %c0_76 = arith.constant 0 : index
    %167 = vector.load %arg16[%166, %c0_76] : memref<48x32xf32, #tpu.memory_space<vmem>>, vector<8x32xf32>
    %168 = arith.index_cast %163 : i32 to index
    %c0_77 = arith.constant 0 : index
    %169 = vector.load %arg17[%168, %c0_77] : memref<48x32xf32, #tpu.memory_space<vmem>>, vector<8x32xf32>
    %cst_78 = arith.constant dense<0.000000e+00> : vector<8x32xf32>
    %170 = tpu.matmul %159, %19, %cst_78 {dimension_numbers = #tpu.dot_dimension_numbers<[1], [0], [0], [1], [0, 0, 1, 1], [], []>} : vector<8x32xf32>, vector<32x32xf32>, vector<8x32xf32> -> vector<8x32xf32>
    %cst_79 = arith.constant dense<0.000000e+00> : vector<8x32xf32>
    %171 = tpu.matmul %159, %20, %cst_79 {dimension_numbers = #tpu.dot_dimension_numbers<[1], [0], [0], [1], [0, 0, 1, 1], [], []>} : vector<8x32xf32>, vector<32x32xf32>, vector<8x32xf32> -> vector<8x32xf32>
    %cst_80 = arith.constant dense<0.000000e+00> : vector<8x32xf32>
    %172 = tpu.matmul %159, %21, %cst_80 {dimension_numbers = #tpu.dot_dimension_numbers<[1], [0], [0], [1], [0, 0, 1, 1], [], []>} : vector<8x32xf32>, vector<32x32xf32>, vector<8x32xf32> -> vector<8x32xf32>
    %173 = arith.addf %172, %24 : vector<8x32xf32>
    %174 = arith.addf %165, %170 : vector<8x32xf32>
    %175 = arith.negf %174 : vector<8x32xf32>
    %176 = math.exp %175 : vector<8x32xf32>
    %cst_81 = arith.constant 1.000000e+00 : f32
    %177 = vector.broadcast %cst_81 : f32 to vector<8x32xf32>
    %178 = arith.addf %177, %176 : vector<8x32xf32>
    %179 = arith.divf %177, %178 : vector<8x32xf32>
    %180 = arith.addf %167, %171 : vector<8x32xf32>
    %181 = arith.negf %180 : vector<8x32xf32>
    %182 = math.exp %181 : vector<8x32xf32>
    %cst_82 = arith.constant 1.000000e+00 : f32
    %183 = vector.broadcast %cst_82 : f32 to vector<8x32xf32>
    %184 = arith.addf %183, %182 : vector<8x32xf32>
    %185 = arith.divf %183, %184 : vector<8x32xf32>
    %186 = arith.mulf %179, %173 : vector<8x32xf32>
    %187 = arith.addf %169, %186 : vector<8x32xf32>
    %188 = math.tanh %187 : vector<8x32xf32>
    %cst_83 = arith.constant 1.000000e+00 : f32
    %189 = vector.broadcast %cst_83 : f32 to vector<8x32xf32>
    %190 = arith.subf %189, %185 : vector<8x32xf32>
    %191 = arith.mulf %190, %188 : vector<8x32xf32>
    %192 = arith.mulf %185, %159 : vector<8x32xf32>
    %193 = arith.addf %191, %192 : vector<8x32xf32>
    %194 = arith.index_cast %163 : i32 to index
    %c0_84 = arith.constant 0 : index
    %195 = vector.load %arg18[%194, %c0_84] : memref<48x32xf32, #tpu.memory_space<vmem>>, vector<8x32xf32>
    tpu.vector_store %arg18[%194, %c0_84], %193 {strides = array<i32>} : memref<48x32xf32, #tpu.memory_space<vmem>>, vector<8x32xf32>,
    %c5_i32 = arith.constant 5 : i32
    %c8_i32_85 = arith.constant 8 : i32
    %196 = arith.muli %c5_i32, %c8_i32_85 : i32
    %197 = tpu.assume_multiple %196, 8 : i32
    %198 = arith.index_cast %197 : i32 to index
    %c0_86 = arith.constant 0 : index
    %199 = vector.load %arg15[%198, %c0_86] : memref<48x32xf32, #tpu.memory_space<vmem>>, vector<8x32xf32>
    %200 = arith.index_cast %197 : i32 to index
    %c0_87 = arith.constant 0 : index
    %201 = vector.load %arg16[%200, %c0_87] : memref<48x32xf32, #tpu.memory_space<vmem>>, vector<8x32xf32>
    %202 = arith.index_cast %197 : i32 to index
    %c0_88 = arith.constant 0 : index
    %203 = vector.load %arg17[%202, %c0_88] : memref<48x32xf32, #tpu.memory_space<vmem>>, vector<8x32xf32>
    %cst_89 = arith.constant dense<0.000000e+00> : vector<8x32xf32>
    %204 = tpu.matmul %193, %19, %cst_89 {dimension_numbers = #tpu.dot_dimension_numbers<[1], [0], [0], [1], [0, 0, 1, 1], [], []>} : vector<8x32xf32>, vector<32x32xf32>, vector<8x32xf32> -> vector<8x32xf32>
    %cst_90 = arith.constant dense<0.000000e+00> : vector<8x32xf32>
    %205 = tpu.matmul %193, %20, %cst_90 {dimension_numbers = #tpu.dot_dimension_numbers<[1], [0], [0], [1], [0, 0, 1, 1], [], []>} : vector<8x32xf32>, vector<32x32xf32>, vector<8x32xf32> -> vector<8x32xf32>
    %cst_91 = arith.constant dense<0.000000e+00> : vector<8x32xf32>
    %206 = tpu.matmul %193, %21, %cst_91 {dimension_numbers = #tpu.dot_dimension_numbers<[1], [0], [0], [1], [0, 0, 1, 1], [], []>} : vector<8x32xf32>, vector<32x32xf32>, vector<8x32xf32> -> vector<8x32xf32>
    %207 = arith.addf %206, %24 : vector<8x32xf32>
    %208 = arith.addf %199, %204 : vector<8x32xf32>
    %209 = arith.negf %208 : vector<8x32xf32>
    %210 = math.exp %209 : vector<8x32xf32>
    %cst_92 = arith.constant 1.000000e+00 : f32
    %211 = vector.broadcast %cst_92 : f32 to vector<8x32xf32>
    %212 = arith.addf %211, %210 : vector<8x32xf32>
    %213 = arith.divf %211, %212 : vector<8x32xf32>
    %214 = arith.addf %201, %205 : vector<8x32xf32>
    %215 = arith.negf %214 : vector<8x32xf32>
    %216 = math.exp %215 : vector<8x32xf32>
    %cst_93 = arith.constant 1.000000e+00 : f32
    %217 = vector.broadcast %cst_93 : f32 to vector<8x32xf32>
    %218 = arith.addf %217, %216 : vector<8x32xf32>
    %219 = arith.divf %217, %218 : vector<8x32xf32>
    %220 = arith.mulf %213, %207 : vector<8x32xf32>
    %221 = arith.addf %203, %220 : vector<8x32xf32>
    %222 = math.tanh %221 : vector<8x32xf32>
    %cst_94 = arith.constant 1.000000e+00 : f32
    %223 = vector.broadcast %cst_94 : f32 to vector<8x32xf32>
    %224 = arith.subf %223, %219 : vector<8x32xf32>
    %225 = arith.mulf %224, %222 : vector<8x32xf32>
    %226 = arith.mulf %219, %193 : vector<8x32xf32>
    %227 = arith.addf %225, %226 : vector<8x32xf32>
    %228 = arith.index_cast %197 : i32 to index
    %c0_95 = arith.constant 0 : index
    %229 = vector.load %arg18[%228, %c0_95] : memref<48x32xf32, #tpu.memory_space<vmem>>, vector<8x32xf32>
    tpu.vector_store %arg18[%228, %c0_95], %227 {strides = array<i32>} : memref<48x32xf32, #tpu.memory_space<vmem>>, vector<8x32xf32>,
    %c6_i32 = arith.constant 6 : i32
    %c0_96 = arith.constant 0 : index
    %c0_97 = arith.constant 0 : index
    %230 = vector.load %arg18[%c0_96, %c0_97] : memref<48x32xf32, #tpu.memory_space<vmem>>, vector<48x32xf32>
    %c0_98 = arith.constant 0 : index
    %c0_99 = arith.constant 0 : index
    %231 = vector.load %arg12[%c0_98, %c0_99] : memref<32x16xf32, #tpu.memory_space<vmem>>, vector<32x16xf32>
    %cst_100 = arith.constant dense<0.000000e+00> : vector<48x16xf32>
    %232 = tpu.matmul %230, %231, %cst_100 {dimension_numbers = #tpu.dot_dimension_numbers<[1], [0], [0], [1], [0, 0, 1, 1], [], []>} : vector<48x32xf32>, vector<32x16xf32>, vector<48x16xf32> -> vector<48x16xf32>
    %c0_101 = arith.constant 0 : index
    %c0_102 = arith.constant 0 : index
    %233 = vector.load %arg13[%c0_101, %c0_102] : memref<1x16xf32, #tpu.memory_space<vmem>>, vector<1x16xf32>
    %234 = vector.broadcast %233 : vector<1x16xf32> to vector<48x16xf32>
    %235 = arith.addf %232, %234 : vector<48x16xf32>
    %cst_103 = arith.constant dense<0xFF800000> : vector<48xf32>
    %236 = vector.multi_reduction <maximumf>, %235, %cst_103 [1] : vector<48x16xf32> to vector<48xf32>
    %237 = vector.shape_cast %236 : vector<48xf32> to vector<48x1xf32>
    %238 = vector.broadcast %237 : vector<48x1xf32> to vector<48x16xf32>
    %239 = arith.subf %235, %238 : vector<48x16xf32>
    %240 = math.exp %239 : vector<48x16xf32>
    %cst_104 = arith.constant dense<0.000000e+00> : vector<48xf32>
    %241 = vector.multi_reduction <add>, %240, %cst_104 [1] : vector<48x16xf32> to vector<48xf32>
    %242 = vector.shape_cast %241 : vector<48xf32> to vector<48x1xf32>
    %243 = math.log %242 : vector<48x1xf32>
    %244 = arith.addf %243, %237 : vector<48x1xf32>
    %245 = vector.broadcast %244 : vector<48x1xf32> to vector<48x16xf32>
    %246 = arith.subf %235, %245 : vector<48x16xf32>
    %c0_105 = arith.constant 0 : index
    %c0_106 = arith.constant 0 : index
    %247 = vector.load %arg14[%c0_105, %c0_106] : memref<48x16xf32, #tpu.memory_space<vmem>>, vector<48x16xf32>
    tpu.vector_store %arg14[%c0_105, %c0_106], %246 {strides = array<i32>} : memref<48x16xf32, #tpu.memory_space<vmem>>, vector<48x16xf32>,
    return
  }
}

</mosaic_0001>

<llo_original>
// kernel: e2e_forward.3
$region0: #{e2e_forward.3}
  #allocation0 [shape = 'u32[]', space=smem, size = 0x4, offset = 0x4, fixed_abs, tag = 'smem constant byte address 0x4 - core index']
  #allocation1 [shape = 'u32[144,128]{1,0:T(1,128)}', space=vmem, size = 0x12000, scoped, tag = 'internal scratch']
  #allocation2 [shape = 'f32[48,32]{1,0:T(8,128)}', space=vmem, size = 0x6000, scoped, tag = 'scratch operand']
  #allocation3 [shape = 'f32[48,32]{1,0:T(8,128)}', space=vmem, size = 0x6000, scoped, tag = 'scratch operand']
  #allocation4 [shape = 'f32[48,32]{1,0:T(8,128)}', space=vmem, size = 0x6000, scoped, tag = 'scratch operand']
  #allocation5 [shape = 'f32[48,32]{1,0:T(8,128)}', space=vmem, size = 0x6000, scoped, tag = 'scratch operand']
  %s0 = inlined_call_operand.vmem [shape: f32[48,32], index: 0, kind: input, shape index: {}]
  %s1 = inlined_call_operand.vmem [shape: f32[8,32], index: 1, kind: input, shape index: {}]
  %s2 = inlined_call_operand.vmem [shape: f32[32,32], index: 2, kind: input, shape index: {}]
  %s3 = inlined_call_operand.vmem [shape: f32[32,32], index: 3, kind: input, shape index: {}]
  %s4 = inlined_call_operand.vmem [shape: f32[32,32], index: 4, kind: input, shape index: {}]
  %s5 = inlined_call_operand.vmem [shape: f32[32,32], index: 5, kind: input, shape index: {}]
  %s6 = inlined_call_operand.vmem [shape: f32[32,32], index: 6, kind: input, shape index: {}]
  %s7 = inlined_call_operand.vmem [shape: f32[32,32], index: 7, kind: input, shape index: {}]
  %s8 = inlined_call_operand.vmem [shape: f32[1,32], index: 8, kind: input, shape index: {}]
  %s9 = inlined_call_operand.vmem [shape: f32[1,32], index: 9, kind: input, shape index: {}]
  %s10 = inlined_call_operand.vmem [shape: f32[1,32], index: 10, kind: input, shape index: {}]
  %s11 = inlined_call_operand.vmem [shape: f32[1,32], index: 11, kind: input, shape index: {}]
  %s12 = inlined_call_operand.vmem [shape: f32[32,16], index: 12, kind: input, shape index: {}]
  %s13 = inlined_call_operand.vmem [shape: f32[1,16], index: 13, kind: input, shape index: {}]
  %s14 = inlined_call_operand.vmem [shape: f32[48,16], index: 14, kind: output, shape index: {}]
  %s15 = sld [smem:[#allocation0]]
  $region66: #{e2e_forward.3} parent=0
    _
  %s17 = ssub.s32 1, %s15
  %s18 = scalar_select 0, %s17, %s15
  // Predicated region
  $region2: #{e2e_forward.3} parent=0 // pred_check
    _
  $region3: #{e2e_forward.3} parent=0 // pred_check_branch
    %20 = sbr.rel (0) target = $region5
  $region4: #{e2e_forward.3} parent=0 // pred_region
    _
  $region5: #{e2e_forward.3} parent=0 // pred_fallthru
    _
  // Predicated region
  $region6: #{e2e_forward.3} parent=0 // pred_check
    _
  $region7: #{e2e_forward.3} parent=0 // pred_check_branch
    %22 = sbr.rel (0) target = $region9
  $region8: #{e2e_forward.3} parent=0 // pred_region
    _
  $region9: #{e2e_forward.3} parent=0 // pred_fallthru
    _
  // Predicated region
  $region10: #{e2e_forward.3} parent=0 // pred_check
    _
  $region11: #{e2e_forward.3} parent=0 // pred_check_branch
    %24 = sbr.rel (0) target = $region13
  $region12: #{e2e_forward.3} parent=0 // pred_region
    _
  $region13: #{e2e_forward.3} parent=0 // pred_fallthru
    _
  // Predicated region
  $region14: #{e2e_forward.3} parent=0 // pred_check
    _
  $region15: #{e2e_forward.3} parent=0 // pred_check_branch
    %26 = sbr.rel (0) target = $region17
  $region16: #{e2e_forward.3} parent=0 // pred_region
    _
  $region17: #{e2e_forward.3} parent=0 // pred_fallthru
    _
  // Predicated region
  $region18: #{e2e_forward.3} parent=0 // pred_check
    _
  $region19: #{e2e_forward.3} parent=0 // pred_check_branch
    %28 = sbr.rel (0) target = $region21
  $region20: #{e2e_forward.3} parent=0 // pred_region
    _
  $region21: #{e2e_forward.3} parent=0 // pred_fallthru
    _
  // Predicated region
  $region22: #{e2e_forward.3} parent=0 // pred_check
    _
  $region23: #{e2e_forward.3} parent=0 // pred_check_branch
    %30 = sbr.rel (0) target = $region25
  $region24: #{e2e_forward.3} parent=0 // pred_region
    _
  $region25: #{e2e_forward.3} parent=0 // pred_fallthru
    _
  // Predicated region
  $region26: #{e2e_forward.3} parent=0 // pred_check
    _
  $region27: #{e2e_forward.3} parent=0 // pred_check_branch
    %32 = sbr.rel (0) target = $region29
  $region28: #{e2e_forward.3} parent=0 // pred_region
    _
  $region29: #{e2e_forward.3} parent=0 // pred_fallthru
    _
  // Predicated region
  $region30: #{e2e_forward.3} parent=0 // pred_check
    _
  $region31: #{e2e_forward.3} parent=0 // pred_check_branch
    %34 = sbr.rel (0) target = $region33
  $region32: #{e2e_forward.3} parent=0 // pred_region
    _
  $region33: #{e2e_forward.3} parent=0 // pred_fallthru
    _
  // Predicated region
  $region34: #{e2e_forward.3} parent=0 // pred_check
    _
  $region35: #{e2e_forward.3} parent=0 // pred_check_branch
    %36 = sbr.rel (0) target = $region37
  $region36: #{e2e_forward.3} parent=0 // pred_region
    _
  $region37: #{e2e_forward.3} parent=0 // pred_fallthru
    _
  // Predicated region
  $region38: #{e2e_forward.3} parent=0 // pred_check
    _
  $region39: #{e2e_forward.3} parent=0 // pred_check_branch
    %38 = sbr.rel (0) target = $region41
  $region40: #{e2e_forward.3} parent=0 // pred_region
    _
  $region41: #{e2e_forward.3} parent=0 // pred_fallthru
    _
  // Predicated region
  $region42: #{e2e_forward.3} parent=0 // pred_check
    _
  $region43: #{e2e_forward.3} parent=0 // pred_check_branch
    %40 = sbr.rel (0) target = $region45
  $region44: #{e2e_forward.3} parent=0 // pred_region
    _
  $region45: #{e2e_forward.3} parent=0 // pred_fallthru
    _
  // Predicated region
  $region46: #{e2e_forward.3} parent=0 // pred_check
    _
  $region47: #{e2e_forward.3} parent=0 // pred_check_branch
    %42 = sbr.rel (0) target = $region49
  $region48: #{e2e_forward.3} parent=0 // pred_region
    _
  $region49: #{e2e_forward.3} parent=0 // pred_fallthru
    _
  // Predicated region
  $region50: #{e2e_forward.3} parent=0 // pred_check
    _
  $region51: #{e2e_forward.3} parent=0 // pred_check_branch
    %44 = sbr.rel (0) target = $region53
  $region52: #{e2e_forward.3} parent=0 // pred_region
    _
  $region53: #{e2e_forward.3} parent=0 // pred_fallthru
    _
  // Predicated region
  $region54: #{e2e_forward.3} parent=0 // pred_check
    _
  $region55: #{e2e_forward.3} parent=0 // pred_check_branch
    %46 = sbr.rel (0) target = $region57
  $region56: #{e2e_forward.3} parent=0 // pred_region
    _
  $region57: #{e2e_forward.3} parent=0 // pred_fallthru
    _
  %v47 = vld [vmem:[%s0] sm:$0xff]
  %v48 = vld [vmem:[%s0 + $0x8] sm:$0xff]
  %v49 = vld [vmem:[%s0 + $0x10] sm:$0xff]
  %v50 = vld [vmem:[%s0 + $0x18] sm:$0xff]
  %v51 = vld [vmem:[%s0 + $0x20] sm:$0xff]
  %v52 = vld [vmem:[%s0 + $0x28] sm:$0xff]
  %v53 = vld [vmem:[%s2] sm:$0xff]
  %v54 = vld [vmem:[%s2 + $0x8] sm:$0xff]
  %v55 = vld [vmem:[%s2 + $0x10] sm:$0xff]
  %v56 = vld [vmem:[%s2 + $0x18] sm:$0xff]
  %v57 = vld [vmem:[%s8] sm:$0x1]
  %v59 = vlaneseq
  %v60 = vshrl.u32 %v59, 7
  %v61 = vsub.s32 0, %v60
  %v62 = vrot.slane %v57, %v61
  %vm64 = vcmask 261120
  %v66 = vsel %vm64, %v47, 0
  %v69 = vsel %vm64, %v48, 0
  %v72 = vsel %vm64, %v49, 0
  %v75 = vsel %vm64, %v50, 0
  %v78 = vsel %vm64, %v51, 0
  %v81 = vsel %vm64, %v52, 0
  %83 = vmatprep.subr.mxu0 0.0
  %84 = vmatpush1.msra.mxu0 %v53
  %85 = vmatprep.subr.mxu0 0.0
  %86 = vmatpush1.msra.mxu0 %v54
  %87 = vmatprep.subr.mxu0 0.0
  %88 = vmatpush1.msra.mxu0 %v55
  %89 = vmatprep.subr.mxu0 0.0
  %90 = vmatpush1.msra.mxu0 %v56
  %91 = vmatprep.subr.mxu0 0.0
  %92 = vmatpush1.msra.mxu0 0.0
  %93 = vmatprep.subr.mxu0 0.0
  %94 = vmatpush1.msra.mxu0 0.0
  %95 = vmatprep.subr.mxu0 0.0
  %96 = vmatpush1.msra.mxu0 0.0
  %97 = vmatprep.subr.mxu0 0.0
  %98 = vmatpush1.msra.mxu0 0.0
  %99 = vmatprep.subr.mxu0 0.0
  %100 = vmatpush1.msra.mxu0 0.0
  %101 = vmatprep.subr.mxu0 0.0
  %102 = vmatpush1.msra.mxu0 0.0
  %103 = vmatprep.subr.mxu0 0.0
  %104 = vmatpush1.msra.mxu0 0.0
  %105 = vmatprep.subr.mxu0 0.0
  %106 = vmatpush1.msra.mxu0 0.0
  %107 = vmatprep.subr.mxu0 0.0
  %108 = vmatpush1.msra.mxu0 0.0
  %109 = vmatprep.subr.mxu0 0.0
  %110 = vmatpush1.msra.mxu0 0.0
  %111 = vmatprep.subr.mxu0 0.0
  %112 = vmatpush1.msra.mxu0 0.0
  %113 = vmatprep.subr.mxu0 0.0
  %114 = vmatpush1.msra.mxu0 0.0
  %115 = vmatprep.subr.mxu0 0.0
  %116 = vmatpush1.msra.mxu0 0.0
  %117 = vmatprep.subr.mxu0 0.0
  %118 = vmatpush1.msra.mxu0 0.0
  %119 = vmatprep.subr.mxu0 0.0
  %120 = vmatpush1.msra.mxu0 0.0
  %121 = vmatprep.subr.mxu0 0.0
  %122 = vmatpush1.msra.mxu0 0.0
  %123 = vmatprep.subr.mxu0 0.0
  %124 = vmatpush1.msra.mxu0 0.0
  %125 = vmatprep.subr.mxu0 0.0
  %126 = vmatpush1.msra.mxu0 0.0
  %127 = vmatprep.subr.mxu0 0.0
  %128 = vmatpush1.msra.mxu0 0.0
  %129 = vmatprep.subr.mxu0 0.0
  %130 = vmatpush1.msra.mxu0 0.0
  %131 = vmatprep.subr.mxu0 0.0
  %132 = vmatpush1.msra.mxu0 0.0
  %133 = vmatprep.subr.mxu0 0.0
  %134 = vmatpush1.msra.mxu0 0.0
  %135 = vmatprep.subr.mxu0 0.0
  %136 = vmatpush1.msra.mxu0 0.0
  %137 = vmatprep.subr.mxu0 0.0
  %138 = vmatpush1.msra.mxu0 0.0
  %139 = vmatprep.subr.mxu0 0.0
  %140 = vmatpush1.msra.mxu0 0.0
  %141 = vmatprep.subr.mxu0 0.0
  %142 = vmatpush1.msra.mxu0 0.0
  %143 = vmatprep.subr.mxu0 0.0
  %144 = vmatpush1.msra.mxu0 0.0
  %145 = vmatprep.subr.mxu0 0.0
  %146 = vmatpush1.msra.mxu0 0.0
  %147 = vmatprep.mubr.f32.mxu0 0.0
  %148 = vmatmul.mubr.f32.gmra.mrb[0].mxu0 %v66
  %v149 = vpop.f32.mrb[0].mxu0
  %v150 = vadd.f32 %v62, %v149
  %v151 = vpop.f32.mrb[0].mxu0
  %152 = vmatprep.mubr.f32.mxu0 0.0
  %153 = vmatmul.mubr.f32.gmra.mrb[0].mxu0 %v69
  %v154 = vpop.f32.mrb[0].mxu0
  %v155 = vadd.f32 %v62, %v154
  %v156 = vpop.f32.mrb[0].mxu0
  %157 = vmatprep.mubr.f32.mxu0 0.0
  %158 = vmatmul.mubr.f32.gmra.mrb[0].mxu0 %v72
  %v159 = vpop.f32.mrb[0].mxu0
  %v160 = vadd.f32 %v62, %v159
  %v161 = vpop.f32.mrb[0].mxu0
  %162 = vmatprep.mubr.f32.mxu0 0.0
  %163 = vmatmul.mubr.f32.gmra.mrb[0].mxu0 %v75
  %v164 = vpop.f32.mrb[0].mxu0
  %v165 = vadd.f32 %v62, %v164
  %v166 = vpop.f32.mrb[0].mxu0
  %167 = vmatprep.mubr.f32.mxu0 0.0
  %168 = vmatmul.mubr.f32.gmra.mrb[0].mxu0 %v78
  %v169 = vpop.f32.mrb[0].mxu0
  %v170 = vadd.f32 %v62, %v169
  %v171 = vpop.f32.mrb[0].mxu0
  %172 = vmatprep.mubr.f32.mxu0 0.0
  %173 = vmatmul.mubr.f32.gmra.mrb[0].mxu0 %v81
  %v174 = vpop.f32.mrb[0].mxu0
  %v175 = vadd.f32 %v62, %v174
  %v176 = vpop.f32.mrb[0].mxu0
  %177 = vdwg.mxu0
  %178 = vst.msk [vmem:[#allocation2] sm:$0xff] %vm64, %v150
  %179 = vst.msk [vmem:[#allocation2 + $0x8] sm:$0xff] %vm64, %v155
  %180 = vst.msk [vmem:[#allocation2 + $0x10] sm:$0xff] %vm64, %v160
  %181 = vst.msk [vmem:[#allocation2 + $0x18] sm:$0xff] %vm64, %v165
  %182 = vst.msk [vmem:[#allocation2 + $0x20] sm:$0xff] %vm64, %v170
  %183 = vst.msk [vmem:[#allocation2 + $0x28] sm:$0xff] %vm64, %v175
  %v184 = vld [vmem:[%s3] sm:$0xff]
  %v185 = vld [vmem:[%s3 + $0x8] sm:$0xff]
  %v186 = vld [vmem:[%s3 + $0x10] sm:$0xff]
  %v187 = vld [vmem:[%s3 + $0x18] sm:$0xff]
  %v188 = vld [vmem:[%s9] sm:$0x1]
  %v190 = vlaneseq
  %v191 = vshrl.u32 %v190, 7
  %v192 = vsub.s32 0, %v191
  %v193 = vrot.slane %v188, %v192
  %195 = vmatprep.subr.mxu0 0.0
  %196 = vmatpush1.msra.mxu0 %v184
  %197 = vmatprep.subr.mxu0 0.0
  %198 = vmatpush1.msra.mxu0 %v185
  %199 = vmatprep.subr.mxu0 0.0
  %200 = vmatpush1.msra.mxu0 %v186
  %201 = vmatprep.subr.mxu0 0.0
  %202 = vmatpush1.msra.mxu0 %v187
  %203 = vmatprep.subr.mxu0 0.0
  %204 = vmatpush1.msra.mxu0 0.0
  %205 = vmatprep.subr.mxu0 0.0
  %206 = vmatpush1.msra.mxu0 0.0
  %207 = vmatprep.subr.mxu0 0.0
  %208 = vmatpush1.msra.mxu0 0.0
  %209 = vmatprep.subr.mxu0 0.0
  %210 = vmatpush1.msra.mxu0 0.0
  %211 = vmatprep.subr.mxu0 0.0
  %212 = vmatpush1.msra.mxu0 0.0
  %213 = vmatprep.subr.mxu0 0.0
  %214 = vmatpush1.msra.mxu0 0.0
  %215 = vmatprep.subr.mxu0 0.0
  %216 = vmatpush1.msra.mxu0 0.0
  %217 = vmatprep.subr.mxu0 0.0
  %218 = vmatpush1.msra.mxu0 0.0
  %219 = vmatprep.subr.mxu0 0.0
  %220 = vmatpush1.msra.mxu0 0.0
  %221 = vmatprep.subr.mxu0 0.0
  %222 = vmatpush1.msra.mxu0 0.0
  %223 = vmatprep.subr.mxu0 0.0
  %224 = vmatpush1.msra.mxu0 0.0
  %225 = vmatprep.subr.mxu0 0.0
  %226 = vmatpush1.msra.mxu0 0.0
  %227 = vmatprep.subr.mxu0 0.0
  %228 = vmatpush1.msra.mxu0 0.0
  %229 = vmatprep.subr.mxu0 0.0
  %230 = vmatpush1.msra.mxu0 0.0
  %231 = vmatprep.subr.mxu0 0.0
  %232 = vmatpush1.msra.mxu0 0.0
  %233 = vmatprep.subr.mxu0 0.0
  %234 = vmatpush1.msra.mxu0 0.0
  %235 = vmatprep.subr.mxu0 0.0
  %236 = vmatpush1.msra.mxu0 0.0
  %237 = vmatprep.subr.mxu0 0.0
  %238 = vmatpush1.msra.mxu0 0.0
  %239 = vmatprep.subr.mxu0 0.0
  %240 = vmatpush1.msra.mxu0 0.0
  %241 = vmatprep.subr.mxu0 0.0
  %242 = vmatpush1.msra.mxu0 0.0
  %243 = vmatprep.subr.mxu0 0.0
  %244 = vmatpush1.msra.mxu0 0.0
  %245 = vmatprep.subr.mxu0 0.0
  %246 = vmatpush1.msra.mxu0 0.0
  %247 = vmatprep.subr.mxu0 0.0
  %248 = vmatpush1.msra.mxu0 0.0
  %249 = vmatprep.subr.mxu0 0.0
  %250 = vmatpush1.msra.mxu0 0.0
  %251 = vmatprep.subr.mxu0 0.0
  %252 = vmatpush1.msra.mxu0 0.0
  %253 = vmatprep.subr.mxu0 0.0
  %254 = vmatpush1.msra.mxu0 0.0
  %255 = vmatprep.subr.mxu0 0.0
  %256 = vmatpush1.msra.mxu0 0.0
  %257 = vmatprep.subr.mxu0 0.0
  %258 = vmatpush1.msra.mxu0 0.0
  %259 = vmatprep.mubr.f32.mxu0 0.0
  %260 = vmatmul.mubr.f32.gmra.mrb[0].mxu0 %v66
  %v261 = vpop.f32.mrb[0].mxu0
  %v262 = vadd.f32 %v193, %v261
  %v263 = vpop.f32.mrb[0].mxu0
  %264 = vmatprep.mubr.f32.mxu0 0.0
  %265 = vmatmul.mubr.f32.gmra.mrb[0].mxu0 %v69
  %v266 = vpop.f32.mrb[0].mxu0
  %v267 = vadd.f32 %v193, %v266
  %v268 = vpop.f32.mrb[0].mxu0
  %269 = vmatprep.mubr.f32.mxu0 0.0
  %270 = vmatmul.mubr.f32.gmra.mrb[0].mxu0 %v72
  %v271 = vpop.f32.mrb[0].mxu0
  %v272 = vadd.f32 %v193, %v271
  %v273 = vpop.f32.mrb[0].mxu0
  %274 = vmatprep.mubr.f32.mxu0 0.0
  %275 = vmatmul.mubr.f32.gmra.mrb[0].mxu0 %v75
  %v276 = vpop.f32.mrb[0].mxu0
  %v277 = vadd.f32 %v193, %v276
  %v278 = vpop.f32.mrb[0].mxu0
  %279 = vmatprep.mubr.f32.mxu0 0.0
  %280 = vmatmul.mubr.f32.gmra.mrb[0].mxu0 %v78
  %v281 = vpop.f32.mrb[0].mxu0
  %v282 = vadd.f32 %v193, %v281
  %v283 = vpop.f32.mrb[0].mxu0
  %284 = vmatprep.mubr.f32.mxu0 0.0
  %285 = vmatmul.mubr.f32.gmra.mrb[0].mxu0 %v81
  %v286 = vpop.f32.mrb[0].mxu0
  %v287 = vadd.f32 %v193, %v286
  %v288 = vpop.f32.mrb[0].mxu0
  %289 = vdwg.mxu0
  %290 = vst.msk [vmem:[#allocation3] sm:$0xff] %vm64, %v262
  %291 = vst.msk [vmem:[#allocation3 + $0x8] sm:$0xff] %vm64, %v267
  %292 = vst.msk [vmem:[#allocation3 + $0x10] sm:$0xff] %vm64, %v272
  %293 = vst.msk [vmem:[#allocation3 + $0x18] sm:$0xff] %vm64, %v277
  %294 = vst.msk [vmem:[#allocation3 + $0x20] sm:$0xff] %vm64, %v282
  %295 = vst.msk [vmem:[#allocation3 + $0x28] sm:$0xff] %vm64, %v287
  %v296 = vld [vmem:[%s4] sm:$0xff]
  %v297 = vld [vmem:[%s4 + $0x8] sm:$0xff]
  %v298 = vld [vmem:[%s4 + $0x10] sm:$0xff]
  %v299 = vld [vmem:[%s4 + $0x18] sm:$0xff]
  %v300 = vld [vmem:[%s10] sm:$0x1]
  %v302 = vlaneseq
  %v303 = vshrl.u32 %v302, 7
  %v304 = vsub.s32 0, %v303
  %v305 = vrot.slane %v300, %v304
  %307 = vmatprep.subr.mxu0 0.0
  %308 = vmatpush1.msra.mxu0 %v296
  %309 = vmatprep.subr.mxu0 0.0
  %310 = vmatpush1.msra.mxu0 %v297
  %311 = vmatprep.subr.mxu0 0.0
  %312 = vmatpush1.msra.mxu0 %v298
  %313 = vmatprep.subr.mxu0 0.0
  %314 = vmatpush1.msra.mxu0 %v299
  %315 = vmatprep.subr.mxu0 0.0
  %316 = vmatpush1.msra.mxu0 0.0
  %317 = vmatprep.subr.mxu0 0.0
  %318 = vmatpush1.msra.mxu0 0.0
  %319 = vmatprep.subr.mxu0 0.0
  %320 = vmatpush1.msra.mxu0 0.0
  %321 = vmatprep.subr.mxu0 0.0
  %322 = vmatpush1.msra.mxu0 0.0
  %323 = vmatprep.subr.mxu0 0.0
  %324 = vmatpush1.msra.mxu0 0.0
  %325 = vmatprep.subr.mxu0 0.0
  %326 = vmatpush1.msra.mxu0 0.0
  %327 = vmatprep.subr.mxu0 0.0
  %328 = vmatpush1.msra.mxu0 0.0
  %329 = vmatprep.subr.mxu0 0.0
  %330 = vmatpush1.msra.mxu0 0.0
  %331 = vmatprep.subr.mxu0 0.0
  %332 = vmatpush1.msra.mxu0 0.0
  %333 = vmatprep.subr.mxu0 0.0
  %334 = vmatpush1.msra.mxu0 0.0
  %335 = vmatprep.subr.mxu0 0.0
  %336 = vmatpush1.msra.mxu0 0.0
  %337 = vmatprep.subr.mxu0 0.0
  %338 = vmatpush1.msra.mxu0 0.0
  %339 = vmatprep.subr.mxu0 0.0
  %340 = vmatpush1.msra.mxu0 0.0
  %341 = vmatprep.subr.mxu0 0.0
  %342 = vmatpush1.msra.mxu0 0.0
  %343 = vmatprep.subr.mxu0 0.0
  %344 = vmatpush1.msra.mxu0 0.0
  %345 = vmatprep.subr.mxu0 0.0
  %346 = vmatpush1.msra.mxu0 0.0
  %347 = vmatprep.subr.mxu0 0.0
  %348 = vmatpush1.msra.mxu0 0.0
  %349 = vmatprep.subr.mxu0 0.0
  %350 = vmatpush1.msra.mxu0 0.0
  %351 = vmatprep.subr.mxu0 0.0
  %352 = vmatpush1.msra.mxu0 0.0
  %353 = vmatprep.subr.mxu0 0.0
  %354 = vmatpush1.msra.mxu0 0.0
  %355 = vmatprep.subr.mxu0 0.0
  %356 = vmatpush1.msra.mxu0 0.0
  %357 = vmatprep.subr.mxu0 0.0
  %358 = vmatpush1.msra.mxu0 0.0
  %359 = vmatprep.subr.mxu0 0.0
  %360 = vmatpush1.msra.mxu0 0.0
  %361 = vmatprep.subr.mxu0 0.0
  %362 = vmatpush1.msra.mxu0 0.0
  %363 = vmatprep.subr.mxu0 0.0
  %364 = vmatpush1.msra.mxu0 0.0
  %365 = vmatprep.subr.mxu0 0.0
  %366 = vmatpush1.msra.mxu0 0.0
  %367 = vmatprep.subr.mxu0 0.0
  %368 = vmatpush1.msra.mxu0 0.0
  %369 = vmatprep.subr.mxu0 0.0
  %370 = vmatpush1.msra.mxu0 0.0
  %371 = vmatprep.mubr.f32.mxu0 0.0
  %372 = vmatmul.mubr.f32.gmra.mrb[0].mxu0 %v66
  %v373 = vpop.f32.mrb[0].mxu0
  %v374 = vadd.f32 %v305, %v373
  %v375 = vpop.f32.mrb[0].mxu0
  %376 = vmatprep.mubr.f32.mxu0 0.0
  %377 = vmatmul.mubr.f32.gmra.mrb[0].mxu0 %v69
  %v378 = vpop.f32.mrb[0].mxu0
  %v379 = vadd.f32 %v305, %v378
  %v380 = vpop.f32.mrb[0].mxu0
  %381 = vmatprep.mubr.f32.mxu0 0.0
  %382 = vmatmul.mubr.f32.gmra.mrb[0].mxu0 %v72
  %v383 = vpop.f32.mrb[0].mxu0
  %v384 = vadd.f32 %v305, %v383
  %v385 = vpop.f32.mrb[0].mxu0
  %386 = vmatprep.mubr.f32.mxu0 0.0
  %387 = vmatmul.mubr.f32.gmra.mrb[0].mxu0 %v75
  %v388 = vpop.f32.mrb[0].mxu0
  %v389 = vadd.f32 %v305, %v388
  %v390 = vpop.f32.mrb[0].mxu0
  %391 = vmatprep.mubr.f32.mxu0 0.0
  %392 = vmatmul.mubr.f32.gmra.mrb[0].mxu0 %v78
  %v393 = vpop.f32.mrb[0].mxu0
  %v394 = vadd.f32 %v305, %v393
  %v395 = vpop.f32.mrb[0].mxu0
  %396 = vmatprep.mubr.f32.mxu0 0.0
  %397 = vmatmul.mubr.f32.gmra.mrb[0].mxu0 %v81
  %v398 = vpop.f32.mrb[0].mxu0
  %v399 = vadd.f32 %v305, %v398
  %v400 = vpop.f32.mrb[0].mxu0
  %401 = vdwg.mxu0
  %402 = vst.msk [vmem:[#allocation4] sm:$0xff] %vm64, %v374
  %403 = vst.msk [vmem:[#allocation4 + $0x8] sm:$0xff] %vm64, %v379
  %404 = vst.msk [vmem:[#allocation4 + $0x10] sm:$0xff] %vm64, %v384
  %405 = vst.msk [vmem:[#allocation4 + $0x18] sm:$0xff] %vm64, %v389
  %406 = vst.msk [vmem:[#allocation4 + $0x20] sm:$0xff] %vm64, %v394
  %407 = vst.msk [vmem:[#allocation4 + $0x28] sm:$0xff] %vm64, %v399
  %v408 = vld [vmem:[%s5] sm:$0xff]
  %v409 = vld [vmem:[%s5 + $0x8] sm:$0xff]
  %v410 = vld [vmem:[%s5 + $0x10] sm:$0xff]
  %v411 = vld [vmem:[%s5 + $0x18] sm:$0xff]
  %v412 = vld [vmem:[%s6] sm:$0xff]
  %v413 = vld [vmem:[%s6 + $0x8] sm:$0xff]
  %v414 = vld [vmem:[%s6 + $0x10] sm:$0xff]
  %v415 = vld [vmem:[%s6 + $0x18] sm:$0xff]
  %v416 = vld [vmem:[%s7] sm:$0xff]
  %v417 = vld [vmem:[%s7 + $0x8] sm:$0xff]
  %v418 = vld [vmem:[%s7 + $0x10] sm:$0xff]
  %v419 = vld [vmem:[%s7 + $0x18] sm:$0xff]
  %v420 = vld [vmem:[%s11] sm:$0x1]
  %v422 = vlaneseq
  %v423 = vshrl.u32 %v422, 7
  %v424 = vsub.s32 0, %v423
  %v425 = vrot.slane %v420, %v424
  %v427 = vld [vmem:[%s1] sm:$0xff]
  %v428 = vld [vmem:[#allocation2] sm:$0xff]
  %v429 = vld [vmem:[#allocation3] sm:$0xff]
  %v430 = vld [vmem:[#allocation4] sm:$0xff]
  %v432 = vsel %vm64, %v427, 0
  %434 = vmatprep.subr.mxu0 0.0
  %435 = vmatpush1.msra.mxu0 %v408
  %436 = vmatprep.subr.mxu0 0.0
  %437 = vmatpush1.msra.mxu0 %v409
  %438 = vmatprep.subr.mxu0 0.0
  %439 = vmatpush1.msra.mxu0 %v410
  %440 = vmatprep.subr.mxu0 0.0
  %441 = vmatpush1.msra.mxu0 %v411
  %442 = vmatprep.subr.mxu0 0.0
  %443 = vmatpush1.msra.mxu0 0.0
  %444 = vmatprep.subr.mxu0 0.0
  %445 = vmatpush1.msra.mxu0 0.0
  %446 = vmatprep.subr.mxu0 0.0
  %447 = vmatpush1.msra.mxu0 0.0
  %448 = vmatprep.subr.mxu0 0.0
  %449 = vmatpush1.msra.mxu0 0.0
  %450 = vmatprep.subr.mxu0 0.0
  %451 = vmatpush1.msra.mxu0 0.0
  %452 = vmatprep.subr.mxu0 0.0
  %453 = vmatpush1.msra.mxu0 0.0
  %454 = vmatprep.subr.mxu0 0.0
  %455 = vmatpush1.msra.mxu0 0.0
  %456 = vmatprep.subr.mxu0 0.0
  %457 = vmatpush1.msra.mxu0 0.0
  %458 = vmatprep.subr.mxu0 0.0
  %459 = vmatpush1.msra.mxu0 0.0
  %460 = vmatprep.subr.mxu0 0.0
  %461 = vmatpush1.msra.mxu0 0.0
  %462 = vmatprep.subr.mxu0 0.0
  %463 = vmatpush1.msra.mxu0 0.0
  %464 = vmatprep.subr.mxu0 0.0
  %465 = vmatpush1.msra.mxu0 0.0
  %466 = vmatprep.subr.mxu0 0.0
  %467 = vmatpush1.msra.mxu0 0.0
  %468 = vmatprep.subr.mxu0 0.0
  %469 = vmatpush1.msra.mxu0 0.0
  %470 = vmatprep.subr.mxu0 0.0
  %471 = vmatpush1.msra.mxu0 0.0
  %472 = vmatprep.subr.mxu0 0.0
  %473 = vmatpush1.msra.mxu0 0.0
  %474 = vmatprep.subr.mxu0 0.0
  %475 = vmatpush1.msra.mxu0 0.0
  %476 = vmatprep.subr.mxu0 0.0
  %477 = vmatpush1.msra.mxu0 0.0
  %478 = vmatprep.subr.mxu0 0.0
  %479 = vmatpush1.msra.mxu0 0.0
  %480 = vmatprep.subr.mxu0 0.0
  %481 = vmatpush1.msra.mxu0 0.0
  %482 = vmatprep.subr.mxu0 0.0
  %483 = vmatpush1.msra.mxu0 0.0
  %484 = vmatprep.subr.mxu0 0.0
  %485 = vmatpush1.msra.mxu0 0.0
  %486 = vmatprep.subr.mxu0 0.0
  %487 = vmatpush1.msra.mxu0 0.0
  %488 = vmatprep.subr.mxu0 0.0
  %489 = vmatpush1.msra.mxu0 0.0
  %490 = vmatprep.subr.mxu0 0.0
  %491 = vmatpush1.msra.mxu0 0.0
  %492 = vmatprep.subr.mxu0 0.0
  %493 = vmatpush1.msra.mxu0 0.0
  %494 = vmatprep.subr.mxu0 0.0
  %495 = vmatpush1.msra.mxu0 0.0
  %496 = vmatprep.subr.mxu0 0.0
  %497 = vmatpush1.msra.mxu0 0.0
  %498 = vmatprep.mubr.f32.mxu0 0.0
  %499 = vmatmul.mubr.f32.gmra.mrb[0].mxu0 %v432
  %v500 = vpop.f32.mrb[0].mxu0
  %v501 = vadd.f32 0.0, %v500
  %v502 = vpop.f32.mrb[0].mxu0
  %503 = vdwg.mxu0
  %504 = vmatprep.subr.mxu0 0.0
  %505 = vmatpush1.msra.mxu0 %v412
  %506 = vmatprep.subr.mxu0 0.0
  %507 = vmatpush1.msra.mxu0 %v413
  %508 = vmatprep.subr.mxu0 0.0
  %509 = vmatpush1.msra.mxu0 %v414
  %510 = vmatprep.subr.mxu0 0.0
  %511 = vmatpush1.msra.mxu0 %v415
  %512 = vmatprep.subr.mxu0 0.0
  %513 = vmatpush1.msra.mxu0 0.0
  %514 = vmatprep.subr.mxu0 0.0
  %515 = vmatpush1.msra.mxu0 0.0
  %516 = vmatprep.subr.mxu0 0.0
  %517 = vmatpush1.msra.mxu0 0.0
  %518 = vmatprep.subr.mxu0 0.0
  %519 = vmatpush1.msra.mxu0 0.0
  %520 = vmatprep.subr.mxu0 0.0
  %521 = vmatpush1.msra.mxu0 0.0
  %522 = vmatprep.subr.mxu0 0.0
  %523 = vmatpush1.msra.mxu0 0.0
  %524 = vmatprep.subr.mxu0 0.0
  %525 = vmatpush1.msra.mxu0 0.0
  %526 = vmatprep.subr.mxu0 0.0
  %527 = vmatpush1.msra.mxu0 0.0
  %528 = vmatprep.subr.mxu0 0.0
  %529 = vmatpush1.msra.mxu0 0.0
  %530 = vmatprep.subr.mxu0 0.0
  %531 = vmatpush1.msra.mxu0 0.0
  %532 = vmatprep.subr.mxu0 0.0
  %533 = vmatpush1.msra.mxu0 0.0
  %534 = vmatprep.subr.mxu0 0.0
  %535 = vmatpush1.msra.mxu0 0.0
  %536 = vmatprep.subr.mxu0 0.0
  %537 = vmatpush1.msra.mxu0 0.0
  %538 = vmatprep.subr.mxu0 0.0
  %539 = vmatpush1.msra.mxu0 0.0
  %540 = vmatprep.subr.mxu0 0.0
  %541 = vmatpush1.msra.mxu0 0.0
  %542 = vmatprep.subr.mxu0 0.0
  %543 = vmatpush1.msra.mxu0 0.0
  %544 = vmatprep.subr.mxu0 0.0
  %545 = vmatpush1.msra.mxu0 0.0
  %546 = vmatprep.subr.mxu0 0.0
  %547 = vmatpush1.msra.mxu0 0.0
  %548 = vmatprep.subr.mxu0 0.0
  %549 = vmatpush1.msra.mxu0 0.0
  %550 = vmatprep.subr.mxu0 0.0
  %551 = vmatpush1.msra.mxu0 0.0
  %552 = vmatprep.subr.mxu0 0.0
  %553 = vmatpush1.msra.mxu0 0.0
  %554 = vmatprep.subr.mxu0 0.0
  %555 = vmatpush1.msra.mxu0 0.0
  %556 = vmatprep.subr.mxu0 0.0
  %557 = vmatpush1.msra.mxu0 0.0
  %558 = vmatprep.subr.mxu0 0.0
  %559 = vmatpush1.msra.mxu0 0.0
  %560 = vmatprep.subr.mxu0 0.0
  %561 = vmatpush1.msra.mxu0 0.0
  %562 = vmatprep.subr.mxu0 0.0
  %563 = vmatpush1.msra.mxu0 0.0
  %564 = vmatprep.subr.mxu0 0.0
  %565 = vmatpush1.msra.mxu0 0.0
  %566 = vmatprep.subr.mxu0 0.0
  %567 = vmatpush1.msra.mxu0 0.0
  %568 = vmatprep.mubr.f32.mxu0 0.0
  %569 = vmatmul.mubr.f32.gmra.mrb[0].mxu0 %v432
  %v570 = vpop.f32.mrb[0].mxu0
  %v571 = vadd.f32 0.0, %v570
  %v572 = vpop.f32.mrb[0].mxu0
  %573 = vdwg.mxu0
  %574 = vmatprep.subr.mxu0 0.0
  %575 = vmatpush1.msra.mxu0 %v416
  %576 = vmatprep.subr.mxu0 0.0
  %577 = vmatpush1.msra.mxu0 %v417
  %578 = vmatprep.subr.mxu0 0.0
  %579 = vmatpush1.msra.mxu0 %v418
  %580 = vmatprep.subr.mxu0 0.0
  %581 = vmatpush1.msra.mxu0 %v419
  %582 = vmatprep.subr.mxu0 0.0
  %583 = vmatpush1.msra.mxu0 0.0
  %584 = vmatprep.subr.mxu0 0.0
  %585 = vmatpush1.msra.mxu0 0.0
  %586 = vmatprep.subr.mxu0 0.0
  %587 = vmatpush1.msra.mxu0 0.0
  %588 = vmatprep.subr.mxu0 0.0
  %589 = vmatpush1.msra.mxu0 0.0
  %590 = vmatprep.subr.mxu0 0.0
  %591 = vmatpush1.msra.mxu0 0.0
  %592 = vmatprep.subr.mxu0 0.0
  %593 = vmatpush1.msra.mxu0 0.0
  %594 = vmatprep.subr.mxu0 0.0
  %595 = vmatpush1.msra.mxu0 0.0
  %596 = vmatprep.subr.mxu0 0.0
  %597 = vmatpush1.msra.mxu0 0.0
  %598 = vmatprep.subr.mxu0 0.0
  %599 = vmatpush1.msra.mxu0 0.0
  %600 = vmatprep.subr.mxu0 0.0
  %601 = vmatpush1.msra.mxu0 0.0
  %602 = vmatprep.subr.mxu0 0.0
  %603 = vmatpush1.msra.mxu0 0.0
  %604 = vmatprep.subr.mxu0 0.0
  %605 = vmatpush1.msra.mxu0 0.0
  %606 = vmatprep.subr.mxu0 0.0
  %607 = vmatpush1.msra.mxu0 0.0
  %608 = vmatprep.subr.mxu0 0.0
  %609 = vmatpush1.msra.mxu0 0.0
  %610 = vmatprep.subr.mxu0 0.0
  %611 = vmatpush1.msra.mxu0 0.0
  %612 = vmatprep.subr.mxu0 0.0
  %613 = vmatpush1.msra.mxu0 0.0
  %614 = vmatprep.subr.mxu0 0.0
  %615 = vmatpush1.msra.mxu0 0.0
  %616 = vmatprep.subr.mxu0 0.0
  %617 = vmatpush1.msra.mxu0 0.0
  %618 = vmatprep.subr.mxu0 0.0
  %619 = vmatpush1.msra.mxu0 0.0
  %620 = vmatprep.subr.mxu0 0.0
  %621 = vmatpush1.msra.mxu0 0.0
  %622 = vmatprep.subr.mxu0 0.0
  %623 = vmatpush1.msra.mxu0 0.0
  %624 = vmatprep.subr.mxu0 0.0
  %625 = vmatpush1.msra.mxu0 0.0
  %626 = vmatprep.subr.mxu0 0.0
  %627 = vmatpush1.msra.mxu0 0.0
  %628 = vmatprep.subr.mxu0 0.0
  %629 = vmatpush1.msra.mxu0 0.0
  %630 = vmatprep.subr.mxu0 0.0
  %631 = vmatpush1.msra.mxu0 0.0
  %632 = vmatprep.subr.mxu0 0.0
  %633 = vmatpush1.msra.mxu0 0.0
  %634 = vmatprep.subr.mxu0 0.0
  %635 = vmatpush1.msra.mxu0 0.0
  %636 = vmatprep.subr.mxu0 0.0
  %637 = vmatpush1.msra.mxu0 0.0
  %638 = vmatprep.mubr.f32.mxu0 0.0
  %639 = vmatmul.mubr.f32.gmra.mrb[0].mxu0 %v432
  %v640 = vpop.f32.mrb[0].mxu0
  %v641 = vadd.f32 %v425, %v640
  %v642 = vpop.f32.mrb[0].mxu0
  %643 = vdwg.mxu0
  %v644 = vadd.f32 %v428, %v501
  %v645 = vxor.u32 %v644, 2147483648
  %v646 = vmul.f32 %v645, 1.442695
  %v647 = vpow.pop %v646
  %v648 = vadd.f32 %v647, 1.0
  %v649 = vrcp.pop %v648
  %v650 = vmul.f32 1.0, %v649
  %v651 = vadd.f32 %v429, %v571
  %v652 = vxor.u32 %v651, 2147483648
  %v653 = vmul.f32 %v652, 1.442695
  %v654 = vpow.pop %v653
  %v655 = vadd.f32 %v654, 1.0
  %v656 = vrcp.pop %v655
  %v657 = vmul.f32 1.0, %v656
  %v658 = vmul.f32 %v650, %v641
  %v659 = vadd.f32 %v430, %v658
  %v660 = vtanh.pop %v659
  %v661 = vsub.f32 1.0, %v657
  %v662 = vmul.f32 %v661, %v660
  %v663 = vmul.f32 %v657, %v427
  %v664 = vadd.f32 %v662, %v663
  %665 = vst.msk [vmem:[#allocation5] sm:$0xff] %vm64, %v664
  %s666 = scalar_lea.vmem [#allocation2], 8
  %v667 = vld [vmem:[%s666] sm:$0xff]
  %s668 = scalar_lea.vmem [#allocation3], 8
  %v669 = vld [vmem:[%s668] sm:$0xff]
  %s670 = scalar_lea.vmem [#allocation4], 8
  %v671 = vld [vmem:[%s670] sm:$0xff]
  %v673 = vsel %vm64, %v664, 0
  %675 = vmatprep.subr.mxu0 0.0
  %676 = vmatpush1.msra.mxu0 %v408
  %677 = vmatprep.subr.mxu0 0.0
  %678 = vmatpush1.msra.mxu0 %v409
  %679 = vmatprep.subr.mxu0 0.0
  %680 = vmatpush1.msra.mxu0 %v410
  %681 = vmatprep.subr.mxu0 0.0
  %682 = vmatpush1.msra.mxu0 %v411
  %683 = vmatprep.subr.mxu0 0.0
  %684 = vmatpush1.msra.mxu0 0.0
  %685 = vmatprep.subr.mxu0 0.0
  %686 = vmatpush1.msra.mxu0 0.0
  %687 = vmatprep.subr.mxu0 0.0
  %688 = vmatpush1.msra.mxu0 0.0
  %689 = vmatprep.subr.mxu0 0.0
  %690 = vmatpush1.msra.mxu0 0.0
  %691 = vmatprep.subr.mxu0 0.0
  %692 = vmatpush1.msra.mxu0 0.0
  %693 = vmatprep.subr.mxu0 0.0
  %694 = vmatpush1.msra.mxu0 0.0
  %695 = vmatprep.subr.mxu0 0.0
  %696 = vmatpush1.msra.mxu0 0.0
  %697 = vmatprep.subr.mxu0 0.0
  %698 = vmatpush1.msra.mxu0 0.0
  %699 = vmatprep.subr.mxu0 0.0
  %700 = vmatpush1.msra.mxu0 0.0
  %701 = vmatprep.subr.mxu0 0.0
  %702 = vmatpush1.msra.mxu0 0.0
  %703 = vmatprep.subr.mxu0 0.0
  %704 = vmatpush1.msra.mxu0 0.0
  %705 = vmatprep.subr.mxu0 0.0
  %706 = vmatpush1.msra.mxu0 0.0
  %707 = vmatprep.subr.mxu0 0.0
  %708 = vmatpush1.msra.mxu0 0.0
  %709 = vmatprep.subr.mxu0 0.0
  %710 = vmatpush1.msra.mxu0 0.0
  %711 = vmatprep.subr.mxu0 0.0
  %712 = vmatpush1.msra.mxu0 0.0
  %713 = vmatprep.subr.mxu0 0.0
  %714 = vmatpush1.msra.mxu0 0.0
  %715 = vmatprep.subr.mxu0 0.0
  %716 = vmatpush1.msra.mxu0 0.0
  %717 = vmatprep.subr.mxu0 0.0
  %718 = vmatpush1.msra.mxu0 0.0
  %719 = vmatprep.subr.mxu0 0.0
  %720 = vmatpush1.msra.mxu0 0.0
  %721 = vmatprep.subr.mxu0 0.0
  %722 = vmatpush1.msra.mxu0 0.0
  %723 = vmatprep.subr.mxu0 0.0
  %724 = vmatpush1.msra.mxu0 0.0
  %725 = vmatprep.subr.mxu0 0.0
  %726 = vmatpush1.msra.mxu0 0.0
  %727 = vmatprep.subr.mxu0 0.0
  %728 = vmatpush1.msra.mxu0 0.0
  %729 = vmatprep.subr.mxu0 0.0
  %730 = vmatpush1.msra.mxu0 0.0
  %731 = vmatprep.subr.mxu0 0.0
  %732 = vmatpush1.msra.mxu0 0.0
  %733 = vmatprep.subr.mxu0 0.0
  %734 = vmatpush1.msra.mxu0 0.0
  %735 = vmatprep.subr.mxu0 0.0
  %736 = vmatpush1.msra.mxu0 0.0
  %737 = vmatprep.subr.mxu0 0.0
  %738 = vmatpush1.msra.mxu0 0.0
  %739 = vmatprep.mubr.f32.mxu0 0.0
  %740 = vmatmul.mubr.f32.gmra.mrb[0].mxu0 %v673
  %v741 = vpop.f32.mrb[0].mxu0
  %v742 = vadd.f32 0.0, %v741
  %v743 = vpop.f32.mrb[0].mxu0
  %744 = vdwg.mxu0
  %745 = vmatprep.subr.mxu0 0.0
  %746 = vmatpush1.msra.mxu0 %v412
  %747 = vmatprep.subr.mxu0 0.0
  %748 = vmatpush1.msra.mxu0 %v413
  %749 = vmatprep.subr.mxu0 0.0
  %750 = vmatpush1.msra.mxu0 %v414
  %751 = vmatprep.subr.mxu0 0.0
  %752 = vmatpush1.msra.mxu0 %v415
  %753 = vmatprep.subr.mxu0 0.0
  %754 = vmatpush1.msra.mxu0 0.0
  %755 = vmatprep.subr.mxu0 0.0
  %756 = vmatpush1.msra.mxu0 0.0
  %757 = vmatprep.subr.mxu0 0.0
  %758 = vmatpush1.msra.mxu0 0.0
  %759 = vmatprep.subr.mxu0 0.0
  %760 = vmatpush1.msra.mxu0 0.0
  %761 = vmatprep.subr.mxu0 0.0
  %762 = vmatpush1.msra.mxu0 0.0
  %763 = vmatprep.subr.mxu0 0.0
  %764 = vmatpush1.msra.mxu0 0.0
  %765 = vmatprep.subr.mxu0 0.0
  %766 = vmatpush1.msra.mxu0 0.0
  %767 = vmatprep.subr.mxu0 0.0
  %768 = vmatpush1.msra.mxu0 0.0
  %769 = vmatprep.subr.mxu0 0.0
  %770 = vmatpush1.msra.mxu0 0.0
  %771 = vmatprep.subr.mxu0 0.0
  %772 = vmatpush1.msra.mxu0 0.0
  %773 = vmatprep.subr.mxu0 0.0
  %774 = vmatpush1.msra.mxu0 0.0
  %775 = vmatprep.subr.mxu0 0.0
  %776 = vmatpush1.msra.mxu0 0.0
  %777 = vmatprep.subr.mxu0 0.0
  %778 = vmatpush1.msra.mxu0 0.0
  %779 = vmatprep.subr.mxu0 0.0
  %780 = vmatpush1.msra.mxu0 0.0
  %781 = vmatprep.subr.mxu0 0.0
  %782 = vmatpush1.msra.mxu0 0.0
  %783 = vmatprep.subr.mxu0 0.0
  %784 = vmatpush1.msra.mxu0 0.0
  %785 = vmatprep.subr.mxu0 0.0
  %786 = vmatpush1.msra.mxu0 0.0
  %787 = vmatprep.subr.mxu0 0.0
  %788 = vmatpush1.msra.mxu0 0.0
  %789 = vmatprep.subr.mxu0 0.0
  %790 = vmatpush1.msra.mxu0 0.0
  %791 = vmatprep.subr.mxu0 0.0
  %792 = vmatpush1.msra.mxu0 0.0
  %793 = vmatprep.subr.mxu0 0.0
  %794 = vmatpush1.msra.mxu0 0.0
  %795 = vmatprep.subr.mxu0 0.0
  %796 = vmatpush1.msra.mxu0 0.0
  %797 = vmatprep.subr.mxu0 0.0
  %798 = vmatpush1.msra.mxu0 0.0
  %799 = vmatprep.subr.mxu0 0.0
  %800 = vmatpush1.msra.mxu0 0.0
  %801 = vmatprep.subr.mxu0 0.0
  %802 = vmatpush1.msra.mxu0 0.0
  %803 = vmatprep.subr.mxu0 0.0
  %804 = vmatpush1.msra.mxu0 0.0
  %805 = vmatprep.subr.mxu0 0.0
  %806 = vmatpush1.msra.mxu0 0.0
  %807 = vmatprep.subr.mxu0 0.0
  %808 = vmatpush1.msra.mxu0 0.0
  %809 = vmatprep.mubr.f32.mxu0 0.0
  %810 = vmatmul.mubr.f32.gmra.mrb[0].mxu0 %v673
  %v811 = vpop.f32.mrb[0].mxu0
  %v812 = vadd.f32 0.0, %v811
  %v813 = vpop.f32.mrb[0].mxu0
  %814 = vdwg.mxu0
  %815 = vmatprep.subr.mxu0 0.0
  %816 = vmatpush1.msra.mxu0 %v416
  %817 = vmatprep.subr.mxu0 0.0
  %818 = vmatpush1.msra.mxu0 %v417
  %819 = vmatprep.subr.mxu0 0.0
  %820 = vmatpush1.msra.mxu0 %v418
  %821 = vmatprep.subr.mxu0 0.0
  %822 = vmatpush1.msra.mxu0 %v419
  %823 = vmatprep.subr.mxu0 0.0
  %824 = vmatpush1.msra.mxu0 0.0
  %825 = vmatprep.subr.mxu0 0.0
  %826 = vmatpush1.msra.mxu0 0.0
  %827 = vmatprep.subr.mxu0 0.0
  %828 = vmatpush1.msra.mxu0 0.0
  %829 = vmatprep.subr.mxu0 0.0
  %830 = vmatpush1.msra.mxu0 0.0
  %831 = vmatprep.subr.mxu0 0.0
  %832 = vmatpush1.msra.mxu0 0.0
  %833 = vmatprep.subr.mxu0 0.0
  %834 = vmatpush1.msra.mxu0 0.0
  %835 = vmatprep.subr.mxu0 0.0
  %836 = vmatpush1.msra.mxu0 0.0
  %837 = vmatprep.subr.mxu0 0.0
  %838 = vmatpush1.msra.mxu0 0.0
  %839 = vmatprep.subr.mxu0 0.0
  %840 = vmatpush1.msra.mxu0 0.0
  %841 = vmatprep.subr.mxu0 0.0
  %842 = vmatpush1.msra.mxu0 0.0
  %843 = vmatprep.subr.mxu0 0.0
  %844 = vmatpush1.msra.mxu0 0.0
  %845 = vmatprep.subr.mxu0 0.0
  %846 = vmatpush1.msra.mxu0 0.0
  %847 = vmatprep.subr.mxu0 0.0
  %848 = vmatpush1.msra.mxu0 0.0
  %849 = vmatprep.subr.mxu0 0.0
  %850 = vmatpush1.msra.mxu0 0.0
  %851 = vmatprep.subr.mxu0 0.0
  %852 = vmatpush1.msra.mxu0 0.0
  %853 = vmatprep.subr.mxu0 0.0
  %854 = vmatpush1.msra.mxu0 0.0
  %855 = vmatprep.subr.mxu0 0.0
  %856 = vmatpush1.msra.mxu0 0.0
  %857 = vmatprep.subr.mxu0 0.0
  %858 = vmatpush1.msra.mxu0 0.0
  %859 = vmatprep.subr.mxu0 0.0
  %860 = vmatpush1.msra.mxu0 0.0
  %861 = vmatprep.subr.mxu0 0.0
  %862 = vmatpush1.msra.mxu0 0.0
  %863 = vmatprep.subr.mxu0 0.0
  %864 = vmatpush1.msra.mxu0 0.0
  %865 = vmatprep.subr.mxu0 0.0
  %866 = vmatpush1.msra.mxu0 0.0
  %867 = vmatprep.subr.mxu0 0.0
  %868 = vmatpush1.msra.mxu0 0.0
  %869 = vmatprep.subr.mxu0 0.0
  %870 = vmatpush1.msra.mxu0 0.0
  %871 = vmatprep.subr.mxu0 0.0
  %872 = vmatpush1.msra.mxu0 0.0
  %873 = vmatprep.subr.mxu0 0.0
  %874 = vmatpush1.msra.mxu0 0.0
  %875 = vmatprep.subr.mxu0 0.0
  %876 = vmatpush1.msra.mxu0 0.0
  %877 = vmatprep.subr.mxu0 0.0
  %878 = vmatpush1.msra.mxu0 0.0
  %879 = vmatprep.mubr.f32.mxu0 0.0
  %880 = vmatmul.mubr.f32.gmra.mrb[0].mxu0 %v673
  %v881 = vpop.f32.mrb[0].mxu0
  %v882 = vadd.f32 %v425, %v881
  %v883 = vpop.f32.mrb[0].mxu0
  %884 = vdwg.mxu0
  %v885 = vadd.f32 %v667, %v742
  %v886 = vxor.u32 %v885, 2147483648
  %v887 = vmul.f32 %v886, 1.442695
  %v888 = vpow.pop %v887
  %v889 = vadd.f32 %v888, 1.0
  %v890 = vrcp.pop %v889
  %v891 = vmul.f32 1.0, %v890
  %v892 = vadd.f32 %v669, %v812
  %v893 = vxor.u32 %v892, 2147483648
  %v894 = vmul.f32 %v893, 1.442695
  %v895 = vpow.pop %v894
  %v896 = vadd.f32 %v895, 1.0
  %v897 = vrcp.pop %v896
  %v898 = vmul.f32 1.0, %v897
  %v899 = vmul.f32 %v891, %v882
  %v900 = vadd.f32 %v671, %v899
  %v901 = vtanh.pop %v900
  %v902 = vsub.f32 1.0, %v898
  %v903 = vmul.f32 %v902, %v901
  %v904 = vmul.f32 %v898, %v664
  %v905 = vadd.f32 %v903, %v904
  %s906 = scalar_lea.vmem [#allocation5], 8
  %907 = vst.msk [vmem:[%s906] sm:$0xff] %vm64, %v905
  %s908 = scalar_lea.vmem [#allocation2], 16
  %v909 = vld [vmem:[%s908] sm:$0xff]
  %s910 = scalar_lea.vmem [#allocation3], 16
  %v911 = vld [vmem:[%s910] sm:$0xff]
  %s912 = scalar_lea.vmem [#allocation4], 16
  %v913 = vld [vmem:[%s912] sm:$0xff]
  %v915 = vsel %vm64, %v905, 0
  %917 = vmatprep.subr.mxu0 0.0
  %918 = vmatpush1.msra.mxu0 %v408
  %919 = vmatprep.subr.mxu0 0.0
  %920 = vmatpush1.msra.mxu0 %v409
  %921 = vmatprep.subr.mxu0 0.0
  %922 = vmatpush1.msra.mxu0 %v410
  %923 = vmatprep.subr.mxu0 0.0
  %924 = vmatpush1.msra.mxu0 %v411
  %925 = vmatprep.subr.mxu0 0.0
  %926 = vmatpush1.msra.mxu0 0.0
  %927 = vmatprep.subr.mxu0 0.0
  %928 = vmatpush1.msra.mxu0 0.0
  %929 = vmatprep.subr.mxu0 0.0
  %930 = vmatpush1.msra.mxu0 0.0
  %931 = vmatprep.subr.mxu0 0.0
  %932 = vmatpush1.msra.mxu0 0.0
  %933 = vmatprep.subr.mxu0 0.0
  %934 = vmatpush1.msra.mxu0 0.0
  %935 = vmatprep.subr.mxu0 0.0
  %936 = vmatpush1.msra.mxu0 0.0
  %937 = vmatprep.subr.mxu0 0.0
  %938 = vmatpush1.msra.mxu0 0.0
  %939 = vmatprep.subr.mxu0 0.0
  %940 = vmatpush1.msra.mxu0 0.0
  %941 = vmatprep.subr.mxu0 0.0
  %942 = vmatpush1.msra.mxu0 0.0
  %943 = vmatprep.subr.mxu0 0.0
  %944 = vmatpush1.msra.mxu0 0.0
  %945 = vmatprep.subr.mxu0 0.0
  %946 = vmatpush1.msra.mxu0 0.0
  %947 = vmatprep.subr.mxu0 0.0
  %948 = vmatpush1.msra.mxu0 0.0
  %949 = vmatprep.subr.mxu0 0.0
  %950 = vmatpush1.msra.mxu0 0.0
  %951 = vmatprep.subr.mxu0 0.0
  %952 = vmatpush1.msra.mxu0 0.0
  %953 = vmatprep.subr.mxu0 0.0
  %954 = vmatpush1.msra.mxu0 0.0
  %955 = vmatprep.subr.mxu0 0.0
  %956 = vmatpush1.msra.mxu0 0.0
  %957 = vmatprep.subr.mxu0 0.0
  %958 = vmatpush1.msra.mxu0 0.0
  %959 = vmatprep.subr.mxu0 0.0
  %960 = vmatpush1.msra.mxu0 0.0
  %961 = vmatprep.subr.mxu0 0.0
  %962 = vmatpush1.msra.mxu0 0.0
  %963 = vmatprep.subr.mxu0 0.0
  %964 = vmatpush1.msra.mxu0 0.0
  %965 = vmatprep.subr.mxu0 0.0
  %966 = vmatpush1.msra.mxu0 0.0
  %967 = vmatprep.subr.mxu0 0.0
  %968 = vmatpush1.msra.mxu0 0.0
  %969 = vmatprep.subr.mxu0 0.0
  %970 = vmatpush1.msra.mxu0 0.0
  %971 = vmatprep.subr.mxu0 0.0
  %972 = vmatpush1.msra.mxu0 0.0
  %973 = vmatprep.subr.mxu0 0.0
  %974 = vmatpush1.msra.mxu0 0.0
  %975 = vmatprep.subr.mxu0 0.0
  %976 = vmatpush1.msra.mxu0 0.0
  %977 = vmatprep.subr.mxu0 0.0
  %978 = vmatpush1.msra.mxu0 0.0
  %979 = vmatprep.subr.mxu0 0.0
  %980 = vmatpush1.msra.mxu0 0.0
  %981 = vmatprep.mubr.f32.mxu0 0.0
  %982 = vmatmul.mubr.f32.gmra.mrb[0].mxu0 %v915
  %v983 = vpop.f32.mrb[0].mxu0
  %v984 = vadd.f32 0.0, %v983
  %v985 = vpop.f32.mrb[0].mxu0
  %986 = vdwg.mxu0
  %987 = vmatprep.subr.mxu0 0.0
  %988 = vmatpush1.msra.mxu0 %v412
  %989 = vmatprep.subr.mxu0 0.0
  %990 = vmatpush1.msra.mxu0 %v413
  %991 = vmatprep.subr.mxu0 0.0
  %992 = vmatpush1.msra.mxu0 %v414
  %993 = vmatprep.subr.mxu0 0.0
  %994 = vmatpush1.msra.mxu0 %v415
  %995 = vmatprep.subr.mxu0 0.0
  %996 = vmatpush1.msra.mxu0 0.0
  %997 = vmatprep.subr.mxu0 0.0
  %998 = vmatpush1.msra.mxu0 0.0
  %999 = vmatprep.subr.mxu0 0.0
  %1000 = vmatpush1.msra.mxu0 0.0
  %1001 = vmatprep.subr.mxu0 0.0
  %1002 = vmatpush1.msra.mxu0 0.0
  %1003 = vmatprep.subr.mxu0 0.0
  %1004 = vmatpush1.msra.mxu0 0.0
  %1005 = vmatprep.subr.mxu0 0.0
  %1006 = vmatpush1.msra.mxu0 0.0
  %1007 = vmatprep.subr.mxu0 0.0
  %1008 = vmatpush1.msra.mxu0 0.0
  %1009 = vmatprep.subr.mxu0 0.0
  %1010 = vmatpush1.msra.mxu0 0.0
  %1011 = vmatprep.subr.mxu0 0.0
  %1012 = vmatpush1.msra.mxu0 0.0
  %1013 = vmatprep.subr.mxu0 0.0
  %1014 = vmatpush1.msra.mxu0 0.0
  %1015 = vmatprep.subr.mxu0 0.0
  %1016 = vmatpush1.msra.mxu0 0.0
  %1017 = vmatprep.subr.mxu0 0.0
  %1018 = vmatpush1.msra.mxu0 0.0
  %1019 = vmatprep.subr.mxu0 0.0
  %1020 = vmatpush1.msra.mxu0 0.0
  %1021 = vmatprep.subr.mxu0 0.0
  %1022 = vmatpush1.msra.mxu0 0.0
  %1023 = vmatprep.subr.mxu0 0.0
  %1024 = vmatpush1.msra.mxu0 0.0
  %1025 = vmatprep.subr.mxu0 0.0
  %1026 = vmatpush1.msra.mxu0 0.0
  %1027 = vmatprep.subr.mxu0 0.0
  %1028 = vmatpush1.msra.mxu0 0.0
  %1029 = vmatprep.subr.mxu0 0.0
  %1030 = vmatpush1.msra.mxu0 0.0
  %1031 = vmatprep.subr.mxu0 0.0
  %1032 = vmatpush1.msra.mxu0 0.0
  %1033 = vmatprep.subr.mxu0 0.0
  %1034 = vmatpush1.msra.mxu0 0.0
  %1035 = vmatprep.subr.mxu0 0.0
  %1036 = vmatpush1.msra.mxu0 0.0
  %1037 = vmatprep.subr.mxu0 0.0
  %1038 = vmatpush1.msra.mxu0 0.0
  %1039 = vmatprep.subr.mxu0 0.0
  %1040 = vmatpush1.msra.mxu0 0.0
  %1041 = vmatprep.subr.mxu0 0.0
  %1042 = vmatpush1.msra.mxu0 0.0
  %1043 = vmatprep.subr.mxu0 0.0
  %1044 = vmatpush1.msra.mxu0 0.0
  %1045 = vmatprep.subr.mxu0 0.0
  %1046 = vmatpush1.msra.mxu0 0.0
  %1047 = vmatprep.subr.mxu0 0.0
  %1048 = vmatpush1.msra.mxu0 0.0
  %1049 = vmatprep.subr.mxu0 0.0
  %1050 = vmatpush1.msra.mxu0 0.0
  %1051 = vmatprep.mubr.f32.mxu0 0.0
  %1052 = vmatmul.mubr.f32.gmra.mrb[0].mxu0 %v915
  %v1053 = vpop.f32.mrb[0].mxu0
  %v1054 = vadd.f32 0.0, %v1053
  %v1055 = vpop.f32.mrb[0].mxu0
  %1056 = vdwg.mxu0
  %1057 = vmatprep.subr.mxu0 0.0
  %1058 = vmatpush1.msra.mxu0 %v416
  %1059 = vmatprep.subr.mxu0 0.0
  %1060 = vmatpush1.msra.mxu0 %v417
  %1061 = vmatprep.subr.mxu0 0.0
  %1062 = vmatpush1.msra.mxu0 %v418
  %1063 = vmatprep.subr.mxu0 0.0
  %1064 = vmatpush1.msra.mxu0 %v419
  %1065 = vmatprep.subr.mxu0 0.0
  %1066 = vmatpush1.msra.mxu0 0.0
  %1067 = vmatprep.subr.mxu0 0.0
  %1068 = vmatpush1.msra.mxu0 0.0
  %1069 = vmatprep.subr.mxu0 0.0
  %1070 = vmatpush1.msra.mxu0 0.0
  %1071 = vmatprep.subr.mxu0 0.0
  %1072 = vmatpush1.msra.mxu0 0.0
  %1073 = vmatprep.subr.mxu0 0.0
  %1074 = vmatpush1.msra.mxu0 0.0
  %1075 = vmatprep.subr.mxu0 0.0
  %1076 = vmatpush1.msra.mxu0 0.0
  %1077 = vmatprep.subr.mxu0 0.0
  %1078 = vmatpush1.msra.mxu0 0.0
  %1079 = vmatprep.subr.mxu0 0.0
  %1080 = vmatpush1.msra.mxu0 0.0
  %1081 = vmatprep.subr.mxu0 0.0
  %1082 = vmatpush1.msra.mxu0 0.0
  %1083 = vmatprep.subr.mxu0 0.0
  %1084 = vmatpush1.msra.mxu0 0.0
  %1085 = vmatprep.subr.mxu0 0.0
  %1086 = vmatpush1.msra.mxu0 0.0
  %1087 = vmatprep.subr.mxu0 0.0
  %1088 = vmatpush1.msra.mxu0 0.0
  %1089 = vmatprep.subr.mxu0 0.0
  %1090 = vmatpush1.msra.mxu0 0.0
  %1091 = vmatprep.subr.mxu0 0.0
  %1092 = vmatpush1.msra.mxu0 0.0
  %1093 = vmatprep.subr.mxu0 0.0
  %1094 = vmatpush1.msra.mxu0 0.0
  %1095 = vmatprep.subr.mxu0 0.0
  %1096 = vmatpush1.msra.mxu0 0.0
  %1097 = vmatprep.subr.mxu0 0.0
  %1098 = vmatpush1.msra.mxu0 0.0
  %1099 = vmatprep.subr.mxu0 0.0
  %1100 = vmatpush1.msra.mxu0 0.0
  %1101 = vmatprep.subr.mxu0 0.0
  %1102 = vmatpush1.msra.mxu0 0.0
  %1103 = vmatprep.subr.mxu0 0.0
  %1104 = vmatpush1.msra.mxu0 0.0
  %1105 = vmatprep.subr.mxu0 0.0
  %1106 = vmatpush1.msra.mxu0 0.0
  %1107 = vmatprep.subr.mxu0 0.0
  %1108 = vmatpush1.msra.mxu0 0.0
  %1109 = vmatprep.subr.mxu0 0.0
  %1110 = vmatpush1.msra.mxu0 0.0
  %1111 = vmatprep.subr.mxu0 0.0
  %1112 = vmatpush1.msra.mxu0 0.0
  %1113 = vmatprep.subr.mxu0 0.0
  %1114 = vmatpush1.msra.mxu0 0.0
  %1115 = vmatprep.subr.mxu0 0.0
  %1116 = vmatpush1.msra.mxu0 0.0
  %1117 = vmatprep.subr.mxu0 0.0
  %1118 = vmatpush1.msra.mxu0 0.0
  %1119 = vmatprep.subr.mxu0 0.0
  %1120 = vmatpush1.msra.mxu0 0.0
  %1121 = vmatprep.mubr.f32.mxu0 0.0
  %1122 = vmatmul.mubr.f32.gmra.mrb[0].mxu0 %v915
  %v1123 = vpop.f32.mrb[0].mxu0
  %v1124 = vadd.f32 %v425, %v1123
  %v1125 = vpop.f32.mrb[0].mxu0
  %1126 = vdwg.mxu0
  %v1127 = vadd.f32 %v909, %v984
  %v1128 = vxor.u32 %v1127, 2147483648
  %v1129 = vmul.f32 %v1128, 1.442695
  %v1130 = vpow.pop %v1129
  %v1131 = vadd.f32 %v1130, 1.0
  %v1132 = vrcp.pop %v1131
  %v1133 = vmul.f32 1.0, %v1132
  %v1134 = vadd.f32 %v911, %v1054
  %v1135 = vxor.u32 %v1134, 2147483648
  %v1136 = vmul.f32 %v1135, 1.442695
  %v1137 = vpow.pop %v1136
  %v1138 = vadd.f32 %v1137, 1.0
  %v1139 = vrcp.pop %v1138
  %v1140 = vmul.f32 1.0, %v1139
  %v1141 = vmul.f32 %v1133, %v1124
  %v1142 = vadd.f32 %v913, %v1141
  %v1143 = vtanh.pop %v1142
  %v1144 = vsub.f32 1.0, %v1140
  %v1145 = vmul.f32 %v1144, %v1143
  %v1146 = vmul.f32 %v1140, %v905
  %v1147 = vadd.f32 %v1145, %v1146
  %s1148 = scalar_lea.vmem [#allocation5], 16
  %1149 = vst.msk [vmem:[%s1148] sm:$0xff] %vm64, %v1147
  %s1150 = scalar_lea.vmem [#allocation2], 24
  %v1151 = vld [vmem:[%s1150] sm:$0xff]
  %s1152 = scalar_lea.vmem [#allocation3], 24
  %v1153 = vld [vmem:[%s1152] sm:$0xff]
  %s1154 = scalar_lea.vmem [#allocation4], 24
  %v1155 = vld [vmem:[%s1154] sm:$0xff]
  %v1157 = vsel %vm64, %v1147, 0
  %1159 = vmatprep.subr.mxu0 0.0
  %1160 = vmatpush1.msra.mxu0 %v408
  %1161 = vmatprep.subr.mxu0 0.0
  %1162 = vmatpush1.msra.mxu0 %v409
  %1163 = vmatprep.subr.mxu0 0.0
  %1164 = vmatpush1.msra.mxu0 %v410
  %1165 = vmatprep.subr.mxu0 0.0
  %1166 = vmatpush1.msra.mxu0 %v411
  %1167 = vmatprep.subr.mxu0 0.0
  %1168 = vmatpush1.msra.mxu0 0.0
  %1169 = vmatprep.subr.mxu0 0.0
  %1170 = vmatpush1.msra.mxu0 0.0
  %1171 = vmatprep.subr.mxu0 0.0
  %1172 = vmatpush1.msra.mxu0 0.0
  %1173 = vmatprep.subr.mxu0 0.0
  %1174 = vmatpush1.msra.mxu0 0.0
  %1175 = vmatprep.subr.mxu0 0.0
  %1176 = vmatpush1.msra.mxu0 0.0
  %1177 = vmatprep.subr.mxu0 0.0
  %1178 = vmatpush1.msra.mxu0 0.0
  %1179 = vmatprep.subr.mxu0 0.0
  %1180 = vmatpush1.msra.mxu0 0.0
  %1181 = vmatprep.subr.mxu0 0.0
  %1182 = vmatpush1.msra.mxu0 0.0
  %1183 = vmatprep.subr.mxu0 0.0
  %1184 = vmatpush1.msra.mxu0 0.0
  %1185 = vmatprep.subr.mxu0 0.0
  %1186 = vmatpush1.msra.mxu0 0.0
  %1187 = vmatprep.subr.mxu0 0.0
  %1188 = vmatpush1.msra.mxu0 0.0
  %1189 = vmatprep.subr.mxu0 0.0
  %1190 = vmatpush1.msra.mxu0 0.0
  %1191 = vmatprep.subr.mxu0 0.0
  %1192 = vmatpush1.msra.mxu0 0.0
  %1193 = vmatprep.subr.mxu0 0.0
  %1194 = vmatpush1.msra.mxu0 0.0
  %1195 = vmatprep.subr.mxu0 0.0
  %1196 = vmatpush1.msra.mxu0 0.0
  %1197 = vmatprep.subr.mxu0 0.0
  %1198 = vmatpush1.msra.mxu0 0.0
  %1199 = vmatprep.subr.mxu0 0.0
  %1200 = vmatpush1.msra.mxu0 0.0
  %1201 = vmatprep.subr.mxu0 0.0
  %1202 = vmatpush1.msra.mxu0 0.0
  %1203 = vmatprep.subr.mxu0 0.0
  %1204 = vmatpush1.msra.mxu0 0.0
  %1205 = vmatprep.subr.mxu0 0.0
  %1206 = vmatpush1.msra.mxu0 0.0
  %1207 = vmatprep.subr.mxu0 0.0
  %1208 = vmatpush1.msra.mxu0 0.0
  %1209 = vmatprep.subr.mxu0 0.0
  %1210 = vmatpush1.msra.mxu0 0.0
  %1211 = vmatprep.subr.mxu0 0.0
  %1212 = vmatpush1.msra.mxu0 0.0
  %1213 = vmatprep.subr.mxu0 0.0
  %1214 = vmatpush1.msra.mxu0 0.0
  %1215 = vmatprep.subr.mxu0 0.0
  %1216 = vmatpush1.msra.mxu0 0.0
  %1217 = vmatprep.subr.mxu0 0.0
  %1218 = vmatpush1.msra.mxu0 0.0
  %1219 = vmatprep.subr.mxu0 0.0
  %1220 = vmatpush1.msra.mxu0 0.0
  %1221 = vmatprep.subr.mxu0 0.0
  %1222 = vmatpush1.msra.mxu0 0.0
  %1223 = vmatprep.mubr.f32.mxu0 0.0
  %1224 = vmatmul.mubr.f32.gmra.mrb[0].mxu0 %v1157
  %v1225 = vpop.f32.mrb[0].mxu0
  %v1226 = vadd.f32 0.0, %v1225
  %v1227 = vpop.f32.mrb[0].mxu0
  %1228 = vdwg.mxu0
  %1229 = vmatprep.subr.mxu0 0.0
  %1230 = vmatpush1.msra.mxu0 %v412
  %1231 = vmatprep.subr.mxu0 0.0
  %1232 = vmatpush1.msra.mxu0 %v413
  %1233 = vmatprep.subr.mxu0 0.0
  %1234 = vmatpush1.msra.mxu0 %v414
  %1235 = vmatprep.subr.mxu0 0.0
  %1236 = vmatpush1.msra.mxu0 %v415
  %1237 = vmatprep.subr.mxu0 0.0
  %1238 = vmatpush1.msra.mxu0 0.0
  %1239 = vmatprep.subr.mxu0 0.0
  %1240 = vmatpush1.msra.mxu0 0.0
  %1241 = vmatprep.subr.mxu0 0.0
  %1242 = vmatpush1.msra.mxu0 0.0
  %1243 = vmatprep.subr.mxu0 0.0
  %1244 = vmatpush1.msra.mxu0 0.0
  %1245 = vmatprep.subr.mxu0 0.0
  %1246 = vmatpush1.msra.mxu0 0.0
  %1247 = vmatprep.subr.mxu0 0.0
  %1248 = vmatpush1.msra.mxu0 0.0
  %1249 = vmatprep.subr.mxu0 0.0
  %1250 = vmatpush1.msra.mxu0 0.0
  %1251 = vmatprep.subr.mxu0 0.0
  %1252 = vmatpush1.msra.mxu0 0.0
  %1253 = vmatprep.subr.mxu0 0.0
  %1254 = vmatpush1.msra.mxu0 0.0
  %1255 = vmatprep.subr.mxu0 0.0
  %1256 = vmatpush1.msra.mxu0 0.0
  %1257 = vmatprep.subr.mxu0 0.0
  %1258 = vmatpush1.msra.mxu0 0.0
  %1259 = vmatprep.subr.mxu0 0.0
  %1260 = vmatpush1.msra.mxu0 0.0
  %1261 = vmatprep.subr.mxu0 0.0
  %1262 = vmatpush1.msra.mxu0 0.0
  %1263 = vmatprep.subr.mxu0 0.0
  %1264 = vmatpush1.msra.mxu0 0.0
  %1265 = vmatprep.subr.mxu0 0.0
  %1266 = vmatpush1.msra.mxu0 0.0
  %1267 = vmatprep.subr.mxu0 0.0
  %1268 = vmatpush1.msra.mxu0 0.0
  %1269 = vmatprep.subr.mxu0 0.0
  %1270 = vmatpush1.msra.mxu0 0.0
  %1271 = vmatprep.subr.mxu0 0.0
  %1272 = vmatpush1.msra.mxu0 0.0
  %1273 = vmatprep.subr.mxu0 0.0
  %1274 = vmatpush1.msra.mxu0 0.0
  %1275 = vmatprep.subr.mxu0 0.0
  %1276 = vmatpush1.msra.mxu0 0.0
  %1277 = vmatprep.subr.mxu0 0.0
  %1278 = vmatpush1.msra.mxu0 0.0
  %1279 = vmatprep.subr.mxu0 0.0
  %1280 = vmatpush1.msra.mxu0 0.0
  %1281 = vmatprep.subr.mxu0 0.0
  %1282 = vmatpush1.msra.mxu0 0.0
  %1283 = vmatprep.subr.mxu0 0.0
  %1284 = vmatpush1.msra.mxu0 0.0
  %1285 = vmatprep.subr.mxu0 0.0
  %1286 = vmatpush1.msra.mxu0 0.0
  %1287 = vmatprep.subr.mxu0 0.0
  %1288 = vmatpush1.msra.mxu0 0.0
  %1289 = vmatprep.subr.mxu0 0.0
  %1290 = vmatpush1.msra.mxu0 0.0
  %1291 = vmatprep.subr.mxu0 0.0
  %1292 = vmatpush1.msra.mxu0 0.0
  %1293 = vmatprep.mubr.f32.mxu0 0.0
  %1294 = vmatmul.mubr.f32.gmra.mrb[0].mxu0 %v1157
  %v1295 = vpop.f32.mrb[0].mxu0
  %v1296 = vadd.f32 0.0, %v1295
  %v1297 = vpop.f32.mrb[0].mxu0
  %1298 = vdwg.mxu0
  %1299 = vmatprep.subr.mxu0 0.0
  %1300 = vmatpush1.msra.mxu0 %v416
  %1301 = vmatprep.subr.mxu0 0.0
  %1302 = vmatpush1.msra.mxu0 %v417
  %1303 = vmatprep.subr.mxu0 0.0
  %1304 = vmatpush1.msra.mxu0 %v418
  %1305 = vmatprep.subr.mxu0 0.0
  %1306 = vmatpush1.msra.mxu0 %v419
  %1307 = vmatprep.subr.mxu0 0.0
  %1308 = vmatpush1.msra.mxu0 0.0
  %1309 = vmatprep.subr.mxu0 0.0
  %1310 = vmatpush1.msra.mxu0 0.0
  %1311 = vmatprep.subr.mxu0 0.0
  %1312 = vmatpush1.msra.mxu0 0.0
  %1313 = vmatprep.subr.mxu0 0.0
  %1314 = vmatpush1.msra.mxu0 0.0
  %1315 = vmatprep.subr.mxu0 0.0
  %1316 = vmatpush1.msra.mxu0 0.0
  %1317 = vmatprep.subr.mxu0 0.0
  %1318 = vmatpush1.msra.mxu0 0.0
  %1319 = vmatprep.subr.mxu0 0.0
  %1320 = vmatpush1.msra.mxu0 0.0
  %1321 = vmatprep.subr.mxu0 0.0
  %1322 = vmatpush1.msra.mxu0 0.0
  %1323 = vmatprep.subr.mxu0 0.0
  %1324 = vmatpush1.msra.mxu0 0.0
  %1325 = vmatprep.subr.mxu0 0.0
  %1326 = vmatpush1.msra.mxu0 0.0
  %1327 = vmatprep.subr.mxu0 0.0
  %1328 = vmatpush1.msra.mxu0 0.0
  %1329 = vmatprep.subr.mxu0 0.0
  %1330 = vmatpush1.msra.mxu0 0.0
  %1331 = vmatprep.subr.mxu0 0.0
  %1332 = vmatpush1.msra.mxu0 0.0
  %1333 = vmatprep.subr.mxu0 0.0
  %1334 = vmatpush1.msra.mxu0 0.0
  %1335 = vmatprep.subr.mxu0 0.0
  %1336 = vmatpush1.msra.mxu0 0.0
  %1337 = vmatprep.subr.mxu0 0.0
  %1338 = vmatpush1.msra.mxu0 0.0
  %1339 = vmatprep.subr.mxu0 0.0
  %1340 = vmatpush1.msra.mxu0 0.0
  %1341 = vmatprep.subr.mxu0 0.0
  %1342 = vmatpush1.msra.mxu0 0.0
  %1343 = vmatprep.subr.mxu0 0.0
  %1344 = vmatpush1.msra.mxu0 0.0
  %1345 = vmatprep.subr.mxu0 0.0
  %1346 = vmatpush1.msra.mxu0 0.0
  %1347 = vmatprep.subr.mxu0 0.0
  %1348 = vmatpush1.msra.mxu0 0.0
  %1349 = vmatprep.subr.mxu0 0.0
  %1350 = vmatpush1.msra.mxu0 0.0
  %1351 = vmatprep.subr.mxu0 0.0
  %1352 = vmatpush1.msra.mxu0 0.0
  %1353 = vmatprep.subr.mxu0 0.0
  %1354 = vmatpush1.msra.mxu0 0.0
  %1355 = vmatprep.subr.mxu0 0.0
  %1356 = vmatpush1.msra.mxu0 0.0
  %1357 = vmatprep.subr.mxu0 0.0
  %1358 = vmatpush1.msra.mxu0 0.0
  %1359 = vmatprep.subr.mxu0 0.0
  %1360 = vmatpush1.msra.mxu0 0.0
  %1361 = vmatprep.subr.mxu0 0.0
  %1362 = vmatpush1.msra.mxu0 0.0
  %1363 = vmatprep.mubr.f32.mxu0 0.0
  %1364 = vmatmul.mubr.f32.gmra.mrb[0].mxu0 %v1157
  %v1365 = vpop.f32.mrb[0].mxu0
  %v1366 = vadd.f32 %v425, %v1365
  %v1367 = vpop.f32.mrb[0].mxu0
  %1368 = vdwg.mxu0
  %v1369 = vadd.f32 %v1151, %v1226
  %v1370 = vxor.u32 %v1369, 2147483648
  %v1371 = vmul.f32 %v1370, 1.442695
  %v1372 = vpow.pop %v1371
  %v1373 = vadd.f32 %v1372, 1.0
  %v1374 = vrcp.pop %v1373
  %v1375 = vmul.f32 1.0, %v1374
  %v1376 = vadd.f32 %v1153, %v1296
  %v1377 = vxor.u32 %v1376, 2147483648
  %v1378 = vmul.f32 %v1377, 1.442695
  %v1379 = vpow.pop %v1378
  %v1380 = vadd.f32 %v1379, 1.0
  %v1381 = vrcp.pop %v1380
  %v1382 = vmul.f32 1.0, %v1381
  %v1383 = vmul.f32 %v1375, %v1366
  %v1384 = vadd.f32 %v1155, %v1383
  %v1385 = vtanh.pop %v1384
  %v1386 = vsub.f32 1.0, %v1382
  %v1387 = vmul.f32 %v1386, %v1385
  %v1388 = vmul.f32 %v1382, %v1147
  %v1389 = vadd.f32 %v1387, %v1388
  %s1390 = scalar_lea.vmem [#allocation5], 24
  %1391 = vst.msk [vmem:[%s1390] sm:$0xff] %vm64, %v1389
  %s1392 = scalar_lea.vmem [#allocation2], 32
  %v1393 = vld [vmem:[%s1392] sm:$0xff]
  %s1394 = scalar_lea.vmem [#allocation3], 32
  %v1395 = vld [vmem:[%s1394] sm:$0xff]
  %s1396 = scalar_lea.vmem [#allocation4], 32
  %v1397 = vld [vmem:[%s1396] sm:$0xff]
  %v1399 = vsel %vm64, %v1389, 0
  %1401 = vmatprep.subr.mxu0 0.0
  %1402 = vmatpush1.msra.mxu0 %v408
  %1403 = vmatprep.subr.mxu0 0.0
  %1404 = vmatpush1.msra.mxu0 %v409
  %1405 = vmatprep.subr.mxu0 0.0
  %1406 = vmatpush1.msra.mxu0 %v410
  %1407 = vmatprep.subr.mxu0 0.0
  %1408 = vmatpush1.msra.mxu0 %v411
  %1409 = vmatprep.subr.mxu0 0.0
  %1410 = vmatpush1.msra.mxu0 0.0
  %1411 = vmatprep.subr.mxu0 0.0
  %1412 = vmatpush1.msra.mxu0 0.0
  %1413 = vmatprep.subr.mxu0 0.0
  %1414 = vmatpush1.msra.mxu0 0.0
  %1415 = vmatprep.subr.mxu0 0.0
  %1416 = vmatpush1.msra.mxu0 0.0
  %1417 = vmatprep.subr.mxu0 0.0
  %1418 = vmatpush1.msra.mxu0 0.0
  %1419 = vmatprep.subr.mxu0 0.0
  %1420 = vmatpush1.msra.mxu0 0.0
  %1421 = vmatprep.subr.mxu0 0.0
  %1422 = vmatpush1.msra.mxu0 0.0
  %1423 = vmatprep.subr.mxu0 0.0
  %1424 = vmatpush1.msra.mxu0 0.0
  %1425 = vmatprep.subr.mxu0 0.0
  %1426 = vmatpush1.msra.mxu0 0.0
  %1427 = vmatprep.subr.mxu0 0.0
  %1428 = vmatpush1.msra.mxu0 0.0
  %1429 = vmatprep.subr.mxu0 0.0
  %1430 = vmatpush1.msra.mxu0 0.0
  %1431 = vmatprep.subr.mxu0 0.0
  %1432 = vmatpush1.msra.mxu0 0.0
  %1433 = vmatprep.subr.mxu0 0.0
  %1434 = vmatpush1.msra.mxu0 0.0
  %1435 = vmatprep.subr.mxu0 0.0
  %1436 = vmatpush1.msra.mxu0 0.0
  %1437 = vmatprep.subr.mxu0 0.0
  %1438 = vmatpush1.msra.mxu0 0.0
  %1439 = vmatprep.subr.mxu0 0.0
  %1440 = vmatpush1.msra.mxu0 0.0
  %1441 = vmatprep.subr.mxu0 0.0
  %1442 = vmatpush1.msra.mxu0 0.0
  %1443 = vmatprep.subr.mxu0 0.0
  %1444 = vmatpush1.msra.mxu0 0.0
  %1445 = vmatprep.subr.mxu0 0.0
  %1446 = vmatpush1.msra.mxu0 0.0
  %1447 = vmatprep.subr.mxu0 0.0
  %1448 = vmatpush1.msra.mxu0 0.0
  %1449 = vmatprep.subr.mxu0 0.0
  %1450 = vmatpush1.msra.mxu0 0.0
  %1451 = vmatprep.subr.mxu0 0.0
  %1452 = vmatpush1.msra.mxu0 0.0
  %1453 = vmatprep.subr.mxu0 0.0
  %1454 = vmatpush1.msra.mxu0 0.0
  %1455 = vmatprep.subr.mxu0 0.0
  %1456 = vmatpush1.msra.mxu0 0.0
  %1457 = vmatprep.subr.mxu0 0.0
  %1458 = vmatpush1.msra.mxu0 0.0
  %1459 = vmatprep.subr.mxu0 0.0
  %1460 = vmatpush1.msra.mxu0 0.0
  %1461 = vmatprep.subr.mxu0 0.0
  %1462 = vmatpush1.msra.mxu0 0.0
  %1463 = vmatprep.subr.mxu0 0.0
  %1464 = vmatpush1.msra.mxu0 0.0
  %1465 = vmatprep.mubr.f32.mxu0 0.0
  %1466 = vmatmul.mubr.f32.gmra.mrb[0].mxu0 %v1399
  %v1467 = vpop.f32.mrb[0].mxu0
  %v1468 = vadd.f32 0.0, %v1467
  %v1469 = vpop.f32.mrb[0].mxu0
  %1470 = vdwg.mxu0
  %1471 = vmatprep.subr.mxu0 0.0
  %1472 = vmatpush1.msra.mxu0 %v412
  %1473 = vmatprep.subr.mxu0 0.0
  %1474 = vmatpush1.msra.mxu0 %v413
  %1475 = vmatprep.subr.mxu0 0.0
  %1476 = vmatpush1.msra.mxu0 %v414
  %1477 = vmatprep.subr.mxu0 0.0
  %1478 = vmatpush1.msra.mxu0 %v415
  %1479 = vmatprep.subr.mxu0 0.0
  %1480 = vmatpush1.msra.mxu0 0.0
  %1481 = vmatprep.subr.mxu0 0.0
  %1482 = vmatpush1.msra.mxu0 0.0
  %1483 = vmatprep.subr.mxu0 0.0
  %1484 = vmatpush1.msra.mxu0 0.0
  %1485 = vmatprep.subr.mxu0 0.0
  %1486 = vmatpush1.msra.mxu0 0.0
  %1487 = vmatprep.subr.mxu0 0.0
  %1488 = vmatpush1.msra.mxu0 0.0
  %1489 = vmatprep.subr.mxu0 0.0
  %1490 = vmatpush1.msra.mxu0 0.0
  %1491 = vmatprep.subr.mxu0 0.0
  %1492 = vmatpush1.msra.mxu0 0.0
  %1493 = vmatprep.subr.mxu0 0.0
  %1494 = vmatpush1.msra.mxu0 0.0
  %1495 = vmatprep.subr.mxu0 0.0
  %1496 = vmatpush1.msra.mxu0 0.0
  %1497 = vmatprep.subr.mxu0 0.0
  %1498 = vmatpush1.msra.mxu0 0.0
  %1499 = vmatprep.subr.mxu0 0.0
  %1500 = vmatpush1.msra.mxu0 0.0
  %1501 = vmatprep.subr.mxu0 0.0
  %1502 = vmatpush1.msra.mxu0 0.0
  %1503 = vmatprep.subr.mxu0 0.0
  %1504 = vmatpush1.msra.mxu0 0.0
  %1505 = vmatprep.subr.mxu0 0.0
  %1506 = vmatpush1.msra.mxu0 0.0
  %1507 = vmatprep.subr.mxu0 0.0
  %1508 = vmatpush1.msra.mxu0 0.0
  %1509 = vmatprep.subr.mxu0 0.0
  %1510 = vmatpush1.msra.mxu0 0.0
  %1511 = vmatprep.subr.mxu0 0.0
  %1512 = vmatpush1.msra.mxu0 0.0
  %1513 = vmatprep.subr.mxu0 0.0
  %1514 = vmatpush1.msra.mxu0 0.0
  %1515 = vmatprep.subr.mxu0 0.0
  %1516 = vmatpush1.msra.mxu0 0.0
  %1517 = vmatprep.subr.mxu0 0.0
  %1518 = vmatpush1.msra.mxu0 0.0
  %1519 = vmatprep.subr.mxu0 0.0
  %1520 = vmatpush1.msra.mxu0 0.0
  %1521 = vmatprep.subr.mxu0 0.0
  %1522 = vmatpush1.msra.mxu0 0.0
  %1523 = vmatprep.subr.mxu0 0.0
  %1524 = vmatpush1.msra.mxu0 0.0
  %1525 = vmatprep.subr.mxu0 0.0
  %1526 = vmatpush1.msra.mxu0 0.0
  %1527 = vmatprep.subr.mxu0 0.0
  %1528 = vmatpush1.msra.mxu0 0.0
  %1529 = vmatprep.subr.mxu0 0.0
  %1530 = vmatpush1.msra.mxu0 0.0
  %1531 = vmatprep.subr.mxu0 0.0
  %1532 = vmatpush1.msra.mxu0 0.0
  %1533 = vmatprep.subr.mxu0 0.0
  %1534 = vmatpush1.msra.mxu0 0.0
  %1535 = vmatprep.mubr.f32.mxu0 0.0
  %1536 = vmatmul.mubr.f32.gmra.mrb[0].mxu0 %v1399
  %v1537 = vpop.f32.mrb[0].mxu0
  %v1538 = vadd.f32 0.0, %v1537
  %v1539 = vpop.f32.mrb[0].mxu0
  %1540 = vdwg.mxu0
  %1541 = vmatprep.subr.mxu0 0.0
  %1542 = vmatpush1.msra.mxu0 %v416
  %1543 = vmatprep.subr.mxu0 0.0
  %1544 = vmatpush1.msra.mxu0 %v417
  %1545 = vmatprep.subr.mxu0 0.0
  %1546 = vmatpush1.msra.mxu0 %v418
  %1547 = vmatprep.subr.mxu0 0.0
  %1548 = vmatpush1.msra.mxu0 %v419
  %1549 = vmatprep.subr.mxu0 0.0
  %1550 = vmatpush1.msra.mxu0 0.0
  %1551 = vmatprep.subr.mxu0 0.0
  %1552 = vmatpush1.msra.mxu0 0.0
  %1553 = vmatprep.subr.mxu0 0.0
  %1554 = vmatpush1.msra.mxu0 0.0
  %1555 = vmatprep.subr.mxu0 0.0
  %1556 = vmatpush1.msra.mxu0 0.0
  %1557 = vmatprep.subr.mxu0 0.0
  %1558 = vmatpush1.msra.mxu0 0.0
  %1559 = vmatprep.subr.mxu0 0.0
  %1560 = vmatpush1.msra.mxu0 0.0
  %1561 = vmatprep.subr.mxu0 0.0
  %1562 = vmatpush1.msra.mxu0 0.0
  %1563 = vmatprep.subr.mxu0 0.0
  %1564 = vmatpush1.msra.mxu0 0.0
  %1565 = vmatprep.subr.mxu0 0.0
  %1566 = vmatpush1.msra.mxu0 0.0
  %1567 = vmatprep.subr.mxu0 0.0
  %1568 = vmatpush1.msra.mxu0 0.0
  %1569 = vmatprep.subr.mxu0 0.0
  %1570 = vmatpush1.msra.mxu0 0.0
  %1571 = vmatprep.subr.mxu0 0.0
  %1572 = vmatpush1.msra.mxu0 0.0
  %1573 = vmatprep.subr.mxu0 0.0
  %1574 = vmatpush1.msra.mxu0 0.0
  %1575 = vmatprep.subr.mxu0 0.0
  %1576 = vmatpush1.msra.mxu0 0.0
  %1577 = vmatprep.subr.mxu0 0.0
  %1578 = vmatpush1.msra.mxu0 0.0
  %1579 = vmatprep.subr.mxu0 0.0
  %1580 = vmatpush1.msra.mxu0 0.0
  %1581 = vmatprep.subr.mxu0 0.0
  %1582 = vmatpush1.msra.mxu0 0.0
  %1583 = vmatprep.subr.mxu0 0.0
  %1584 = vmatpush1.msra.mxu0 0.0
  %1585 = vmatprep.subr.mxu0 0.0
  %1586 = vmatpush1.msra.mxu0 0.0
  %1587 = vmatprep.subr.mxu0 0.0
  %1588 = vmatpush1.msra.mxu0 0.0
  %1589 = vmatprep.subr.mxu0 0.0
  %1590 = vmatpush1.msra.mxu0 0.0
  %1591 = vmatprep.subr.mxu0 0.0
  %1592 = vmatpush1.msra.mxu0 0.0
  %1593 = vmatprep.subr.mxu0 0.0
  %1594 = vmatpush1.msra.mxu0 0.0
  %1595 = vmatprep.subr.mxu0 0.0
  %1596 = vmatpush1.msra.mxu0 0.0
  %1597 = vmatprep.subr.mxu0 0.0
  %1598 = vmatpush1.msra.mxu0 0.0
  %1599 = vmatprep.subr.mxu0 0.0
  %1600 = vmatpush1.msra.mxu0 0.0
  %1601 = vmatprep.subr.mxu0 0.0
  %1602 = vmatpush1.msra.mxu0 0.0
  %1603 = vmatprep.subr.mxu0 0.0
  %1604 = vmatpush1.msra.mxu0 0.0
  %1605 = vmatprep.mubr.f32.mxu0 0.0
  %1606 = vmatmul.mubr.f32.gmra.mrb[0].mxu0 %v1399
  %v1607 = vpop.f32.mrb[0].mxu0
  %v1608 = vadd.f32 %v425, %v1607
  %v1609 = vpop.f32.mrb[0].mxu0
  %1610 = vdwg.mxu0
  %v1611 = vadd.f32 %v1393, %v1468
  %v1612 = vxor.u32 %v1611, 2147483648
  %v1613 = vmul.f32 %v1612, 1.442695
  %v1614 = vpow.pop %v1613
  %v1615 = vadd.f32 %v1614, 1.0
  %v1616 = vrcp.pop %v1615
  %v1617 = vmul.f32 1.0, %v1616
  %v1618 = vadd.f32 %v1395, %v1538
  %v1619 = vxor.u32 %v1618, 2147483648
  %v1620 = vmul.f32 %v1619, 1.442695
  %v1621 = vpow.pop %v1620
  %v1622 = vadd.f32 %v1621, 1.0
  %v1623 = vrcp.pop %v1622
  %v1624 = vmul.f32 1.0, %v1623
  %v1625 = vmul.f32 %v1617, %v1608
  %v1626 = vadd.f32 %v1397, %v1625
  %v1627 = vtanh.pop %v1626
  %v1628 = vsub.f32 1.0, %v1624
  %v1629 = vmul.f32 %v1628, %v1627
  %v1630 = vmul.f32 %v1624, %v1389
  %v1631 = vadd.f32 %v1629, %v1630
  %s1632 = scalar_lea.vmem [#allocation5], 32
  %1633 = vst.msk [vmem:[%s1632] sm:$0xff] %vm64, %v1631
  %s1634 = scalar_lea.vmem [#allocation2], 40
  %v1635 = vld [vmem:[%s1634] sm:$0xff]
  %s1636 = scalar_lea.vmem [#allocation3], 40
  %v1637 = vld [vmem:[%s1636] sm:$0xff]
  %s1638 = scalar_lea.vmem [#allocation4], 40
  %v1639 = vld [vmem:[%s1638] sm:$0xff]
  %v1641 = vsel %vm64, %v1631, 0
  %1643 = vmatprep.subr.mxu0 0.0
  %1644 = vmatpush1.msra.mxu0 %v408
  %1645 = vmatprep.subr.mxu0 0.0
  %1646 = vmatpush1.msra.mxu0 %v409
  %1647 = vmatprep.subr.mxu0 0.0
  %1648 = vmatpush1.msra.mxu0 %v410
  %1649 = vmatprep.subr.mxu0 0.0
  %1650 = vmatpush1.msra.mxu0 %v411
  %1651 = vmatprep.subr.mxu0 0.0
  %1652 = vmatpush1.msra.mxu0 0.0
  %1653 = vmatprep.subr.mxu0 0.0
  %1654 = vmatpush1.msra.mxu0 0.0
  %1655 = vmatprep.subr.mxu0 0.0
  %1656 = vmatpush1.msra.mxu0 0.0
  %1657 = vmatprep.subr.mxu0 0.0
  %1658 = vmatpush1.msra.mxu0 0.0
  %1659 = vmatprep.subr.mxu0 0.0
  %1660 = vmatpush1.msra.mxu0 0.0
  %1661 = vmatprep.subr.mxu0 0.0
  %1662 = vmatpush1.msra.mxu0 0.0
  %1663 = vmatprep.subr.mxu0 0.0
  %1664 = vmatpush1.msra.mxu0 0.0
  %1665 = vmatprep.subr.mxu0 0.0
  %1666 = vmatpush1.msra.mxu0 0.0
  %1667 = vmatprep.subr.mxu0 0.0
  %1668 = vmatpush1.msra.mxu0 0.0
  %1669 = vmatprep.subr.mxu0 0.0
  %1670 = vmatpush1.msra.mxu0 0.0
  %1671 = vmatprep.subr.mxu0 0.0
  %1672 = vmatpush1.msra.mxu0 0.0
  %1673 = vmatprep.subr.mxu0 0.0
  %1674 = vmatpush1.msra.mxu0 0.0
  %1675 = vmatprep.subr.mxu0 0.0
  %1676 = vmatpush1.msra.mxu0 0.0
  %1677 = vmatprep.subr.mxu0 0.0
  %1678 = vmatpush1.msra.mxu0 0.0
  %1679 = vmatprep.subr.mxu0 0.0
  %1680 = vmatpush1.msra.mxu0 0.0
  %1681 = vmatprep.subr.mxu0 0.0
  %1682 = vmatpush1.msra.mxu0 0.0
  %1683 = vmatprep.subr.mxu0 0.0
  %1684 = vmatpush1.msra.mxu0 0.0
  %1685 = vmatprep.subr.mxu0 0.0
  %1686 = vmatpush1.msra.mxu0 0.0
  %1687 = vmatprep.subr.mxu0 0.0
  %1688 = vmatpush1.msra.mxu0 0.0
  %1689 = vmatprep.subr.mxu0 0.0
  %1690 = vmatpush1.msra.mxu0 0.0
  %1691 = vmatprep.subr.mxu0 0.0
  %1692 = vmatpush1.msra.mxu0 0.0
  %1693 = vmatprep.subr.mxu0 0.0
  %1694 = vmatpush1.msra.mxu0 0.0
  %1695 = vmatprep.subr.mxu0 0.0
  %1696 = vmatpush1.msra.mxu0 0.0
  %1697 = vmatprep.subr.mxu0 0.0
  %1698 = vmatpush1.msra.mxu0 0.0
  %1699 = vmatprep.subr.mxu0 0.0
  %1700 = vmatpush1.msra.mxu0 0.0
  %1701 = vmatprep.subr.mxu0 0.0
  %1702 = vmatpush1.msra.mxu0 0.0
  %1703 = vmatprep.subr.mxu0 0.0
  %1704 = vmatpush1.msra.mxu0 0.0
  %1705 = vmatprep.subr.mxu0 0.0
  %1706 = vmatpush1.msra.mxu0 0.0
  %1707 = vmatprep.mubr.f32.mxu0 0.0
  %1708 = vmatmul.mubr.f32.gmra.mrb[0].mxu0 %v1641
  %v1709 = vpop.f32.mrb[0].mxu0
  %v1710 = vadd.f32 0.0, %v1709
  %v1711 = vpop.f32.mrb[0].mxu0
  %1712 = vdwg.mxu0
  %1713 = vmatprep.subr.mxu0 0.0
  %1714 = vmatpush1.msra.mxu0 %v412
  %1715 = vmatprep.subr.mxu0 0.0
  %1716 = vmatpush1.msra.mxu0 %v413
  %1717 = vmatprep.subr.mxu0 0.0
  %1718 = vmatpush1.msra.mxu0 %v414
  %1719 = vmatprep.subr.mxu0 0.0
  %1720 = vmatpush1.msra.mxu0 %v415
  %1721 = vmatprep.subr.mxu0 0.0
  %1722 = vmatpush1.msra.mxu0 0.0
  %1723 = vmatprep.subr.mxu0 0.0
  %1724 = vmatpush1.msra.mxu0 0.0
  %1725 = vmatprep.subr.mxu0 0.0
  %1726 = vmatpush1.msra.mxu0 0.0
  %1727 = vmatprep.subr.mxu0 0.0
  %1728 = vmatpush1.msra.mxu0 0.0
  %1729 = vmatprep.subr.mxu0 0.0
  %1730 = vmatpush1.msra.mxu0 0.0
  %1731 = vmatprep.subr.mxu0 0.0
  %1732 = vmatpush1.msra.mxu0 0.0
  %1733 = vmatprep.subr.mxu0 0.0
  %1734 = vmatpush1.msra.mxu0 0.0
  %1735 = vmatprep.subr.mxu0 0.0
  %1736 = vmatpush1.msra.mxu0 0.0
  %1737 = vmatprep.subr.mxu0 0.0
  %1738 = vmatpush1.msra.mxu0 0.0
  %1739 = vmatprep.subr.mxu0 0.0
  %1740 = vmatpush1.msra.mxu0 0.0
  %1741 = vmatprep.subr.mxu0 0.0
  %1742 = vmatpush1.msra.mxu0 0.0
  %1743 = vmatprep.subr.mxu0 0.0
  %1744 = vmatpush1.msra.mxu0 0.0
  %1745 = vmatprep.subr.mxu0 0.0
  %1746 = vmatpush1.msra.mxu0 0.0
  %1747 = vmatprep.subr.mxu0 0.0
  %1748 = vmatpush1.msra.mxu0 0.0
  %1749 = vmatprep.subr.mxu0 0.0
  %1750 = vmatpush1.msra.mxu0 0.0
  %1751 = vmatprep.subr.mxu0 0.0
  %1752 = vmatpush1.msra.mxu0 0.0
  %1753 = vmatprep.subr.mxu0 0.0
  %1754 = vmatpush1.msra.mxu0 0.0
  %1755 = vmatprep.subr.mxu0 0.0
  %1756 = vmatpush1.msra.mxu0 0.0
  %1757 = vmatprep.subr.mxu0 0.0
  %1758 = vmatpush1.msra.mxu0 0.0
  %1759 = vmatprep.subr.mxu0 0.0
  %1760 = vmatpush1.msra.mxu0 0.0
  %1761 = vmatprep.subr.mxu0 0.0
  %1762 = vmatpush1.msra.mxu0 0.0
  %1763 = vmatprep.subr.mxu0 0.0
  %1764 = vmatpush1.msra.mxu0 0.0
  %1765 = vmatprep.subr.mxu0 0.0
  %1766 = vmatpush1.msra.mxu0 0.0
  %1767 = vmatprep.subr.mxu0 0.0
  %1768 = vmatpush1.msra.mxu0 0.0
  %1769 = vmatprep.subr.mxu0 0.0
  %1770 = vmatpush1.msra.mxu0 0.0
  %1771 = vmatprep.subr.mxu0 0.0
  %1772 = vmatpush1.msra.mxu0 0.0
  %1773 = vmatprep.subr.mxu0 0.0
  %1774 = vmatpush1.msra.mxu0 0.0
  %1775 = vmatprep.subr.mxu0 0.0
  %1776 = vmatpush1.msra.mxu0 0.0
  %1777 = vmatprep.mubr.f32.mxu0 0.0
  %1778 = vmatmul.mubr.f32.gmra.mrb[0].mxu0 %v1641
  %v1779 = vpop.f32.mrb[0].mxu0
  %v1780 = vadd.f32 0.0, %v1779
  %v1781 = vpop.f32.mrb[0].mxu0
  %1782 = vdwg.mxu0
  %1783 = vmatprep.subr.mxu0 0.0
  %1784 = vmatpush1.msra.mxu0 %v416
  %1785 = vmatprep.subr.mxu0 0.0
  %1786 = vmatpush1.msra.mxu0 %v417
  %1787 = vmatprep.subr.mxu0 0.0
  %1788 = vmatpush1.msra.mxu0 %v418
  %1789 = vmatprep.subr.mxu0 0.0
  %1790 = vmatpush1.msra.mxu0 %v419
  %1791 = vmatprep.subr.mxu0 0.0
  %1792 = vmatpush1.msra.mxu0 0.0
  %1793 = vmatprep.subr.mxu0 0.0
  %1794 = vmatpush1.msra.mxu0 0.0
  %1795 = vmatprep.subr.mxu0 0.0
  %1796 = vmatpush1.msra.mxu0 0.0
  %1797 = vmatprep.subr.mxu0 0.0
  %1798 = vmatpush1.msra.mxu0 0.0
  %1799 = vmatprep.subr.mxu0 0.0
  %1800 = vmatpush1.msra.mxu0 0.0
  %1801 = vmatprep.subr.mxu0 0.0
  %1802 = vmatpush1.msra.mxu0 0.0
  %1803 = vmatprep.subr.mxu0 0.0
  %1804 = vmatpush1.msra.mxu0 0.0
  %1805 = vmatprep.subr.mxu0 0.0
  %1806 = vmatpush1.msra.mxu0 0.0
  %1807 = vmatprep.subr.mxu0 0.0
  %1808 = vmatpush1.msra.mxu0 0.0
  %1809 = vmatprep.subr.mxu0 0.0
  %1810 = vmatpush1.msra.mxu0 0.0
  %1811 = vmatprep.subr.mxu0 0.0
  %1812 = vmatpush1.msra.mxu0 0.0
  %1813 = vmatprep.subr.mxu0 0.0
  %1814 = vmatpush1.msra.mxu0 0.0
  %1815 = vmatprep.subr.mxu0 0.0
  %1816 = vmatpush1.msra.mxu0 0.0
  %1817 = vmatprep.subr.mxu0 0.0
  %1818 = vmatpush1.msra.mxu0 0.0
  %1819 = vmatprep.subr.mxu0 0.0
  %1820 = vmatpush1.msra.mxu0 0.0
  %1821 = vmatprep.subr.mxu0 0.0
  %1822 = vmatpush1.msra.mxu0 0.0
  %1823 = vmatprep.subr.mxu0 0.0
  %1824 = vmatpush1.msra.mxu0 0.0
  %1825 = vmatprep.subr.mxu0 0.0
  %1826 = vmatpush1.msra.mxu0 0.0
  %1827 = vmatprep.subr.mxu0 0.0
  %1828 = vmatpush1.msra.mxu0 0.0
  %1829 = vmatprep.subr.mxu0 0.0
  %1830 = vmatpush1.msra.mxu0 0.0
  %1831 = vmatprep.subr.mxu0 0.0
  %1832 = vmatpush1.msra.mxu0 0.0
  %1833 = vmatprep.subr.mxu0 0.0
  %1834 = vmatpush1.msra.mxu0 0.0
  %1835 = vmatprep.subr.mxu0 0.0
  %1836 = vmatpush1.msra.mxu0 0.0
  %1837 = vmatprep.subr.mxu0 0.0
  %1838 = vmatpush1.msra.mxu0 0.0
  %1839 = vmatprep.subr.mxu0 0.0
  %1840 = vmatpush1.msra.mxu0 0.0
  %1841 = vmatprep.subr.mxu0 0.0
  %1842 = vmatpush1.msra.mxu0 0.0
  %1843 = vmatprep.subr.mxu0 0.0
  %1844 = vmatpush1.msra.mxu0 0.0
  %1845 = vmatprep.subr.mxu0 0.0
  %1846 = vmatpush1.msra.mxu0 0.0
  %1847 = vmatprep.mubr.f32.mxu0 0.0
  %1848 = vmatmul.mubr.f32.gmra.mrb[0].mxu0 %v1641
  %v1849 = vpop.f32.mrb[0].mxu0
  %v1850 = vadd.f32 %v425, %v1849
  %v1851 = vpop.f32.mrb[0].mxu0
  %1852 = vdwg.mxu0
  %v1853 = vadd.f32 %v1635, %v1710
  %v1854 = vxor.u32 %v1853, 2147483648
  %v1855 = vmul.f32 %v1854, 1.442695
  %v1856 = vpow.pop %v1855
  %v1857 = vadd.f32 %v1856, 1.0
  %v1858 = vrcp.pop %v1857
  %v1859 = vmul.f32 1.0, %v1858
  %v1860 = vadd.f32 %v1637, %v1780
  %v1861 = vxor.u32 %v1860, 2147483648
  %v1862 = vmul.f32 %v1861, 1.442695
  %v1863 = vpow.pop %v1862
  %v1864 = vadd.f32 %v1863, 1.0
  %v1865 = vrcp.pop %v1864
  %v1866 = vmul.f32 1.0, %v1865
  %v1867 = vmul.f32 %v1859, %v1850
  %v1868 = vadd.f32 %v1639, %v1867
  %v1869 = vtanh.pop %v1868
  %v1870 = vsub.f32 1.0, %v1866
  %v1871 = vmul.f32 %v1870, %v1869
  %v1872 = vmul.f32 %v1866, %v1631
  %v1873 = vadd.f32 %v1871, %v1872
  %s1874 = scalar_lea.vmem [#allocation5], 40
  %1875 = vst.msk [vmem:[%s1874] sm:$0xff] %vm64, %v1873
  %v1876 = vld [vmem:[#allocation5] sm:$0xff]
  %v1877 = vld [vmem:[#allocation5 + $0x8] sm:$0xff]
  %v1878 = vld [vmem:[#allocation5 + $0x10] sm:$0xff]
  %v1879 = vld [vmem:[#allocation5 + $0x18] sm:$0xff]
  %v1880 = vld [vmem:[#allocation5 + $0x20] sm:$0xff]
  %v1881 = vld [vmem:[#allocation5 + $0x28] sm:$0xff]
  %v1882 = vld [vmem:[%s12] sm:$0xff]
  %v1883 = vld [vmem:[%s12 + $0x8] sm:$0xff]
  %v1884 = vld [vmem:[%s12 + $0x10] sm:$0xff]
  %v1885 = vld [vmem:[%s12 + $0x18] sm:$0xff]
  %v1886 = vld [vmem:[%s13] sm:$0x1]
  %v1888 = vlaneseq
  %v1889 = vshrl.u32 %v1888, 7
  %v1890 = vsub.s32 0, %v1889
  %v1891 = vrot.slane %v1886, %v1890
  %v1894 = vsel %vm64, %v1876, 0
  %v1897 = vsel %vm64, %v1877, 0
  %v1900 = vsel %vm64, %v1878, 0
  %v1903 = vsel %vm64, %v1879, 0
  %v1906 = vsel %vm64, %v1880, 0
  %v1909 = vsel %vm64, %v1881, 0
  %1911 = vmatprep.subr.mxu0 0.0
  %1912 = vmatpush1.msra.mxu0 %v1882
  %1913 = vmatprep.subr.mxu0 0.0
  %1914 = vmatpush1.msra.mxu0 %v1883
  %1915 = vmatprep.subr.mxu0 0.0
  %1916 = vmatpush1.msra.mxu0 %v1884
  %1917 = vmatprep.subr.mxu0 0.0
  %1918 = vmatpush1.msra.mxu0 %v1885
  %1919 = vmatprep.subr.mxu0 0.0
  %1920 = vmatpush1.msra.mxu0 0.0
  %1921 = vmatprep.subr.mxu0 0.0
  %1922 = vmatpush1.msra.mxu0 0.0
  %1923 = vmatprep.subr.mxu0 0.0
  %1924 = vmatpush1.msra.mxu0 0.0
  %1925 = vmatprep.subr.mxu0 0.0
  %1926 = vmatpush1.msra.mxu0 0.0
  %1927 = vmatprep.subr.mxu0 0.0
  %1928 = vmatpush1.msra.mxu0 0.0
  %1929 = vmatprep.subr.mxu0 0.0
  %1930 = vmatpush1.msra.mxu0 0.0
  %1931 = vmatprep.subr.mxu0 0.0
  %1932 = vmatpush1.msra.mxu0 0.0
  %1933 = vmatprep.subr.mxu0 0.0
  %1934 = vmatpush1.msra.mxu0 0.0
  %1935 = vmatprep.subr.mxu0 0.0
  %1936 = vmatpush1.msra.mxu0 0.0
  %1937 = vmatprep.subr.mxu0 0.0
  %1938 = vmatpush1.msra.mxu0 0.0
  %1939 = vmatprep.subr.mxu0 0.0
  %1940 = vmatpush1.msra.mxu0 0.0
  %1941 = vmatprep.subr.mxu0 0.0
  %1942 = vmatpush1.msra.mxu0 0.0
  %1943 = vmatprep.subr.mxu0 0.0
  %1944 = vmatpush1.msra.mxu0 0.0
  %1945 = vmatprep.subr.mxu0 0.0
  %1946 = vmatpush1.msra.mxu0 0.0
  %1947 = vmatprep.subr.mxu0 0.0
  %1948 = vmatpush1.msra.mxu0 0.0
  %1949 = vmatprep.subr.mxu0 0.0
  %1950 = vmatpush1.msra.mxu0 0.0
  %1951 = vmatprep.subr.mxu0 0.0
  %1952 = vmatpush1.msra.mxu0 0.0
  %1953 = vmatprep.subr.mxu0 0.0
  %1954 = vmatpush1.msra.mxu0 0.0
  %1955 = vmatprep.subr.mxu0 0.0
  %1956 = vmatpush1.msra.mxu0 0.0
  %1957 = vmatprep.subr.mxu0 0.0
  %1958 = vmatpush1.msra.mxu0 0.0
  %1959 = vmatprep.subr.mxu0 0.0
  %1960 = vmatpush1.msra.mxu0 0.0
  %1961 = vmatprep.subr.mxu0 0.0
  %1962 = vmatpush1.msra.mxu0 0.0
  %1963 = vmatprep.subr.mxu0 0.0
  %1964 = vmatpush1.msra.mxu0 0.0
  %1965 = vmatprep.subr.mxu0 0.0
  %1966 = vmatpush1.msra.mxu0 0.0
  %1967 = vmatprep.subr.mxu0 0.0
  %1968 = vmatpush1.msra.mxu0 0.0
  %1969 = vmatprep.subr.mxu0 0.0
  %1970 = vmatpush1.msra.mxu0 0.0
  %1971 = vmatprep.subr.mxu0 0.0
  %1972 = vmatpush1.msra.mxu0 0.0
  %1973 = vmatprep.subr.mxu0 0.0
  %1974 = vmatpush1.msra.mxu0 0.0
  %1975 = vmatprep.mubr.f32.mxu0 0.0
  %1976 = vmatmul.mubr.f32.gmra.mrb[0].mxu0 %v1894
  %v1977 = vpop.f32.mrb[0].mxu0
  %v1978 = vadd.f32 %v1891, %v1977
  %v1979 = vpop.f32.mrb[0].mxu0
  %1980 = vmatprep.mubr.f32.mxu0 0.0
  %1981 = vmatmul.mubr.f32.gmra.mrb[0].mxu0 %v1897
  %v1982 = vpop.f32.mrb[0].mxu0
  %v1983 = vadd.f32 %v1891, %v1982
  %v1984 = vpop.f32.mrb[0].mxu0
  %1985 = vmatprep.mubr.f32.mxu0 0.0
  %1986 = vmatmul.mubr.f32.gmra.mrb[0].mxu0 %v1900
  %v1987 = vpop.f32.mrb[0].mxu0
  %v1988 = vadd.f32 %v1891, %v1987
  %v1989 = vpop.f32.mrb[0].mxu0
  %1990 = vmatprep.mubr.f32.mxu0 0.0
  %1991 = vmatmul.mubr.f32.gmra.mrb[0].mxu0 %v1903
  %v1992 = vpop.f32.mrb[0].mxu0
  %v1993 = vadd.f32 %v1891, %v1992
  %v1994 = vpop.f32.mrb[0].mxu0
  %1995 = vmatprep.mubr.f32.mxu0 0.0
  %1996 = vmatmul.mubr.f32.gmra.mrb[0].mxu0 %v1906
  %v1997 = vpop.f32.mrb[0].mxu0
  %v1998 = vadd.f32 %v1891, %v1997
  %v1999 = vpop.f32.mrb[0].mxu0
  %2000 = vmatprep.mubr.f32.mxu0 0.0
  %2001 = vmatmul.mubr.f32.gmra.mrb[0].mxu0 %v1909
  %v2002 = vpop.f32.mrb[0].mxu0
  %v2003 = vadd.f32 %v1891, %v2002
  %v2004 = vpop.f32.mrb[0].mxu0
  %2005 = vdwg.mxu0
  %vm2006 = vcmask 130048
  %v2007 = vsel %vm2006, %v1978, -inf
  %2008 = vmax.xlane.f32.xlu0 %v2007
  %v2009 = vpop.xlane.xlu0 %2008
  %v2010 = vsel %vm2006, %v1983, -inf
  %2011 = vmax.xlane.f32.xlu0 %v2010
  %v2012 = vpop.xlane.xlu0 %2011
  %v2013 = vsel %vm2006, %v1988, -inf
  %2014 = vmax.xlane.f32.xlu0 %v2013
  %v2015 = vpop.xlane.xlu0 %2014
  %v2016 = vsel %vm2006, %v1993, -inf
  %2017 = vmax.xlane.f32.xlu0 %v2016
  %v2018 = vpop.xlane.xlu0 %2017
  %v2019 = vsel %vm2006, %v1998, -inf
  %2020 = vmax.xlane.f32.xlu0 %v2019
  %v2021 = vpop.xlane.xlu0 %2020
  %v2022 = vsel %vm2006, %v2003, -inf
  %2023 = vmax.xlane.f32.xlu0 %v2022
  %v2024 = vpop.xlane.xlu0 %2023
  %v2025 = vsub.f32 %v1978, %v2009
  %v2026 = vsub.f32 %v1983, %v2012
  %v2027 = vsub.f32 %v1988, %v2015
  %v2028 = vsub.f32 %v1993, %v2018
  %v2029 = vsub.f32 %v1998, %v2021
  %v2030 = vsub.f32 %v2003, %v2024
  %v2031 = vmul.f32 %v2025, 1.442695
  %v2032 = vpow.pop %v2031
  %v2033 = vmul.f32 %v2026, 1.442695
  %v2034 = vpow.pop %v2033
  %v2035 = vmul.f32 %v2027, 1.442695
  %v2036 = vpow.pop %v2035
  %v2037 = vmul.f32 %v2028, 1.442695
  %v2038 = vpow.pop %v2037
  %v2039 = vmul.f32 %v2029, 1.442695
  %v2040 = vpow.pop %v2039
  %v2041 = vmul.f32 %v2030, 1.442695
  %v2042 = vpow.pop %v2041
  %v2043 = vsel %vm2006, %v2032, 0.0
  %2044 = vadd.xlane.f32.xlu0 %v2043
  %v2045 = vpop.xlane.xlu0 %2044
  %v2046 = vsel %vm2006, %v2034, 0.0
  %2047 = vadd.xlane.f32.xlu0 %v2046
  %v2048 = vpop.xlane.xlu0 %2047
  %v2049 = vsel %vm2006, %v2036, 0.0
  %2050 = vadd.xlane.f32.xlu0 %v2049
  %v2051 = vpop.xlane.xlu0 %2050
  %v2052 = vsel %vm2006, %v2038, 0.0
  %2053 = vadd.xlane.f32.xlu0 %v2052
  %v2054 = vpop.xlane.xlu0 %2053
  %v2055 = vsel %vm2006, %v2040, 0.0
  %2056 = vadd.xlane.f32.xlu0 %v2055
  %v2057 = vpop.xlane.xlu0 %2056
  %v2058 = vsel %vm2006, %v2042, 0.0
  %2059 = vadd.xlane.f32.xlu0 %v2058
  %v2060 = vpop.xlane.xlu0 %2059
  %v2061 = vlog2.pop %v2045
  %v2062 = vmul.f32 %v2061, 0.6931472
  %v2063 = vlog2.pop %v2048
  %v2064 = vmul.f32 %v2063, 0.6931472
  %v2065 = vlog2.pop %v2051
  %v2066 = vmul.f32 %v2065, 0.6931472
  %v2067 = vlog2.pop %v2054
  %v2068 = vmul.f32 %v2067, 0.6931472
  %v2069 = vlog2.pop %v2057
  %v2070 = vmul.f32 %v2069, 0.6931472
  %v2071 = vlog2.pop %v2060
  %v2072 = vmul.f32 %v2071, 0.6931472
  %v2073 = vadd.f32 %v2062, %v2009
  %v2074 = vadd.f32 %v2064, %v2012
  %v2075 = vadd.f32 %v2066, %v2015
  %v2076 = vadd.f32 %v2068, %v2018
  %v2077 = vadd.f32 %v2070, %v2021
  %v2078 = vadd.f32 %v2072, %v2024
  %v2079 = vsub.f32 %v1978, %v2073
  %v2080 = vsub.f32 %v1983, %v2074
  %v2081 = vsub.f32 %v1988, %v2075
  %v2082 = vsub.f32 %v1993, %v2076
  %v2083 = vsub.f32 %v1998, %v2077
  %v2084 = vsub.f32 %v2003, %v2078
  %2085 = vst.msk [vmem:[%s14] sm:$0xff] %vm2006, %v2079
  %2086 = vst.msk [vmem:[%s14 + $0x8] sm:$0xff] %vm2006, %v2080
  %2087 = vst.msk [vmem:[%s14 + $0x10] sm:$0xff] %vm2006, %v2081
  %2088 = vst.msk [vmem:[%s14 + $0x18] sm:$0xff] %vm2006, %v2082
  %2089 = vst.msk [vmem:[%s14 + $0x20] sm:$0xff] %vm2006, %v2083
  %2090 = vst.msk [vmem:[%s14 + $0x28] sm:$0xff] %vm2006, %v2084
  // Predicated region
  $region58: #{e2e_forward.3} parent=0 // pred_check
    _
  $region59: #{e2e_forward.3} parent=0 // pred_check_branch
    %2092 = sbr.rel (0) target = $region61
  $region60: #{e2e_forward.3} parent=0 // pred_region
    _
  $region61: #{e2e_forward.3} parent=0 // pred_fallthru
    _
  // Predicated region
  $region62: #{e2e_forward.3} parent=0 // pred_check
    _
  $region63: #{e2e_forward.3} parent=0 // pred_check_branch
    %2094 = sbr.rel (0) target = $region65
  $region64: #{e2e_forward.3} parent=0 // pred_region
    _
  $region65: #{e2e_forward.3} parent=0 // pred_fallthru
    _

// kernel: e2e_forward.2
$region0: #{e2e_forward.2}
  #allocation0 [shape = 'u32[]', space=smem, size = 0x4, offset = 0x4, fixed_abs, tag = 'smem constant byte address 0x4 - core index']
  #allocation1 [shape = 'u32[144,128]{1,0:T(1,128)}', space=vmem, size = 0x12000, scoped, tag = 'internal scratch']
  #allocation2 [shape = 'f32[64,32]{1,0:T(8,128)}', space=vmem, size = 0x8000, scoped, tag = 'scratch operand']
  #allocation3 [shape = 'f32[64,32]{1,0:T(8,128)}', space=vmem, size = 0x8000, scoped, tag = 'scratch operand']
  #allocation4 [shape = 'f32[64,32]{1,0:T(8,128)}', space=vmem, size = 0x8000, scoped, tag = 'scratch operand']
  %s0 = inlined_call_operand.vmem [shape: f32[64,32], index: 0, kind: input, shape index: {}]
  %s1 = inlined_call_operand.vmem [shape: s32[8,1], index: 1, kind: input, shape index: {}]
  %s2 = inlined_call_operand.vmem [shape: f32[32,32], index: 2, kind: input, shape index: {}]
  %s3 = inlined_call_operand.vmem [shape: f32[32,32], index: 3, kind: input, shape index: {}]
  %s4 = inlined_call_operand.vmem [shape: f32[32,32], index: 4, kind: input, shape index: {}]
  %s5 = inlined_call_operand.vmem [shape: f32[32,32], index: 5, kind: input, shape index: {}]
  %s6 = inlined_call_operand.vmem [shape: f32[32,32], index: 6, kind: input, shape index: {}]
  %s7 = inlined_call_operand.vmem [shape: f32[32,32], index: 7, kind: input, shape index: {}]
  %s8 = inlined_call_operand.vmem [shape: f32[1,32], index: 8, kind: input, shape index: {}]
  %s9 = inlined_call_operand.vmem [shape: f32[1,32], index: 9, kind: input, shape index: {}]
  %s10 = inlined_call_operand.vmem [shape: f32[1,32], index: 10, kind: input, shape index: {}]
  %s11 = inlined_call_operand.vmem [shape: f32[1,32], index: 11, kind: input, shape index: {}]
  %s12 = inlined_call_operand.vmem [shape: f32[8,32], index: 12, kind: output, shape index: {}]
  %s13 = sld [smem:[#allocation0]]
  $region58: #{e2e_forward.2} parent=0
    _
  %s15 = ssub.s32 1, %s13
  %s16 = scalar_select 0, %s15, %s13
  // Predicated region
  $region2: #{e2e_forward.2} parent=0 // pred_check
    _
  $region3: #{e2e_forward.2} parent=0 // pred_check_branch
    %18 = sbr.rel (0) target = $region5
  $region4: #{e2e_forward.2} parent=0 // pred_region
    _
  $region5: #{e2e_forward.2} parent=0 // pred_fallthru
    _
  // Predicated region
  $region6: #{e2e_forward.2} parent=0 // pred_check
    _
  $region7: #{e2e_forward.2} parent=0 // pred_check_branch
    %20 = sbr.rel (0) target = $region9
  $region8: #{e2e_forward.2} parent=0 // pred_region
    _
  $region9: #{e2e_forward.2} parent=0 // pred_fallthru
    _
  // Predicated region
  $region10: #{e2e_forward.2} parent=0 // pred_check
    _
  $region11: #{e2e_forward.2} parent=0 // pred_check_branch
    %22 = sbr.rel (0) target = $region13
  $region12: #{e2e_forward.2} parent=0 // pred_region
    _
  $region13: #{e2e_forward.2} parent=0 // pred_fallthru
    _
  // Predicated region
  $region14: #{e2e_forward.2} parent=0 // pred_check
    _
  $region15: #{e2e_forward.2} parent=0 // pred_check_branch
    %24 = sbr.rel (0) target = $region17
  $region16: #{e2e_forward.2} parent=0 // pred_region
    _
  $region17: #{e2e_forward.2} parent=0 // pred_fallthru
    _
  // Predicated region
  $region18: #{e2e_forward.2} parent=0 // pred_check
    _
  $region19: #{e2e_forward.2} parent=0 // pred_check_branch
    %26 = sbr.rel (0) target = $region21
  $region20: #{e2e_forward.2} parent=0 // pred_region
    _
  $region21: #{e2e_forward.2} parent=0 // pred_fallthru
    _
  // Predicated region
  $region22: #{e2e_forward.2} parent=0 // pred_check
    _
  $region23: #{e2e_forward.2} parent=0 // pred_check_branch
    %28 = sbr.rel (0) target = $region25
  $region24: #{e2e_forward.2} parent=0 // pred_region
    _
  $region25: #{e2e_forward.2} parent=0 // pred_fallthru
    _
  // Predicated region
  $region26: #{e2e_forward.2} parent=0 // pred_check
    _
  $region27: #{e2e_forward.2} parent=0 // pred_check_branch
    %30 = sbr.rel (0) target = $region29
  $region28: #{e2e_forward.2} parent=0 // pred_region
    _
  $region29: #{e2e_forward.2} parent=0 // pred_fallthru
    _
  // Predicated region
  $region30: #{e2e_forward.2} parent=0 // pred_check
    _
  $region31: #{e2e_forward.2} parent=0 // pred_check_branch
    %32 = sbr.rel (0) target = $region33
  $region32: #{e2e_forward.2} parent=0 // pred_region
    _
  $region33: #{e2e_forward.2} parent=0 // pred_fallthru
    _
  // Predicated region
  $region34: #{e2e_forward.2} parent=0 // pred_check
    _
  $region35: #{e2e_forward.2} parent=0 // pred_check_branch
    %34 = sbr.rel (0) target = $region37
  $region36: #{e2e_forward.2} parent=0 // pred_region
    _
  $region37: #{e2e_forward.2} parent=0 // pred_fallthru
    _
  // Predicated region
  $region38: #{e2e_forward.2} parent=0 // pred_check
    _
  $region39: #{e2e_forward.2} parent=0 // pred_check_branch
    %36 = sbr.rel (0) target = $region41
  $region40: #{e2e_forward.2} parent=0 // pred_region
    _
  $region41: #{e2e_forward.2} parent=0 // pred_fallthru
    _
  // Predicated region
  $region42: #{e2e_forward.2} parent=0 // pred_check
    _
  $region43: #{e2e_forward.2} parent=0 // pred_check_branch
    %38 = sbr.rel (0) target = $region45
  $region44: #{e2e_forward.2} parent=0 // pred_region
    _
  $region45: #{e2e_forward.2} parent=0 // pred_fallthru
    _
  // Predicated region
  $region46: #{e2e_forward.2} parent=0 // pred_check
    _
  $region47: #{e2e_forward.2} parent=0 // pred_check_branch
    %40 = sbr.rel (0) target = $region49
  $region48: #{e2e_forward.2} parent=0 // pred_region
    _
  $region49: #{e2e_forward.2} parent=0 // pred_fallthru
    _
  %v41 = vld [vmem:[%s0] sm:$0xff]
  %v42 = vld [vmem:[%s0 + $0x8] sm:$0xff]
  %v43 = vld [vmem:[%s0 + $0x10] sm:$0xff]
  %v44 = vld [vmem:[%s0 + $0x18] sm:$0xff]
  %v45 = vld [vmem:[%s0 + $0x20] sm:$0xff]
  %v46 = vld [vmem:[%s0 + $0x28] sm:$0xff]
  %v47 = vld [vmem:[%s0 + $0x30] sm:$0xff]
  %v48 = vld [vmem:[%s0 + $0x38] sm:$0xff]
  %v49 = vld [vmem:[%s2] sm:$0xff]
  %v50 = vld [vmem:[%s2 + $0x8] sm:$0xff]
  %v51 = vld [vmem:[%s2 + $0x10] sm:$0xff]
  %v52 = vld [vmem:[%s2 + $0x18] sm:$0xff]
  %v53 = vld [vmem:[%s8] sm:$0x1]
  %v55 = vlaneseq
  %v56 = vshrl.u32 %v55, 7
  %v57 = vsub.s32 0, %v56
  %v58 = vrot.slane %v53, %v57
  %vm60 = vcmask 261120
  %v62 = vsel %vm60, %v41, 0
  %v65 = vsel %vm60, %v42, 0
  %v68 = vsel %vm60, %v43, 0
  %v71 = vsel %vm60, %v44, 0
  %v74 = vsel %vm60, %v45, 0
  %v77 = vsel %vm60, %v46, 0
  %v80 = vsel %vm60, %v47, 0
  %v83 = vsel %vm60, %v48, 0
  %85 = vmatprep.subr.mxu0 0.0
  %86 = vmatpush1.msra.mxu0 %v49
  %87 = vmatprep.subr.mxu0 0.0
  %88 = vmatpush1.msra.mxu0 %v50
  %89 = vmatprep.subr.mxu0 0.0
  %90 = vmatpush1.msra.mxu0 %v51
  %91 = vmatprep.subr.mxu0 0.0
  %92 = vmatpush1.msra.mxu0 %v52
  %93 = vmatprep.subr.mxu0 0.0
  %94 = vmatpush1.msra.mxu0 0.0
  %95 = vmatprep.subr.mxu0 0.0
  %96 = vmatpush1.msra.mxu0 0.0
  %97 = vmatprep.subr.mxu0 0.0
  %98 = vmatpush1.msra.mxu0 0.0
  %99 = vmatprep.subr.mxu0 0.0
  %100 = vmatpush1.msra.mxu0 0.0
  %101 = vmatprep.subr.mxu0 0.0
  %102 = vmatpush1.msra.mxu0 0.0
  %103 = vmatprep.subr.mxu0 0.0
  %104 = vmatpush1.msra.mxu0 0.0
  %105 = vmatprep.subr.mxu0 0.0
  %106 = vmatpush1.msra.mxu0 0.0
  %107 = vmatprep.subr.mxu0 0.0
  %108 = vmatpush1.msra.mxu0 0.0
  %109 = vmatprep.subr.mxu0 0.0
  %110 = vmatpush1.msra.mxu0 0.0
  %111 = vmatprep.subr.mxu0 0.0
  %112 = vmatpush1.msra.mxu0 0.0
  %113 = vmatprep.subr.mxu0 0.0
  %114 = vmatpush1.msra.mxu0 0.0
  %115 = vmatprep.subr.mxu0 0.0
  %116 = vmatpush1.msra.mxu0 0.0
  %117 = vmatprep.subr.mxu0 0.0
  %118 = vmatpush1.msra.mxu0 0.0
  %119 = vmatprep.subr.mxu0 0.0
  %120 = vmatpush1.msra.mxu0 0.0
  %121 = vmatprep.subr.mxu0 0.0
  %122 = vmatpush1.msra.mxu0 0.0
  %123 = vmatprep.subr.mxu0 0.0
  %124 = vmatpush1.msra.mxu0 0.0
  %125 = vmatprep.subr.mxu0 0.0
  %126 = vmatpush1.msra.mxu0 0.0
  %127 = vmatprep.subr.mxu0 0.0
  %128 = vmatpush1.msra.mxu0 0.0
  %129 = vmatprep.subr.mxu0 0.0
  %130 = vmatpush1.msra.mxu0 0.0
  %131 = vmatprep.subr.mxu0 0.0
  %132 = vmatpush1.msra.mxu0 0.0
  %133 = vmatprep.subr.mxu0 0.0
  %134 = vmatpush1.msra.mxu0 0.0
  %135 = vmatprep.subr.mxu0 0.0
  %136 = vmatpush1.msra.mxu0 0.0
  %137 = vmatprep.subr.mxu0 0.0
  %138 = vmatpush1.msra.mxu0 0.0
  %139 = vmatprep.subr.mxu0 0.0
  %140 = vmatpush1.msra.mxu0 0.0
  %141 = vmatprep.subr.mxu0 0.0
  %142 = vmatpush1.msra.mxu0 0.0
  %143 = vmatprep.subr.mxu0 0.0
  %144 = vmatpush1.msra.mxu0 0.0
  %145 = vmatprep.subr.mxu0 0.0
  %146 = vmatpush1.msra.mxu0 0.0
  %147 = vmatprep.subr.mxu0 0.0
  %148 = vmatpush1.msra.mxu0 0.0
  %149 = vmatprep.mubr.f32.mxu0 0.0
  %150 = vmatmul.mubr.f32.gmra.mrb[0].mxu0 %v62
  %v151 = vpop.f32.mrb[0].mxu0
  %v152 = vadd.f32 %v58, %v151
  %v153 = vpop.f32.mrb[0].mxu0
  %154 = vmatprep.mubr.f32.mxu0 0.0
  %155 = vmatmul.mubr.f32.gmra.mrb[0].mxu0 %v65
  %v156 = vpop.f32.mrb[0].mxu0
  %v157 = vadd.f32 %v58, %v156
  %v158 = vpop.f32.mrb[0].mxu0
  %159 = vmatprep.mubr.f32.mxu0 0.0
  %160 = vmatmul.mubr.f32.gmra.mrb[0].mxu0 %v68
  %v161 = vpop.f32.mrb[0].mxu0
  %v162 = vadd.f32 %v58, %v161
  %v163 = vpop.f32.mrb[0].mxu0
  %164 = vmatprep.mubr.f32.mxu0 0.0
  %165 = vmatmul.mubr.f32.gmra.mrb[0].mxu0 %v71
  %v166 = vpop.f32.mrb[0].mxu0
  %v167 = vadd.f32 %v58, %v166
  %v168 = vpop.f32.mrb[0].mxu0
  %169 = vmatprep.mubr.f32.mxu0 0.0
  %170 = vmatmul.mubr.f32.gmra.mrb[0].mxu0 %v74
  %v171 = vpop.f32.mrb[0].mxu0
  %v172 = vadd.f32 %v58, %v171
  %v173 = vpop.f32.mrb[0].mxu0
  %174 = vmatprep.mubr.f32.mxu0 0.0
  %175 = vmatmul.mubr.f32.gmra.mrb[0].mxu0 %v77
  %v176 = vpop.f32.mrb[0].mxu0
  %v177 = vadd.f32 %v58, %v176
  %v178 = vpop.f32.mrb[0].mxu0
  %179 = vmatprep.mubr.f32.mxu0 0.0
  %180 = vmatmul.mubr.f32.gmra.mrb[0].mxu0 %v80
  %v181 = vpop.f32.mrb[0].mxu0
  %v182 = vadd.f32 %v58, %v181
  %v183 = vpop.f32.mrb[0].mxu0
  %184 = vmatprep.mubr.f32.mxu0 0.0
  %185 = vmatmul.mubr.f32.gmra.mrb[0].mxu0 %v83
  %v186 = vpop.f32.mrb[0].mxu0
  %v187 = vadd.f32 %v58, %v186
  %v188 = vpop.f32.mrb[0].mxu0
  %189 = vdwg.mxu0
  %190 = vst.msk [vmem:[#allocation2] sm:$0xff] %vm60, %v152
  %191 = vst.msk [vmem:[#allocation2 + $0x8] sm:$0xff] %vm60, %v157
  %192 = vst.msk [vmem:[#allocation2 + $0x10] sm:$0xff] %vm60, %v162
  %193 = vst.msk [vmem:[#allocation2 + $0x18] sm:$0xff] %vm60, %v167
  %194 = vst.msk [vmem:[#allocation2 + $0x20] sm:$0xff] %vm60, %v172
  %195 = vst.msk [vmem:[#allocation2 + $0x28] sm:$0xff] %vm60, %v177
  %196 = vst.msk [vmem:[#allocation2 + $0x30] sm:$0xff] %vm60, %v182
  %197 = vst.msk [vmem:[#allocation2 + $0x38] sm:$0xff] %vm60, %v187
  %v198 = vld [vmem:[%s3] sm:$0xff]
  %v199 = vld [vmem:[%s3 + $0x8] sm:$0xff]
  %v200 = vld [vmem:[%s3 + $0x10] sm:$0xff]
  %v201 = vld [vmem:[%s3 + $0x18] sm:$0xff]
  %v202 = vld [vmem:[%s9] sm:$0x1]
  %v204 = vlaneseq
  %v205 = vshrl.u32 %v204, 7
  %v206 = vsub.s32 0, %v205
  %v207 = vrot.slane %v202, %v206
  %209 = vmatprep.subr.mxu0 0.0
  %210 = vmatpush1.msra.mxu0 %v198
  %211 = vmatprep.subr.mxu0 0.0
  %212 = vmatpush1.msra.mxu0 %v199
  %213 = vmatprep.subr.mxu0 0.0
  %214 = vmatpush1.msra.mxu0 %v200
  %215 = vmatprep.subr.mxu0 0.0
  %216 = vmatpush1.msra.mxu0 %v201
  %217 = vmatprep.subr.mxu0 0.0
  %218 = vmatpush1.msra.mxu0 0.0
  %219 = vmatprep.subr.mxu0 0.0
  %220 = vmatpush1.msra.mxu0 0.0
  %221 = vmatprep.subr.mxu0 0.0
  %222 = vmatpush1.msra.mxu0 0.0
  %223 = vmatprep.subr.mxu0 0.0
  %224 = vmatpush1.msra.mxu0 0.0
  %225 = vmatprep.subr.mxu0 0.0
  %226 = vmatpush1.msra.mxu0 0.0
  %227 = vmatprep.subr.mxu0 0.0
  %228 = vmatpush1.msra.mxu0 0.0
  %229 = vmatprep.subr.mxu0 0.0
  %230 = vmatpush1.msra.mxu0 0.0
  %231 = vmatprep.subr.mxu0 0.0
  %232 = vmatpush1.msra.mxu0 0.0
  %233 = vmatprep.subr.mxu0 0.0
  %234 = vmatpush1.msra.mxu0 0.0
  %235 = vmatprep.subr.mxu0 0.0
  %236 = vmatpush1.msra.mxu0 0.0
  %237 = vmatprep.subr.mxu0 0.0
  %238 = vmatpush1.msra.mxu0 0.0
  %239 = vmatprep.subr.mxu0 0.0
  %240 = vmatpush1.msra.mxu0 0.0
  %241 = vmatprep.subr.mxu0 0.0
  %242 = vmatpush1.msra.mxu0 0.0
  %243 = vmatprep.subr.mxu0 0.0
  %244 = vmatpush1.msra.mxu0 0.0
  %245 = vmatprep.subr.mxu0 0.0
  %246 = vmatpush1.msra.mxu0 0.0
  %247 = vmatprep.subr.mxu0 0.0
  %248 = vmatpush1.msra.mxu0 0.0
  %249 = vmatprep.subr.mxu0 0.0
  %250 = vmatpush1.msra.mxu0 0.0
  %251 = vmatprep.subr.mxu0 0.0
  %252 = vmatpush1.msra.mxu0 0.0
  %253 = vmatprep.subr.mxu0 0.0
  %254 = vmatpush1.msra.mxu0 0.0
  %255 = vmatprep.subr.mxu0 0.0
  %256 = vmatpush1.msra.mxu0 0.0
  %257 = vmatprep.subr.mxu0 0.0
  %258 = vmatpush1.msra.mxu0 0.0
  %259 = vmatprep.subr.mxu0 0.0
  %260 = vmatpush1.msra.mxu0 0.0
  %261 = vmatprep.subr.mxu0 0.0
  %262 = vmatpush1.msra.mxu0 0.0
  %263 = vmatprep.subr.mxu0 0.0
  %264 = vmatpush1.msra.mxu0 0.0
  %265 = vmatprep.subr.mxu0 0.0
  %266 = vmatpush1.msra.mxu0 0.0
  %267 = vmatprep.subr.mxu0 0.0
  %268 = vmatpush1.msra.mxu0 0.0
  %269 = vmatprep.subr.mxu0 0.0
  %270 = vmatpush1.msra.mxu0 0.0
  %271 = vmatprep.subr.mxu0 0.0
  %272 = vmatpush1.msra.mxu0 0.0
  %273 = vmatprep.mubr.f32.mxu0 0.0
  %274 = vmatmul.mubr.f32.gmra.mrb[0].mxu0 %v62
  %v275 = vpop.f32.mrb[0].mxu0
  %v276 = vadd.f32 %v207, %v275
  %v277 = vpop.f32.mrb[0].mxu0
  %278 = vmatprep.mubr.f32.mxu0 0.0
  %279 = vmatmul.mubr.f32.gmra.mrb[0].mxu0 %v65
  %v280 = vpop.f32.mrb[0].mxu0
  %v281 = vadd.f32 %v207, %v280
  %v282 = vpop.f32.mrb[0].mxu0
  %283 = vmatprep.mubr.f32.mxu0 0.0
  %284 = vmatmul.mubr.f32.gmra.mrb[0].mxu0 %v68
  %v285 = vpop.f32.mrb[0].mxu0
  %v286 = vadd.f32 %v207, %v285
  %v287 = vpop.f32.mrb[0].mxu0
  %288 = vmatprep.mubr.f32.mxu0 0.0
  %289 = vmatmul.mubr.f32.gmra.mrb[0].mxu0 %v71
  %v290 = vpop.f32.mrb[0].mxu0
  %v291 = vadd.f32 %v207, %v290
  %v292 = vpop.f32.mrb[0].mxu0
  %293 = vmatprep.mubr.f32.mxu0 0.0
  %294 = vmatmul.mubr.f32.gmra.mrb[0].mxu0 %v74
  %v295 = vpop.f32.mrb[0].mxu0
  %v296 = vadd.f32 %v207, %v295
  %v297 = vpop.f32.mrb[0].mxu0
  %298 = vmatprep.mubr.f32.mxu0 0.0
  %299 = vmatmul.mubr.f32.gmra.mrb[0].mxu0 %v77
  %v300 = vpop.f32.mrb[0].mxu0
  %v301 = vadd.f32 %v207, %v300
  %v302 = vpop.f32.mrb[0].mxu0
  %303 = vmatprep.mubr.f32.mxu0 0.0
  %304 = vmatmul.mubr.f32.gmra.mrb[0].mxu0 %v80
  %v305 = vpop.f32.mrb[0].mxu0
  %v306 = vadd.f32 %v207, %v305
  %v307 = vpop.f32.mrb[0].mxu0
  %308 = vmatprep.mubr.f32.mxu0 0.0
  %309 = vmatmul.mubr.f32.gmra.mrb[0].mxu0 %v83
  %v310 = vpop.f32.mrb[0].mxu0
  %v311 = vadd.f32 %v207, %v310
  %v312 = vpop.f32.mrb[0].mxu0
  %313 = vdwg.mxu0
  %314 = vst.msk [vmem:[#allocation3] sm:$0xff] %vm60, %v276
  %315 = vst.msk [vmem:[#allocation3 + $0x8] sm:$0xff] %vm60, %v281
  %316 = vst.msk [vmem:[#allocation3 + $0x10] sm:$0xff] %vm60, %v286
  %317 = vst.msk [vmem:[#allocation3 + $0x18] sm:$0xff] %vm60, %v291
  %318 = vst.msk [vmem:[#allocation3 + $0x20] sm:$0xff] %vm60, %v296
  %319 = vst.msk [vmem:[#allocation3 + $0x28] sm:$0xff] %vm60, %v301
  %320 = vst.msk [vmem:[#allocation3 + $0x30] sm:$0xff] %vm60, %v306
  %321 = vst.msk [vmem:[#allocation3 + $0x38] sm:$0xff] %vm60, %v311
  %v322 = vld [vmem:[%s4] sm:$0xff]
  %v323 = vld [vmem:[%s4 + $0x8] sm:$0xff]
  %v324 = vld [vmem:[%s4 + $0x10] sm:$0xff]
  %v325 = vld [vmem:[%s4 + $0x18] sm:$0xff]
  %v326 = vld [vmem:[%s10] sm:$0x1]
  %v328 = vlaneseq
  %v329 = vshrl.u32 %v328, 7
  %v330 = vsub.s32 0, %v329
  %v331 = vrot.slane %v326, %v330
  %333 = vmatprep.subr.mxu0 0.0
  %334 = vmatpush1.msra.mxu0 %v322
  %335 = vmatprep.subr.mxu0 0.0
  %336 = vmatpush1.msra.mxu0 %v323
  %337 = vmatprep.subr.mxu0 0.0
  %338 = vmatpush1.msra.mxu0 %v324
  %339 = vmatprep.subr.mxu0 0.0
  %340 = vmatpush1.msra.mxu0 %v325
  %341 = vmatprep.subr.mxu0 0.0
  %342 = vmatpush1.msra.mxu0 0.0
  %343 = vmatprep.subr.mxu0 0.0
  %344 = vmatpush1.msra.mxu0 0.0
  %345 = vmatprep.subr.mxu0 0.0
  %346 = vmatpush1.msra.mxu0 0.0
  %347 = vmatprep.subr.mxu0 0.0
  %348 = vmatpush1.msra.mxu0 0.0
  %349 = vmatprep.subr.mxu0 0.0
  %350 = vmatpush1.msra.mxu0 0.0
  %351 = vmatprep.subr.mxu0 0.0
  %352 = vmatpush1.msra.mxu0 0.0
  %353 = vmatprep.subr.mxu0 0.0
  %354 = vmatpush1.msra.mxu0 0.0
  %355 = vmatprep.subr.mxu0 0.0
  %356 = vmatpush1.msra.mxu0 0.0
  %357 = vmatprep.subr.mxu0 0.0
  %358 = vmatpush1.msra.mxu0 0.0
  %359 = vmatprep.subr.mxu0 0.0
  %360 = vmatpush1.msra.mxu0 0.0
  %361 = vmatprep.subr.mxu0 0.0
  %362 = vmatpush1.msra.mxu0 0.0
  %363 = vmatprep.subr.mxu0 0.0
  %364 = vmatpush1.msra.mxu0 0.0
  %365 = vmatprep.subr.mxu0 0.0
  %366 = vmatpush1.msra.mxu0 0.0
  %367 = vmatprep.subr.mxu0 0.0
  %368 = vmatpush1.msra.mxu0 0.0
  %369 = vmatprep.subr.mxu0 0.0
  %370 = vmatpush1.msra.mxu0 0.0
  %371 = vmatprep.subr.mxu0 0.0
  %372 = vmatpush1.msra.mxu0 0.0
  %373 = vmatprep.subr.mxu0 0.0
  %374 = vmatpush1.msra.mxu0 0.0
  %375 = vmatprep.subr.mxu0 0.0
  %376 = vmatpush1.msra.mxu0 0.0
  %377 = vmatprep.subr.mxu0 0.0
  %378 = vmatpush1.msra.mxu0 0.0
  %379 = vmatprep.subr.mxu0 0.0
  %380 = vmatpush1.msra.mxu0 0.0
  %381 = vmatprep.subr.mxu0 0.0
  %382 = vmatpush1.msra.mxu0 0.0
  %383 = vmatprep.subr.mxu0 0.0
  %384 = vmatpush1.msra.mxu0 0.0
  %385 = vmatprep.subr.mxu0 0.0
  %386 = vmatpush1.msra.mxu0 0.0
  %387 = vmatprep.subr.mxu0 0.0
  %388 = vmatpush1.msra.mxu0 0.0
  %389 = vmatprep.subr.mxu0 0.0
  %390 = vmatpush1.msra.mxu0 0.0
  %391 = vmatprep.subr.mxu0 0.0
  %392 = vmatpush1.msra.mxu0 0.0
  %393 = vmatprep.subr.mxu0 0.0
  %394 = vmatpush1.msra.mxu0 0.0
  %395 = vmatprep.subr.mxu0 0.0
  %396 = vmatpush1.msra.mxu0 0.0
  %397 = vmatprep.mubr.f32.mxu0 0.0
  %398 = vmatmul.mubr.f32.gmra.mrb[0].mxu0 %v62
  %v399 = vpop.f32.mrb[0].mxu0
  %v400 = vadd.f32 %v331, %v399
  %v401 = vpop.f32.mrb[0].mxu0
  %402 = vmatprep.mubr.f32.mxu0 0.0
  %403 = vmatmul.mubr.f32.gmra.mrb[0].mxu0 %v65
  %v404 = vpop.f32.mrb[0].mxu0
  %v405 = vadd.f32 %v331, %v404
  %v406 = vpop.f32.mrb[0].mxu0
  %407 = vmatprep.mubr.f32.mxu0 0.0
  %408 = vmatmul.mubr.f32.gmra.mrb[0].mxu0 %v68
  %v409 = vpop.f32.mrb[0].mxu0
  %v410 = vadd.f32 %v331, %v409
  %v411 = vpop.f32.mrb[0].mxu0
  %412 = vmatprep.mubr.f32.mxu0 0.0
  %413 = vmatmul.mubr.f32.gmra.mrb[0].mxu0 %v71
  %v414 = vpop.f32.mrb[0].mxu0
  %v415 = vadd.f32 %v331, %v414
  %v416 = vpop.f32.mrb[0].mxu0
  %417 = vmatprep.mubr.f32.mxu0 0.0
  %418 = vmatmul.mubr.f32.gmra.mrb[0].mxu0 %v74
  %v419 = vpop.f32.mrb[0].mxu0
  %v420 = vadd.f32 %v331, %v419
  %v421 = vpop.f32.mrb[0].mxu0
  %422 = vmatprep.mubr.f32.mxu0 0.0
  %423 = vmatmul.mubr.f32.gmra.mrb[0].mxu0 %v77
  %v424 = vpop.f32.mrb[0].mxu0
  %v425 = vadd.f32 %v331, %v424
  %v426 = vpop.f32.mrb[0].mxu0
  %427 = vmatprep.mubr.f32.mxu0 0.0
  %428 = vmatmul.mubr.f32.gmra.mrb[0].mxu0 %v80
  %v429 = vpop.f32.mrb[0].mxu0
  %v430 = vadd.f32 %v331, %v429
  %v431 = vpop.f32.mrb[0].mxu0
  %432 = vmatprep.mubr.f32.mxu0 0.0
  %433 = vmatmul.mubr.f32.gmra.mrb[0].mxu0 %v83
  %v434 = vpop.f32.mrb[0].mxu0
  %v435 = vadd.f32 %v331, %v434
  %v436 = vpop.f32.mrb[0].mxu0
  %437 = vdwg.mxu0
  %438 = vst.msk [vmem:[#allocation4] sm:$0xff] %vm60, %v400
  %439 = vst.msk [vmem:[#allocation4 + $0x8] sm:$0xff] %vm60, %v405
  %440 = vst.msk [vmem:[#allocation4 + $0x10] sm:$0xff] %vm60, %v410
  %441 = vst.msk [vmem:[#allocation4 + $0x18] sm:$0xff] %vm60, %v415
  %442 = vst.msk [vmem:[#allocation4 + $0x20] sm:$0xff] %vm60, %v420
  %443 = vst.msk [vmem:[#allocation4 + $0x28] sm:$0xff] %vm60, %v425
  %444 = vst.msk [vmem:[#allocation4 + $0x30] sm:$0xff] %vm60, %v430
  %445 = vst.msk [vmem:[#allocation4 + $0x38] sm:$0xff] %vm60, %v435
  %v446 = vld [vmem:[%s5] sm:$0xff]
  %v447 = vld [vmem:[%s5 + $0x8] sm:$0xff]
  %v448 = vld [vmem:[%s5 + $0x10] sm:$0xff]
  %v449 = vld [vmem:[%s5 + $0x18] sm:$0xff]
  %v450 = vld [vmem:[%s6] sm:$0xff]
  %v451 = vld [vmem:[%s6 + $0x8] sm:$0xff]
  %v452 = vld [vmem:[%s6 + $0x10] sm:$0xff]
  %v453 = vld [vmem:[%s6 + $0x18] sm:$0xff]
  %v454 = vld [vmem:[%s7] sm:$0xff]
  %v455 = vld [vmem:[%s7 + $0x8] sm:$0xff]
  %v456 = vld [vmem:[%s7 + $0x10] sm:$0xff]
  %v457 = vld [vmem:[%s7 + $0x18] sm:$0xff]
  %v458 = vld [vmem:[%s11] sm:$0x1]
  %v460 = vlaneseq
  %v461 = vshrl.u32 %v460, 7
  %v462 = vsub.s32 0, %v461
  %v463 = vrot.slane %v458, %v462
  %v465 = vld [vmem:[%s1] sm:$0xff]
  %v466 = vsub.s32 %v465, 1
  %v467 = vld [vmem:[#allocation2] sm:$0xff]
  %v468 = vld [vmem:[#allocation3] sm:$0xff]
  %v469 = vld [vmem:[#allocation4] sm:$0xff]
  %v471 = vsel %vm60, 0.0, 0
  %473 = vmatprep.subr.mxu0 0.0
  %474 = vmatpush1.msra.mxu0 %v446
  %475 = vmatprep.subr.mxu0 0.0
  %476 = vmatpush1.msra.mxu0 %v447
  %477 = vmatprep.subr.mxu0 0.0
  %478 = vmatpush1.msra.mxu0 %v448
  %479 = vmatprep.subr.mxu0 0.0
  %480 = vmatpush1.msra.mxu0 %v449
  %481 = vmatprep.subr.mxu0 0.0
  %482 = vmatpush1.msra.mxu0 0.0
  %483 = vmatprep.subr.mxu0 0.0
  %484 = vmatpush1.msra.mxu0 0.0
  %485 = vmatprep.subr.mxu0 0.0
  %486 = vmatpush1.msra.mxu0 0.0
  %487 = vmatprep.subr.mxu0 0.0
  %488 = vmatpush1.msra.mxu0 0.0
  %489 = vmatprep.subr.mxu0 0.0
  %490 = vmatpush1.msra.mxu0 0.0
  %491 = vmatprep.subr.mxu0 0.0
  %492 = vmatpush1.msra.mxu0 0.0
  %493 = vmatprep.subr.mxu0 0.0
  %494 = vmatpush1.msra.mxu0 0.0
  %495 = vmatprep.subr.mxu0 0.0
  %496 = vmatpush1.msra.mxu0 0.0
  %497 = vmatprep.subr.mxu0 0.0
  %498 = vmatpush1.msra.mxu0 0.0
  %499 = vmatprep.subr.mxu0 0.0
  %500 = vmatpush1.msra.mxu0 0.0
  %501 = vmatprep.subr.mxu0 0.0
  %502 = vmatpush1.msra.mxu0 0.0
  %503 = vmatprep.subr.mxu0 0.0
  %504 = vmatpush1.msra.mxu0 0.0
  %505 = vmatprep.subr.mxu0 0.0
  %506 = vmatpush1.msra.mxu0 0.0
  %507 = vmatprep.subr.mxu0 0.0
  %508 = vmatpush1.msra.mxu0 0.0
  %509 = vmatprep.subr.mxu0 0.0
  %510 = vmatpush1.msra.mxu0 0.0
  %511 = vmatprep.subr.mxu0 0.0
  %512 = vmatpush1.msra.mxu0 0.0
  %513 = vmatprep.subr.mxu0 0.0
  %514 = vmatpush1.msra.mxu0 0.0
  %515 = vmatprep.subr.mxu0 0.0
  %516 = vmatpush1.msra.mxu0 0.0
  %517 = vmatprep.subr.mxu0 0.0
  %518 = vmatpush1.msra.mxu0 0.0
  %519 = vmatprep.subr.mxu0 0.0
  %520 = vmatpush1.msra.mxu0 0.0
  %521 = vmatprep.subr.mxu0 0.0
  %522 = vmatpush1.msra.mxu0 0.0
  %523 = vmatprep.subr.mxu0 0.0
  %524 = vmatpush1.msra.mxu0 0.0
  %525 = vmatprep.subr.mxu0 0.0
  %526 = vmatpush1.msra.mxu0 0.0
  %527 = vmatprep.subr.mxu0 0.0
  %528 = vmatpush1.msra.mxu0 0.0
  %529 = vmatprep.subr.mxu0 0.0
  %530 = vmatpush1.msra.mxu0 0.0
  %531 = vmatprep.subr.mxu0 0.0
  %532 = vmatpush1.msra.mxu0 0.0
  %533 = vmatprep.subr.mxu0 0.0
  %534 = vmatpush1.msra.mxu0 0.0
  %535 = vmatprep.subr.mxu0 0.0
  %536 = vmatpush1.msra.mxu0 0.0
  %537 = vmatprep.mubr.f32.mxu0 0.0
  %538 = vmatmul.mubr.f32.gmra.mrb[0].mxu0 %v471
  %v539 = vpop.f32.mrb[0].mxu0
  %v540 = vadd.f32 0.0, %v539
  %v541 = vpop.f32.mrb[0].mxu0
  %542 = vdwg.mxu0
  %543 = vmatprep.subr.mxu0 0.0
  %544 = vmatpush1.msra.mxu0 %v450
  %545 = vmatprep.subr.mxu0 0.0
  %546 = vmatpush1.msra.mxu0 %v451
  %547 = vmatprep.subr.mxu0 0.0
  %548 = vmatpush1.msra.mxu0 %v452
  %549 = vmatprep.subr.mxu0 0.0
  %550 = vmatpush1.msra.mxu0 %v453
  %551 = vmatprep.subr.mxu0 0.0
  %552 = vmatpush1.msra.mxu0 0.0
  %553 = vmatprep.subr.mxu0 0.0
  %554 = vmatpush1.msra.mxu0 0.0
  %555 = vmatprep.subr.mxu0 0.0
  %556 = vmatpush1.msra.mxu0 0.0
  %557 = vmatprep.subr.mxu0 0.0
  %558 = vmatpush1.msra.mxu0 0.0
  %559 = vmatprep.subr.mxu0 0.0
  %560 = vmatpush1.msra.mxu0 0.0
  %561 = vmatprep.subr.mxu0 0.0
  %562 = vmatpush1.msra.mxu0 0.0
  %563 = vmatprep.subr.mxu0 0.0
  %564 = vmatpush1.msra.mxu0 0.0
  %565 = vmatprep.subr.mxu0 0.0
  %566 = vmatpush1.msra.mxu0 0.0
  %567 = vmatprep.subr.mxu0 0.0
  %568 = vmatpush1.msra.mxu0 0.0
  %569 = vmatprep.subr.mxu0 0.0
  %570 = vmatpush1.msra.mxu0 0.0
  %571 = vmatprep.subr.mxu0 0.0
  %572 = vmatpush1.msra.mxu0 0.0
  %573 = vmatprep.subr.mxu0 0.0
  %574 = vmatpush1.msra.mxu0 0.0
  %575 = vmatprep.subr.mxu0 0.0
  %576 = vmatpush1.msra.mxu0 0.0
  %577 = vmatprep.subr.mxu0 0.0
  %578 = vmatpush1.msra.mxu0 0.0
  %579 = vmatprep.subr.mxu0 0.0
  %580 = vmatpush1.msra.mxu0 0.0
  %581 = vmatprep.subr.mxu0 0.0
  %582 = vmatpush1.msra.mxu0 0.0
  %583 = vmatprep.subr.mxu0 0.0
  %584 = vmatpush1.msra.mxu0 0.0
  %585 = vmatprep.subr.mxu0 0.0
  %586 = vmatpush1.msra.mxu0 0.0
  %587 = vmatprep.subr.mxu0 0.0
  %588 = vmatpush1.msra.mxu0 0.0
  %589 = vmatprep.subr.mxu0 0.0
  %590 = vmatpush1.msra.mxu0 0.0
  %591 = vmatprep.subr.mxu0 0.0
  %592 = vmatpush1.msra.mxu0 0.0
  %593 = vmatprep.subr.mxu0 0.0
  %594 = vmatpush1.msra.mxu0 0.0
  %595 = vmatprep.subr.mxu0 0.0
  %596 = vmatpush1.msra.mxu0 0.0
  %597 = vmatprep.subr.mxu0 0.0
  %598 = vmatpush1.msra.mxu0 0.0
  %599 = vmatprep.subr.mxu0 0.0
  %600 = vmatpush1.msra.mxu0 0.0
  %601 = vmatprep.subr.mxu0 0.0
  %602 = vmatpush1.msra.mxu0 0.0
  %603 = vmatprep.subr.mxu0 0.0
  %604 = vmatpush1.msra.mxu0 0.0
  %605 = vmatprep.subr.mxu0 0.0
  %606 = vmatpush1.msra.mxu0 0.0
  %607 = vmatprep.mubr.f32.mxu0 0.0
  %608 = vmatmul.mubr.f32.gmra.mrb[0].mxu0 %v471
  %v609 = vpop.f32.mrb[0].mxu0
  %v610 = vadd.f32 0.0, %v609
  %v611 = vpop.f32.mrb[0].mxu0
  %612 = vdwg.mxu0
  %613 = vmatprep.subr.mxu0 0.0
  %614 = vmatpush1.msra.mxu0 %v454
  %615 = vmatprep.subr.mxu0 0.0
  %616 = vmatpush1.msra.mxu0 %v455
  %617 = vmatprep.subr.mxu0 0.0
  %618 = vmatpush1.msra.mxu0 %v456
  %619 = vmatprep.subr.mxu0 0.0
  %620 = vmatpush1.msra.mxu0 %v457
  %621 = vmatprep.subr.mxu0 0.0
  %622 = vmatpush1.msra.mxu0 0.0
  %623 = vmatprep.subr.mxu0 0.0
  %624 = vmatpush1.msra.mxu0 0.0
  %625 = vmatprep.subr.mxu0 0.0
  %626 = vmatpush1.msra.mxu0 0.0
  %627 = vmatprep.subr.mxu0 0.0
  %628 = vmatpush1.msra.mxu0 0.0
  %629 = vmatprep.subr.mxu0 0.0
  %630 = vmatpush1.msra.mxu0 0.0
  %631 = vmatprep.subr.mxu0 0.0
  %632 = vmatpush1.msra.mxu0 0.0
  %633 = vmatprep.subr.mxu0 0.0
  %634 = vmatpush1.msra.mxu0 0.0
  %635 = vmatprep.subr.mxu0 0.0
  %636 = vmatpush1.msra.mxu0 0.0
  %637 = vmatprep.subr.mxu0 0.0
  %638 = vmatpush1.msra.mxu0 0.0
  %639 = vmatprep.subr.mxu0 0.0
  %640 = vmatpush1.msra.mxu0 0.0
  %641 = vmatprep.subr.mxu0 0.0
  %642 = vmatpush1.msra.mxu0 0.0
  %643 = vmatprep.subr.mxu0 0.0
  %644 = vmatpush1.msra.mxu0 0.0
  %645 = vmatprep.subr.mxu0 0.0
  %646 = vmatpush1.msra.mxu0 0.0
  %647 = vmatprep.subr.mxu0 0.0
  %648 = vmatpush1.msra.mxu0 0.0
  %649 = vmatprep.subr.mxu0 0.0
  %650 = vmatpush1.msra.mxu0 0.0
  %651 = vmatprep.subr.mxu0 0.0
  %652 = vmatpush1.msra.mxu0 0.0
  %653 = vmatprep.subr.mxu0 0.0
  %654 = vmatpush1.msra.mxu0 0.0
  %655 = vmatprep.subr.mxu0 0.0
  %656 = vmatpush1.msra.mxu0 0.0
  %657 = vmatprep.subr.mxu0 0.0
  %658 = vmatpush1.msra.mxu0 0.0
  %659 = vmatprep.subr.mxu0 0.0
  %660 = vmatpush1.msra.mxu0 0.0
  %661 = vmatprep.subr.mxu0 0.0
  %662 = vmatpush1.msra.mxu0 0.0
  %663 = vmatprep.subr.mxu0 0.0
  %664 = vmatpush1.msra.mxu0 0.0
  %665 = vmatprep.subr.mxu0 0.0
  %666 = vmatpush1.msra.mxu0 0.0
  %667 = vmatprep.subr.mxu0 0.0
  %668 = vmatpush1.msra.mxu0 0.0
  %669 = vmatprep.subr.mxu0 0.0
  %670 = vmatpush1.msra.mxu0 0.0
  %671 = vmatprep.subr.mxu0 0.0
  %672 = vmatpush1.msra.mxu0 0.0
  %673 = vmatprep.subr.mxu0 0.0
  %674 = vmatpush1.msra.mxu0 0.0
  %675 = vmatprep.subr.mxu0 0.0
  %676 = vmatpush1.msra.mxu0 0.0
  %677 = vmatprep.mubr.f32.mxu0 0.0
  %678 = vmatmul.mubr.f32.gmra.mrb[0].mxu0 %v471
  %v679 = vpop.f32.mrb[0].mxu0
  %v680 = vadd.f32 %v463, %v679
  %v681 = vpop.f32.mrb[0].mxu0
  %682 = vdwg.mxu0
  %v683 = vadd.f32 %v467, %v540
  %v684 = vxor.u32 %v683, 2147483648
  %v685 = vmul.f32 %v684, 1.442695
  %v686 = vpow.pop %v685
  %v687 = vadd.f32 %v686, 1.0
  %v688 = vrcp.pop %v687
  %v689 = vmul.f32 1.0, %v688
  %v690 = vadd.f32 %v468, %v610
  %v691 = vxor.u32 %v690, 2147483648
  %v692 = vmul.f32 %v691, 1.442695
  %v693 = vpow.pop %v692
  %v694 = vadd.f32 %v693, 1.0
  %v695 = vrcp.pop %v694
  %v696 = vmul.f32 1.0, %v695
  %v697 = vmul.f32 %v689, %v680
  %v698 = vadd.f32 %v469, %v697
  %v699 = vtanh.pop %v698
  %v700 = vsub.f32 1.0, %v696
  %v701 = vmul.f32 %v700, %v699
  %v702 = vmul.f32 %v696, 0.0
  %v703 = vadd.f32 %v701, %v702
  %vm704 = vcmp.eq.s32.totalorder %v466, 0
  %v705 = vsel %vm704, 1, 0
  %706 = vset.pattern.permute.xlu0 0
  %707 = vperm.xlu0 %706, %v705
  %v708 = vpop.permute.xlu0 %707
  %vm709 = vcmp.eq.s32.totalorder %v708, 1
  %v710 = vsel %vm709, %v703, 0.0
  %s711 = scalar_lea.vmem [#allocation2], 8
  %v712 = vld [vmem:[%s711] sm:$0xff]
  %s713 = scalar_lea.vmem [#allocation3], 8
  %v714 = vld [vmem:[%s713] sm:$0xff]
  %s715 = scalar_lea.vmem [#allocation4], 8
  %v716 = vld [vmem:[%s715] sm:$0xff]
  %v718 = vsel %vm60, %v703, 0
  %720 = vmatprep.subr.mxu0 0.0
  %721 = vmatpush1.msra.mxu0 %v446
  %722 = vmatprep.subr.mxu0 0.0
  %723 = vmatpush1.msra.mxu0 %v447
  %724 = vmatprep.subr.mxu0 0.0
  %725 = vmatpush1.msra.mxu0 %v448
  %726 = vmatprep.subr.mxu0 0.0
  %727 = vmatpush1.msra.mxu0 %v449
  %728 = vmatprep.subr.mxu0 0.0
  %729 = vmatpush1.msra.mxu0 0.0
  %730 = vmatprep.subr.mxu0 0.0
  %731 = vmatpush1.msra.mxu0 0.0
  %732 = vmatprep.subr.mxu0 0.0
  %733 = vmatpush1.msra.mxu0 0.0
  %734 = vmatprep.subr.mxu0 0.0
  %735 = vmatpush1.msra.mxu0 0.0
  %736 = vmatprep.subr.mxu0 0.0
  %737 = vmatpush1.msra.mxu0 0.0
  %738 = vmatprep.subr.mxu0 0.0
  %739 = vmatpush1.msra.mxu0 0.0
  %740 = vmatprep.subr.mxu0 0.0
  %741 = vmatpush1.msra.mxu0 0.0
  %742 = vmatprep.subr.mxu0 0.0
  %743 = vmatpush1.msra.mxu0 0.0
  %744 = vmatprep.subr.mxu0 0.0
  %745 = vmatpush1.msra.mxu0 0.0
  %746 = vmatprep.subr.mxu0 0.0
  %747 = vmatpush1.msra.mxu0 0.0
  %748 = vmatprep.subr.mxu0 0.0
  %749 = vmatpush1.msra.mxu0 0.0
  %750 = vmatprep.subr.mxu0 0.0
  %751 = vmatpush1.msra.mxu0 0.0
  %752 = vmatprep.subr.mxu0 0.0
  %753 = vmatpush1.msra.mxu0 0.0
  %754 = vmatprep.subr.mxu0 0.0
  %755 = vmatpush1.msra.mxu0 0.0
  %756 = vmatprep.subr.mxu0 0.0
  %757 = vmatpush1.msra.mxu0 0.0
  %758 = vmatprep.subr.mxu0 0.0
  %759 = vmatpush1.msra.mxu0 0.0
  %760 = vmatprep.subr.mxu0 0.0
  %761 = vmatpush1.msra.mxu0 0.0
  %762 = vmatprep.subr.mxu0 0.0
  %763 = vmatpush1.msra.mxu0 0.0
  %764 = vmatprep.subr.mxu0 0.0
  %765 = vmatpush1.msra.mxu0 0.0
  %766 = vmatprep.subr.mxu0 0.0
  %767 = vmatpush1.msra.mxu0 0.0
  %768 = vmatprep.subr.mxu0 0.0
  %769 = vmatpush1.msra.mxu0 0.0
  %770 = vmatprep.subr.mxu0 0.0
  %771 = vmatpush1.msra.mxu0 0.0
  %772 = vmatprep.subr.mxu0 0.0
  %773 = vmatpush1.msra.mxu0 0.0
  %774 = vmatprep.subr.mxu0 0.0
  %775 = vmatpush1.msra.mxu0 0.0
  %776 = vmatprep.subr.mxu0 0.0
  %777 = vmatpush1.msra.mxu0 0.0
  %778 = vmatprep.subr.mxu0 0.0
  %779 = vmatpush1.msra.mxu0 0.0
  %780 = vmatprep.subr.mxu0 0.0
  %781 = vmatpush1.msra.mxu0 0.0
  %782 = vmatprep.subr.mxu0 0.0
  %783 = vmatpush1.msra.mxu0 0.0
  %784 = vmatprep.mubr.f32.mxu0 0.0
  %785 = vmatmul.mubr.f32.gmra.mrb[0].mxu0 %v718
  %v786 = vpop.f32.mrb[0].mxu0
  %v787 = vadd.f32 0.0, %v786
  %v788 = vpop.f32.mrb[0].mxu0
  %789 = vdwg.mxu0
  %790 = vmatprep.subr.mxu0 0.0
  %791 = vmatpush1.msra.mxu0 %v450
  %792 = vmatprep.subr.mxu0 0.0
  %793 = vmatpush1.msra.mxu0 %v451
  %794 = vmatprep.subr.mxu0 0.0
  %795 = vmatpush1.msra.mxu0 %v452
  %796 = vmatprep.subr.mxu0 0.0
  %797 = vmatpush1.msra.mxu0 %v453
  %798 = vmatprep.subr.mxu0 0.0
  %799 = vmatpush1.msra.mxu0 0.0
  %800 = vmatprep.subr.mxu0 0.0
  %801 = vmatpush1.msra.mxu0 0.0
  %802 = vmatprep.subr.mxu0 0.0
  %803 = vmatpush1.msra.mxu0 0.0
  %804 = vmatprep.subr.mxu0 0.0
  %805 = vmatpush1.msra.mxu0 0.0
  %806 = vmatprep.subr.mxu0 0.0
  %807 = vmatpush1.msra.mxu0 0.0
  %808 = vmatprep.subr.mxu0 0.0
  %809 = vmatpush1.msra.mxu0 0.0
  %810 = vmatprep.subr.mxu0 0.0
  %811 = vmatpush1.msra.mxu0 0.0
  %812 = vmatprep.subr.mxu0 0.0
  %813 = vmatpush1.msra.mxu0 0.0
  %814 = vmatprep.subr.mxu0 0.0
  %815 = vmatpush1.msra.mxu0 0.0
  %816 = vmatprep.subr.mxu0 0.0
  %817 = vmatpush1.msra.mxu0 0.0
  %818 = vmatprep.subr.mxu0 0.0
  %819 = vmatpush1.msra.mxu0 0.0
  %820 = vmatprep.subr.mxu0 0.0
  %821 = vmatpush1.msra.mxu0 0.0
  %822 = vmatprep.subr.mxu0 0.0
  %823 = vmatpush1.msra.mxu0 0.0
  %824 = vmatprep.subr.mxu0 0.0
  %825 = vmatpush1.msra.mxu0 0.0
  %826 = vmatprep.subr.mxu0 0.0
  %827 = vmatpush1.msra.mxu0 0.0
  %828 = vmatprep.subr.mxu0 0.0
  %829 = vmatpush1.msra.mxu0 0.0
  %830 = vmatprep.subr.mxu0 0.0
  %831 = vmatpush1.msra.mxu0 0.0
  %832 = vmatprep.subr.mxu0 0.0
  %833 = vmatpush1.msra.mxu0 0.0
  %834 = vmatprep.subr.mxu0 0.0
  %835 = vmatpush1.msra.mxu0 0.0
  %836 = vmatprep.subr.mxu0 0.0
  %837 = vmatpush1.msra.mxu0 0.0
  %838 = vmatprep.subr.mxu0 0.0
  %839 = vmatpush1.msra.mxu0 0.0
  %840 = vmatprep.subr.mxu0 0.0
  %841 = vmatpush1.msra.mxu0 0.0
  %842 = vmatprep.subr.mxu0 0.0
  %843 = vmatpush1.msra.mxu0 0.0
  %844 = vmatprep.subr.mxu0 0.0
  %845 = vmatpush1.msra.mxu0 0.0
  %846 = vmatprep.subr.mxu0 0.0
  %847 = vmatpush1.msra.mxu0 0.0
  %848 = vmatprep.subr.mxu0 0.0
  %849 = vmatpush1.msra.mxu0 0.0
  %850 = vmatprep.subr.mxu0 0.0
  %851 = vmatpush1.msra.mxu0 0.0
  %852 = vmatprep.subr.mxu0 0.0
  %853 = vmatpush1.msra.mxu0 0.0
  %854 = vmatprep.mubr.f32.mxu0 0.0
  %855 = vmatmul.mubr.f32.gmra.mrb[0].mxu0 %v718
  %v856 = vpop.f32.mrb[0].mxu0
  %v857 = vadd.f32 0.0, %v856
  %v858 = vpop.f32.mrb[0].mxu0
  %859 = vdwg.mxu0
  %860 = vmatprep.subr.mxu0 0.0
  %861 = vmatpush1.msra.mxu0 %v454
  %862 = vmatprep.subr.mxu0 0.0
  %863 = vmatpush1.msra.mxu0 %v455
  %864 = vmatprep.subr.mxu0 0.0
  %865 = vmatpush1.msra.mxu0 %v456
  %866 = vmatprep.subr.mxu0 0.0
  %867 = vmatpush1.msra.mxu0 %v457
  %868 = vmatprep.subr.mxu0 0.0
  %869 = vmatpush1.msra.mxu0 0.0
  %870 = vmatprep.subr.mxu0 0.0
  %871 = vmatpush1.msra.mxu0 0.0
  %872 = vmatprep.subr.mxu0 0.0
  %873 = vmatpush1.msra.mxu0 0.0
  %874 = vmatprep.subr.mxu0 0.0
  %875 = vmatpush1.msra.mxu0 0.0
  %876 = vmatprep.subr.mxu0 0.0
  %877 = vmatpush1.msra.mxu0 0.0
  %878 = vmatprep.subr.mxu0 0.0
  %879 = vmatpush1.msra.mxu0 0.0
  %880 = vmatprep.subr.mxu0 0.0
  %881 = vmatpush1.msra.mxu0 0.0
  %882 = vmatprep.subr.mxu0 0.0
  %883 = vmatpush1.msra.mxu0 0.0
  %884 = vmatprep.subr.mxu0 0.0
  %885 = vmatpush1.msra.mxu0 0.0
  %886 = vmatprep.subr.mxu0 0.0
  %887 = vmatpush1.msra.mxu0 0.0
  %888 = vmatprep.subr.mxu0 0.0
  %889 = vmatpush1.msra.mxu0 0.0
  %890 = vmatprep.subr.mxu0 0.0
  %891 = vmatpush1.msra.mxu0 0.0
  %892 = vmatprep.subr.mxu0 0.0
  %893 = vmatpush1.msra.mxu0 0.0
  %894 = vmatprep.subr.mxu0 0.0
  %895 = vmatpush1.msra.mxu0 0.0
  %896 = vmatprep.subr.mxu0 0.0
  %897 = vmatpush1.msra.mxu0 0.0
  %898 = vmatprep.subr.mxu0 0.0
  %899 = vmatpush1.msra.mxu0 0.0
  %900 = vmatprep.subr.mxu0 0.0
  %901 = vmatpush1.msra.mxu0 0.0
  %902 = vmatprep.subr.mxu0 0.0
  %903 = vmatpush1.msra.mxu0 0.0
  %904 = vmatprep.subr.mxu0 0.0
  %905 = vmatpush1.msra.mxu0 0.0
  %906 = vmatprep.subr.mxu0 0.0
  %907 = vmatpush1.msra.mxu0 0.0
  %908 = vmatprep.subr.mxu0 0.0
  %909 = vmatpush1.msra.mxu0 0.0
  %910 = vmatprep.subr.mxu0 0.0
  %911 = vmatpush1.msra.mxu0 0.0
  %912 = vmatprep.subr.mxu0 0.0
  %913 = vmatpush1.msra.mxu0 0.0
  %914 = vmatprep.subr.mxu0 0.0
  %915 = vmatpush1.msra.mxu0 0.0
  %916 = vmatprep.subr.mxu0 0.0
  %917 = vmatpush1.msra.mxu0 0.0
  %918 = vmatprep.subr.mxu0 0.0
  %919 = vmatpush1.msra.mxu0 0.0
  %920 = vmatprep.subr.mxu0 0.0
  %921 = vmatpush1.msra.mxu0 0.0
  %922 = vmatprep.subr.mxu0 0.0
  %923 = vmatpush1.msra.mxu0 0.0
  %924 = vmatprep.mubr.f32.mxu0 0.0
  %925 = vmatmul.mubr.f32.gmra.mrb[0].mxu0 %v718
  %v926 = vpop.f32.mrb[0].mxu0
  %v927 = vadd.f32 %v463, %v926
  %v928 = vpop.f32.mrb[0].mxu0
  %929 = vdwg.mxu0
  %v930 = vadd.f32 %v712, %v787
  %v931 = vxor.u32 %v930, 2147483648
  %v932 = vmul.f32 %v931, 1.442695
  %v933 = vpow.pop %v932
  %v934 = vadd.f32 %v933, 1.0
  %v935 = vrcp.pop %v934
  %v936 = vmul.f32 1.0, %v935
  %v937 = vadd.f32 %v714, %v857
  %v938 = vxor.u32 %v937, 2147483648
  %v939 = vmul.f32 %v938, 1.442695
  %v940 = vpow.pop %v939
  %v941 = vadd.f32 %v940, 1.0
  %v942 = vrcp.pop %v941
  %v943 = vmul.f32 1.0, %v942
  %v944 = vmul.f32 %v936, %v927
  %v945 = vadd.f32 %v716, %v944
  %v946 = vtanh.pop %v945
  %v947 = vsub.f32 1.0, %v943
  %v948 = vmul.f32 %v947, %v946
  %v949 = vmul.f32 %v943, %v703
  %v950 = vadd.f32 %v948, %v949
  %vm951 = vcmp.eq.s32.totalorder %v466, 1
  %v952 = vsel %vm951, 1, 0
  %953 = vset.pattern.permute.xlu0 0
  %954 = vperm.xlu0 %953, %v952
  %v955 = vpop.permute.xlu0 %954
  %vm956 = vcmp.eq.s32.totalorder %v955, 1
  %v957 = vsel %vm956, %v950, %v710
  %s958 = scalar_lea.vmem [#allocation2], 16
  %v959 = vld [vmem:[%s958] sm:$0xff]
  %s960 = scalar_lea.vmem [#allocation3], 16
  %v961 = vld [vmem:[%s960] sm:$0xff]
  %s962 = scalar_lea.vmem [#allocation4], 16
  %v963 = vld [vmem:[%s962] sm:$0xff]
  %v965 = vsel %vm60, %v950, 0
  %967 = vmatprep.subr.mxu0 0.0
  %968 = vmatpush1.msra.mxu0 %v446
  %969 = vmatprep.subr.mxu0 0.0
  %970 = vmatpush1.msra.mxu0 %v447
  %971 = vmatprep.subr.mxu0 0.0
  %972 = vmatpush1.msra.mxu0 %v448
  %973 = vmatprep.subr.mxu0 0.0
  %974 = vmatpush1.msra.mxu0 %v449
  %975 = vmatprep.subr.mxu0 0.0
  %976 = vmatpush1.msra.mxu0 0.0
  %977 = vmatprep.subr.mxu0 0.0
  %978 = vmatpush1.msra.mxu0 0.0
  %979 = vmatprep.subr.mxu0 0.0
  %980 = vmatpush1.msra.mxu0 0.0
  %981 = vmatprep.subr.mxu0 0.0
  %982 = vmatpush1.msra.mxu0 0.0
  %983 = vmatprep.subr.mxu0 0.0
  %984 = vmatpush1.msra.mxu0 0.0
  %985 = vmatprep.subr.mxu0 0.0
  %986 = vmatpush1.msra.mxu0 0.0
  %987 = vmatprep.subr.mxu0 0.0
  %988 = vmatpush1.msra.mxu0 0.0
  %989 = vmatprep.subr.mxu0 0.0
  %990 = vmatpush1.msra.mxu0 0.0
  %991 = vmatprep.subr.mxu0 0.0
  %992 = vmatpush1.msra.mxu0 0.0
  %993 = vmatprep.subr.mxu0 0.0
  %994 = vmatpush1.msra.mxu0 0.0
  %995 = vmatprep.subr.mxu0 0.0
  %996 = vmatpush1.msra.mxu0 0.0
  %997 = vmatprep.subr.mxu0 0.0
  %998 = vmatpush1.msra.mxu0 0.0
  %999 = vmatprep.subr.mxu0 0.0
  %1000 = vmatpush1.msra.mxu0 0.0
  %1001 = vmatprep.subr.mxu0 0.0
  %1002 = vmatpush1.msra.mxu0 0.0
  %1003 = vmatprep.subr.mxu0 0.0
  %1004 = vmatpush1.msra.mxu0 0.0
  %1005 = vmatprep.subr.mxu0 0.0
  %1006 = vmatpush1.msra.mxu0 0.0
  %1007 = vmatprep.subr.mxu0 0.0
  %1008 = vmatpush1.msra.mxu0 0.0
  %1009 = vmatprep.subr.mxu0 0.0
  %1010 = vmatpush1.msra.mxu0 0.0
  %1011 = vmatprep.subr.mxu0 0.0
  %1012 = vmatpush1.msra.mxu0 0.0
  %1013 = vmatprep.subr.mxu0 0.0
  %1014 = vmatpush1.msra.mxu0 0.0
  %1015 = vmatprep.subr.mxu0 0.0
  %1016 = vmatpush1.msra.mxu0 0.0
  %1017 = vmatprep.subr.mxu0 0.0
  %1018 = vmatpush1.msra.mxu0 0.0
  %1019 = vmatprep.subr.mxu0 0.0
  %1020 = vmatpush1.msra.mxu0 0.0
  %1021 = vmatprep.subr.mxu0 0.0
  %1022 = vmatpush1.msra.mxu0 0.0
  %1023 = vmatprep.subr.mxu0 0.0
  %1024 = vmatpush1.msra.mxu0 0.0
  %1025 = vmatprep.subr.mxu0 0.0
  %1026 = vmatpush1.msra.mxu0 0.0
  %1027 = vmatprep.subr.mxu0 0.0
  %1028 = vmatpush1.msra.mxu0 0.0
  %1029 = vmatprep.subr.mxu0 0.0
  %1030 = vmatpush1.msra.mxu0 0.0
  %1031 = vmatprep.mubr.f32.mxu0 0.0
  %1032 = vmatmul.mubr.f32.gmra.mrb[0].mxu0 %v965
  %v1033 = vpop.f32.mrb[0].mxu0
  %v1034 = vadd.f32 0.0, %v1033
  %v1035 = vpop.f32.mrb[0].mxu0
  %1036 = vdwg.mxu0
  %1037 = vmatprep.subr.mxu0 0.0
  %1038 = vmatpush1.msra.mxu0 %v450
  %1039 = vmatprep.subr.mxu0 0.0
  %1040 = vmatpush1.msra.mxu0 %v451
  %1041 = vmatprep.subr.mxu0 0.0
  %1042 = vmatpush1.msra.mxu0 %v452
  %1043 = vmatprep.subr.mxu0 0.0
  %1044 = vmatpush1.msra.mxu0 %v453
  %1045 = vmatprep.subr.mxu0 0.0
  %1046 = vmatpush1.msra.mxu0 0.0
  %1047 = vmatprep.subr.mxu0 0.0
  %1048 = vmatpush1.msra.mxu0 0.0
  %1049 = vmatprep.subr.mxu0 0.0
  %1050 = vmatpush1.msra.mxu0 0.0
  %1051 = vmatprep.subr.mxu0 0.0
  %1052 = vmatpush1.msra.mxu0 0.0
  %1053 = vmatprep.subr.mxu0 0.0
  %1054 = vmatpush1.msra.mxu0 0.0
  %1055 = vmatprep.subr.mxu0 0.0
  %1056 = vmatpush1.msra.mxu0 0.0
  %1057 = vmatprep.subr.mxu0 0.0
  %1058 = vmatpush1.msra.mxu0 0.0
  %1059 = vmatprep.subr.mxu0 0.0
  %1060 = vmatpush1.msra.mxu0 0.0
  %1061 = vmatprep.subr.mxu0 0.0
  %1062 = vmatpush1.msra.mxu0 0.0
  %1063 = vmatprep.subr.mxu0 0.0
  %1064 = vmatpush1.msra.mxu0 0.0
  %1065 = vmatprep.subr.mxu0 0.0
  %1066 = vmatpush1.msra.mxu0 0.0
  %1067 = vmatprep.subr.mxu0 0.0
  %1068 = vmatpush1.msra.mxu0 0.0
  %1069 = vmatprep.subr.mxu0 0.0
  %1070 = vmatpush1.msra.mxu0 0.0
  %1071 = vmatprep.subr.mxu0 0.0
  %1072 = vmatpush1.msra.mxu0 0.0
  %1073 = vmatprep.subr.mxu0 0.0
  %1074 = vmatpush1.msra.mxu0 0.0
  %1075 = vmatprep.subr.mxu0 0.0
  %1076 = vmatpush1.msra.mxu0 0.0
  %1077 = vmatprep.subr.mxu0 0.0
  %1078 = vmatpush1.msra.mxu0 0.0
  %1079 = vmatprep.subr.mxu0 0.0
  %1080 = vmatpush1.msra.mxu0 0.0
  %1081 = vmatprep.subr.mxu0 0.0
  %1082 = vmatpush1.msra.mxu0 0.0
  %1083 = vmatprep.subr.mxu0 0.0
  %1084 = vmatpush1.msra.mxu0 0.0
  %1085 = vmatprep.subr.mxu0 0.0
  %1086 = vmatpush1.msra.mxu0 0.0
  %1087 = vmatprep.subr.mxu0 0.0
  %1088 = vmatpush1.msra.mxu0 0.0
  %1089 = vmatprep.subr.mxu0 0.0
  %1090 = vmatpush1.msra.mxu0 0.0
  %1091 = vmatprep.subr.mxu0 0.0
  %1092 = vmatpush1.msra.mxu0 0.0
  %1093 = vmatprep.subr.mxu0 0.0
  %1094 = vmatpush1.msra.mxu0 0.0
  %1095 = vmatprep.subr.mxu0 0.0
  %1096 = vmatpush1.msra.mxu0 0.0
  %1097 = vmatprep.subr.mxu0 0.0
  %1098 = vmatpush1.msra.mxu0 0.0
  %1099 = vmatprep.subr.mxu0 0.0
  %1100 = vmatpush1.msra.mxu0 0.0
  %1101 = vmatprep.mubr.f32.mxu0 0.0
  %1102 = vmatmul.mubr.f32.gmra.mrb[0].mxu0 %v965
  %v1103 = vpop.f32.mrb[0].mxu0
  %v1104 = vadd.f32 0.0, %v1103
  %v1105 = vpop.f32.mrb[0].mxu0
  %1106 = vdwg.mxu0
  %1107 = vmatprep.subr.mxu0 0.0
  %1108 = vmatpush1.msra.mxu0 %v454
  %1109 = vmatprep.subr.mxu0 0.0
  %1110 = vmatpush1.msra.mxu0 %v455
  %1111 = vmatprep.subr.mxu0 0.0
  %1112 = vmatpush1.msra.mxu0 %v456
  %1113 = vmatprep.subr.mxu0 0.0
  %1114 = vmatpush1.msra.mxu0 %v457
  %1115 = vmatprep.subr.mxu0 0.0
  %1116 = vmatpush1.msra.mxu0 0.0
  %1117 = vmatprep.subr.mxu0 0.0
  %1118 = vmatpush1.msra.mxu0 0.0
  %1119 = vmatprep.subr.mxu0 0.0
  %1120 = vmatpush1.msra.mxu0 0.0
  %1121 = vmatprep.subr.mxu0 0.0
  %1122 = vmatpush1.msra.mxu0 0.0
  %1123 = vmatprep.subr.mxu0 0.0
  %1124 = vmatpush1.msra.mxu0 0.0
  %1125 = vmatprep.subr.mxu0 0.0
  %1126 = vmatpush1.msra.mxu0 0.0
  %1127 = vmatprep.subr.mxu0 0.0
  %1128 = vmatpush1.msra.mxu0 0.0
  %1129 = vmatprep.subr.mxu0 0.0
  %1130 = vmatpush1.msra.mxu0 0.0
  %1131 = vmatprep.subr.mxu0 0.0
  %1132 = vmatpush1.msra.mxu0 0.0
  %1133 = vmatprep.subr.mxu0 0.0
  %1134 = vmatpush1.msra.mxu0 0.0
  %1135 = vmatprep.subr.mxu0 0.0
  %1136 = vmatpush1.msra.mxu0 0.0
  %1137 = vmatprep.subr.mxu0 0.0
  %1138 = vmatpush1.msra.mxu0 0.0
  %1139 = vmatprep.subr.mxu0 0.0
  %1140 = vmatpush1.msra.mxu0 0.0
  %1141 = vmatprep.subr.mxu0 0.0
  %1142 = vmatpush1.msra.mxu0 0.0
  %1143 = vmatprep.subr.mxu0 0.0
  %1144 = vmatpush1.msra.mxu0 0.0
  %1145 = vmatprep.subr.mxu0 0.0
  %1146 = vmatpush1.msra.mxu0 0.0
  %1147 = vmatprep.subr.mxu0 0.0
  %1148 = vmatpush1.msra.mxu0 0.0
  %1149 = vmatprep.subr.mxu0 0.0
  %1150 = vmatpush1.msra.mxu0 0.0
  %1151 = vmatprep.subr.mxu0 0.0
  %1152 = vmatpush1.msra.mxu0 0.0
  %1153 = vmatprep.subr.mxu0 0.0
  %1154 = vmatpush1.msra.mxu0 0.0
  %1155 = vmatprep.subr.mxu0 0.0
  %1156 = vmatpush1.msra.mxu0 0.0
  %1157 = vmatprep.subr.mxu0 0.0
  %1158 = vmatpush1.msra.mxu0 0.0
  %1159 = vmatprep.subr.mxu0 0.0
  %1160 = vmatpush1.msra.mxu0 0.0
  %1161 = vmatprep.subr.mxu0 0.0
  %1162 = vmatpush1.msra.mxu0 0.0
  %1163 = vmatprep.subr.mxu0 0.0
  %1164 = vmatpush1.msra.mxu0 0.0
  %1165 = vmatprep.subr.mxu0 0.0
  %1166 = vmatpush1.msra.mxu0 0.0
  %1167 = vmatprep.subr.mxu0 0.0
  %1168 = vmatpush1.msra.mxu0 0.0
  %1169 = vmatprep.subr.mxu0 0.0
  %1170 = vmatpush1.msra.mxu0 0.0
  %1171 = vmatprep.mubr.f32.mxu0 0.0
  %1172 = vmatmul.mubr.f32.gmra.mrb[0].mxu0 %v965
  %v1173 = vpop.f32.mrb[0].mxu0
  %v1174 = vadd.f32 %v463, %v1173
  %v1175 = vpop.f32.mrb[0].mxu0
  %1176 = vdwg.mxu0
  %v1177 = vadd.f32 %v959, %v1034
  %v1178 = vxor.u32 %v1177, 2147483648
  %v1179 = vmul.f32 %v1178, 1.442695
  %v1180 = vpow.pop %v1179
  %v1181 = vadd.f32 %v1180, 1.0
  %v1182 = vrcp.pop %v1181
  %v1183 = vmul.f32 1.0, %v1182
  %v1184 = vadd.f32 %v961, %v1104
  %v1185 = vxor.u32 %v1184, 2147483648
  %v1186 = vmul.f32 %v1185, 1.442695
  %v1187 = vpow.pop %v1186
  %v1188 = vadd.f32 %v1187, 1.0
  %v1189 = vrcp.pop %v1188
  %v1190 = vmul.f32 1.0, %v1189
  %v1191 = vmul.f32 %v1183, %v1174
  %v1192 = vadd.f32 %v963, %v1191
  %v1193 = vtanh.pop %v1192
  %v1194 = vsub.f32 1.0, %v1190
  %v1195 = vmul.f32 %v1194, %v1193
  %v1196 = vmul.f32 %v1190, %v950
  %v1197 = vadd.f32 %v1195, %v1196
  %vm1198 = vcmp.eq.s32.totalorder %v466, 2
  %v1199 = vsel %vm1198, 1, 0
  %1200 = vset.pattern.permute.xlu0 0
  %1201 = vperm.xlu0 %1200, %v1199
  %v1202 = vpop.permute.xlu0 %1201
  %vm1203 = vcmp.eq.s32.totalorder %v1202, 1
  %v1204 = vsel %vm1203, %v1197, %v957
  %s1205 = scalar_lea.vmem [#allocation2], 24
  %v1206 = vld [vmem:[%s1205] sm:$0xff]
  %s1207 = scalar_lea.vmem [#allocation3], 24
  %v1208 = vld [vmem:[%s1207] sm:$0xff]
  %s1209 = scalar_lea.vmem [#allocation4], 24
  %v1210 = vld [vmem:[%s1209] sm:$0xff]
  %v1212 = vsel %vm60, %v1197, 0
  %1214 = vmatprep.subr.mxu0 0.0
  %1215 = vmatpush1.msra.mxu0 %v446
  %1216 = vmatprep.subr.mxu0 0.0
  %1217 = vmatpush1.msra.mxu0 %v447
  %1218 = vmatprep.subr.mxu0 0.0
  %1219 = vmatpush1.msra.mxu0 %v448
  %1220 = vmatprep.subr.mxu0 0.0
  %1221 = vmatpush1.msra.mxu0 %v449
  %1222 = vmatprep.subr.mxu0 0.0
  %1223 = vmatpush1.msra.mxu0 0.0
  %1224 = vmatprep.subr.mxu0 0.0
  %1225 = vmatpush1.msra.mxu0 0.0
  %1226 = vmatprep.subr.mxu0 0.0
  %1227 = vmatpush1.msra.mxu0 0.0
  %1228 = vmatprep.subr.mxu0 0.0
  %1229 = vmatpush1.msra.mxu0 0.0
  %1230 = vmatprep.subr.mxu0 0.0
  %1231 = vmatpush1.msra.mxu0 0.0
  %1232 = vmatprep.subr.mxu0 0.0
  %1233 = vmatpush1.msra.mxu0 0.0
  %1234 = vmatprep.subr.mxu0 0.0
  %1235 = vmatpush1.msra.mxu0 0.0
  %1236 = vmatprep.subr.mxu0 0.0
  %1237 = vmatpush1.msra.mxu0 0.0
  %1238 = vmatprep.subr.mxu0 0.0
  %1239 = vmatpush1.msra.mxu0 0.0
  %1240 = vmatprep.subr.mxu0 0.0
  %1241 = vmatpush1.msra.mxu0 0.0
  %1242 = vmatprep.subr.mxu0 0.0
  %1243 = vmatpush1.msra.mxu0 0.0
  %1244 = vmatprep.subr.mxu0 0.0
  %1245 = vmatpush1.msra.mxu0 0.0
  %1246 = vmatprep.subr.mxu0 0.0
  %1247 = vmatpush1.msra.mxu0 0.0
  %1248 = vmatprep.subr.mxu0 0.0
  %1249 = vmatpush1.msra.mxu0 0.0
  %1250 = vmatprep.subr.mxu0 0.0
  %1251 = vmatpush1.msra.mxu0 0.0
  %1252 = vmatprep.subr.mxu0 0.0
  %1253 = vmatpush1.msra.mxu0 0.0
  %1254 = vmatprep.subr.mxu0 0.0
  %1255 = vmatpush1.msra.mxu0 0.0
  %1256 = vmatprep.subr.mxu0 0.0
  %1257 = vmatpush1.msra.mxu0 0.0
  %1258 = vmatprep.subr.mxu0 0.0
  %1259 = vmatpush1.msra.mxu0 0.0
  %1260 = vmatprep.subr.mxu0 0.0
  %1261 = vmatpush1.msra.mxu0 0.0
  %1262 = vmatprep.subr.mxu0 0.0
  %1263 = vmatpush1.msra.mxu0 0.0
  %1264 = vmatprep.subr.mxu0 0.0
  %1265 = vmatpush1.msra.mxu0 0.0
  %1266 = vmatprep.subr.mxu0 0.0
  %1267 = vmatpush1.msra.mxu0 0.0
  %1268 = vmatprep.subr.mxu0 0.0
  %1269 = vmatpush1.msra.mxu0 0.0
  %1270 = vmatprep.subr.mxu0 0.0
  %1271 = vmatpush1.msra.mxu0 0.0
  %1272 = vmatprep.subr.mxu0 0.0
  %1273 = vmatpush1.msra.mxu0 0.0
  %1274 = vmatprep.subr.mxu0 0.0
  %1275 = vmatpush1.msra.mxu0 0.0
  %1276 = vmatprep.subr.mxu0 0.0
  %1277 = vmatpush1.msra.mxu0 0.0
  %1278 = vmatprep.mubr.f32.mxu0 0.0
  %1279 = vmatmul.mubr.f32.gmra.mrb[0].mxu0 %v1212
  %v1280 = vpop.f32.mrb[0].mxu0
  %v1281 = vadd.f32 0.0, %v1280
  %v1282 = vpop.f32.mrb[0].mxu0
  %1283 = vdwg.mxu0
  %1284 = vmatprep.subr.mxu0 0.0
  %1285 = vmatpush1.msra.mxu0 %v450
  %1286 = vmatprep.subr.mxu0 0.0
  %1287 = vmatpush1.msra.mxu0 %v451
  %1288 = vmatprep.subr.mxu0 0.0
  %1289 = vmatpush1.msra.mxu0 %v452
  %1290 = vmatprep.subr.mxu0 0.0
  %1291 = vmatpush1.msra.mxu0 %v453
  %1292 = vmatprep.subr.mxu0 0.0
  %1293 = vmatpush1.msra.mxu0 0.0
  %1294 = vmatprep.subr.mxu0 0.0
  %1295 = vmatpush1.msra.mxu0 0.0
  %1296 = vmatprep.subr.mxu0 0.0
  %1297 = vmatpush1.msra.mxu0 0.0
  %1298 = vmatprep.subr.mxu0 0.0
  %1299 = vmatpush1.msra.mxu0 0.0
  %1300 = vmatprep.subr.mxu0 0.0
  %1301 = vmatpush1.msra.mxu0 0.0
  %1302 = vmatprep.subr.mxu0 0.0
  %1303 = vmatpush1.msra.mxu0 0.0
  %1304 = vmatprep.subr.mxu0 0.0
  %1305 = vmatpush1.msra.mxu0 0.0
  %1306 = vmatprep.subr.mxu0 0.0
  %1307 = vmatpush1.msra.mxu0 0.0
  %1308 = vmatprep.subr.mxu0 0.0
  %1309 = vmatpush1.msra.mxu0 0.0
  %1310 = vmatprep.subr.mxu0 0.0
  %1311 = vmatpush1.msra.mxu0 0.0
  %1312 = vmatprep.subr.mxu0 0.0
  %1313 = vmatpush1.msra.mxu0 0.0
  %1314 = vmatprep.subr.mxu0 0.0
  %1315 = vmatpush1.msra.mxu0 0.0
  %1316 = vmatprep.subr.mxu0 0.0
  %1317 = vmatpush1.msra.mxu0 0.0
  %1318 = vmatprep.subr.mxu0 0.0
  %1319 = vmatpush1.msra.mxu0 0.0
  %1320 = vmatprep.subr.mxu0 0.0
  %1321 = vmatpush1.msra.mxu0 0.0
  %1322 = vmatprep.subr.mxu0 0.0
  %1323 = vmatpush1.msra.mxu0 0.0
  %1324 = vmatprep.subr.mxu0 0.0
  %1325 = vmatpush1.msra.mxu0 0.0
  %1326 = vmatprep.subr.mxu0 0.0
  %1327 = vmatpush1.msra.mxu0 0.0
  %1328 = vmatprep.subr.mxu0 0.0
  %1329 = vmatpush1.msra.mxu0 0.0
  %1330 = vmatprep.subr.mxu0 0.0
  %1331 = vmatpush1.msra.mxu0 0.0
  %1332 = vmatprep.subr.mxu0 0.0
  %1333 = vmatpush1.msra.mxu0 0.0
  %1334 = vmatprep.subr.mxu0 0.0
  %1335 = vmatpush1.msra.mxu0 0.0
  %1336 = vmatprep.subr.mxu0 0.0
  %1337 = vmatpush1.msra.mxu0 0.0
  %1338 = vmatprep.subr.mxu0 0.0
  %1339 = vmatpush1.msra.mxu0 0.0
  %1340 = vmatprep.subr.mxu0 0.0
  %1341 = vmatpush1.msra.mxu0 0.0
  %1342 = vmatprep.subr.mxu0 0.0
  %1343 = vmatpush1.msra.mxu0 0.0
  %1344 = vmatprep.subr.mxu0 0.0
  %1345 = vmatpush1.msra.mxu0 0.0
  %1346 = vmatprep.subr.mxu0 0.0
  %1347 = vmatpush1.msra.mxu0 0.0
  %1348 = vmatprep.mubr.f32.mxu0 0.0
  %1349 = vmatmul.mubr.f32.gmra.mrb[0].mxu0 %v1212
  %v1350 = vpop.f32.mrb[0].mxu0
  %v1351 = vadd.f32 0.0, %v1350
  %v1352 = vpop.f32.mrb[0].mxu0
  %1353 = vdwg.mxu0
  %1354 = vmatprep.subr.mxu0 0.0
  %1355 = vmatpush1.msra.mxu0 %v454
  %1356 = vmatprep.subr.mxu0 0.0
  %1357 = vmatpush1.msra.mxu0 %v455
  %1358 = vmatprep.subr.mxu0 0.0
  %1359 = vmatpush1.msra.mxu0 %v456
  %1360 = vmatprep.subr.mxu0 0.0
  %1361 = vmatpush1.msra.mxu0 %v457
  %1362 = vmatprep.subr.mxu0 0.0
  %1363 = vmatpush1.msra.mxu0 0.0
  %1364 = vmatprep.subr.mxu0 0.0
  %1365 = vmatpush1.msra.mxu0 0.0
  %1366 = vmatprep.subr.mxu0 0.0
  %1367 = vmatpush1.msra.mxu0 0.0
  %1368 = vmatprep.subr.mxu0 0.0
  %1369 = vmatpush1.msra.mxu0 0.0
  %1370 = vmatprep.subr.mxu0 0.0
  %1371 = vmatpush1.msra.mxu0 0.0
  %1372 = vmatprep.subr.mxu0 0.0
  %1373 = vmatpush1.msra.mxu0 0.0
  %1374 = vmatprep.subr.mxu0 0.0
  %1375 = vmatpush1.msra.mxu0 0.0
  %1376 = vmatprep.subr.mxu0 0.0
  %1377 = vmatpush1.msra.mxu0 0.0
  %1378 = vmatprep.subr.mxu0 0.0
  %1379 = vmatpush1.msra.mxu0 0.0
  %1380 = vmatprep.subr.mxu0 0.0
  %1381 = vmatpush1.msra.mxu0 0.0
  %1382 = vmatprep.subr.mxu0 0.0
  %1383 = vmatpush1.msra.mxu0 0.0
  %1384 = vmatprep.subr.mxu0 0.0
  %1385 = vmatpush1.msra.mxu0 0.0
  %1386 = vmatprep.subr.mxu0 0.0
  %1387 = vmatpush1.msra.mxu0 0.0
  %1388 = vmatprep.subr.mxu0 0.0
  %1389 = vmatpush1.msra.mxu0 0.0
  %1390 = vmatprep.subr.mxu0 0.0
  %1391 = vmatpush1.msra.mxu0 0.0
  %1392 = vmatprep.subr.mxu0 0.0
  %1393 = vmatpush1.msra.mxu0 0.0
  %1394 = vmatprep.subr.mxu0 0.0
  %1395 = vmatpush1.msra.mxu0 0.0
  %1396 = vmatprep.subr.mxu0 0.0
  %1397 = vmatpush1.msra.mxu0 0.0
  %1398 = vmatprep.subr.mxu0 0.0
  %1399 = vmatpush1.msra.mxu0 0.0
  %1400 = vmatprep.subr.mxu0 0.0
  %1401 = vmatpush1.msra.mxu0 0.0
  %1402 = vmatprep.subr.mxu0 0.0
  %1403 = vmatpush1.msra.mxu0 0.0
  %1404 = vmatprep.subr.mxu0 0.0
  %1405 = vmatpush1.msra.mxu0 0.0
  %1406 = vmatprep.subr.mxu0 0.0
  %1407 = vmatpush1.msra.mxu0 0.0
  %1408 = vmatprep.subr.mxu0 0.0
  %1409 = vmatpush1.msra.mxu0 0.0
  %1410 = vmatprep.subr.mxu0 0.0
  %1411 = vmatpush1.msra.mxu0 0.0
  %1412 = vmatprep.subr.mxu0 0.0
  %1413 = vmatpush1.msra.mxu0 0.0
  %1414 = vmatprep.subr.mxu0 0.0
  %1415 = vmatpush1.msra.mxu0 0.0
  %1416 = vmatprep.subr.mxu0 0.0
  %1417 = vmatpush1.msra.mxu0 0.0
  %1418 = vmatprep.mubr.f32.mxu0 0.0
  %1419 = vmatmul.mubr.f32.gmra.mrb[0].mxu0 %v1212
  %v1420 = vpop.f32.mrb[0].mxu0
  %v1421 = vadd.f32 %v463, %v1420
  %v1422 = vpop.f32.mrb[0].mxu0
  %1423 = vdwg.mxu0
  %v1424 = vadd.f32 %v1206, %v1281
  %v1425 = vxor.u32 %v1424, 2147483648
  %v1426 = vmul.f32 %v1425, 1.442695
  %v1427 = vpow.pop %v1426
  %v1428 = vadd.f32 %v1427, 1.0
  %v1429 = vrcp.pop %v1428
  %v1430 = vmul.f32 1.0, %v1429
  %v1431 = vadd.f32 %v1208, %v1351
  %v1432 = vxor.u32 %v1431, 2147483648
  %v1433 = vmul.f32 %v1432, 1.442695
  %v1434 = vpow.pop %v1433
  %v1435 = vadd.f32 %v1434, 1.0
  %v1436 = vrcp.pop %v1435
  %v1437 = vmul.f32 1.0, %v1436
  %v1438 = vmul.f32 %v1430, %v1421
  %v1439 = vadd.f32 %v1210, %v1438
  %v1440 = vtanh.pop %v1439
  %v1441 = vsub.f32 1.0, %v1437
  %v1442 = vmul.f32 %v1441, %v1440
  %v1443 = vmul.f32 %v1437, %v1197
  %v1444 = vadd.f32 %v1442, %v1443
  %vm1445 = vcmp.eq.s32.totalorder %v466, 3
  %v1446 = vsel %vm1445, 1, 0
  %1447 = vset.pattern.permute.xlu0 0
  %1448 = vperm.xlu0 %1447, %v1446
  %v1449 = vpop.permute.xlu0 %1448
  %vm1450 = vcmp.eq.s32.totalorder %v1449, 1
  %v1451 = vsel %vm1450, %v1444, %v1204
  %s1452 = scalar_lea.vmem [#allocation2], 32
  %v1453 = vld [vmem:[%s1452] sm:$0xff]
  %s1454 = scalar_lea.vmem [#allocation3], 32
  %v1455 = vld [vmem:[%s1454] sm:$0xff]
  %s1456 = scalar_lea.vmem [#allocation4], 32
  %v1457 = vld [vmem:[%s1456] sm:$0xff]
  %v1459 = vsel %vm60, %v1444, 0
  %1461 = vmatprep.subr.mxu0 0.0
  %1462 = vmatpush1.msra.mxu0 %v446
  %1463 = vmatprep.subr.mxu0 0.0
  %1464 = vmatpush1.msra.mxu0 %v447
  %1465 = vmatprep.subr.mxu0 0.0
  %1466 = vmatpush1.msra.mxu0 %v448
  %1467 = vmatprep.subr.mxu0 0.0
  %1468 = vmatpush1.msra.mxu0 %v449
  %1469 = vmatprep.subr.mxu0 0.0
  %1470 = vmatpush1.msra.mxu0 0.0
  %1471 = vmatprep.subr.mxu0 0.0
  %1472 = vmatpush1.msra.mxu0 0.0
  %1473 = vmatprep.subr.mxu0 0.0
  %1474 = vmatpush1.msra.mxu0 0.0
  %1475 = vmatprep.subr.mxu0 0.0
  %1476 = vmatpush1.msra.mxu0 0.0
  %1477 = vmatprep.subr.mxu0 0.0
  %1478 = vmatpush1.msra.mxu0 0.0
  %1479 = vmatprep.subr.mxu0 0.0
  %1480 = vmatpush1.msra.mxu0 0.0
  %1481 = vmatprep.subr.mxu0 0.0
  %1482 = vmatpush1.msra.mxu0 0.0
  %1483 = vmatprep.subr.mxu0 0.0
  %1484 = vmatpush1.msra.mxu0 0.0
  %1485 = vmatprep.subr.mxu0 0.0
  %1486 = vmatpush1.msra.mxu0 0.0
  %1487 = vmatprep.subr.mxu0 0.0
  %1488 = vmatpush1.msra.mxu0 0.0
  %1489 = vmatprep.subr.mxu0 0.0
  %1490 = vmatpush1.msra.mxu0 0.0
  %1491 = vmatprep.subr.mxu0 0.0
  %1492 = vmatpush1.msra.mxu0 0.0
  %1493 = vmatprep.subr.mxu0 0.0
  %1494 = vmatpush1.msra.mxu0 0.0
  %1495 = vmatprep.subr.mxu0 0.0
  %1496 = vmatpush1.msra.mxu0 0.0
  %1497 = vmatprep.subr.mxu0 0.0
  %1498 = vmatpush1.msra.mxu0 0.0
  %1499 = vmatprep.subr.mxu0 0.0
  %1500 = vmatpush1.msra.mxu0 0.0
  %1501 = vmatprep.subr.mxu0 0.0
  %1502 = vmatpush1.msra.mxu0 0.0
  %1503 = vmatprep.subr.mxu0 0.0
  %1504 = vmatpush1.msra.mxu0 0.0
  %1505 = vmatprep.subr.mxu0 0.0
  %1506 = vmatpush1.msra.mxu0 0.0
  %1507 = vmatprep.subr.mxu0 0.0
  %1508 = vmatpush1.msra.mxu0 0.0
  %1509 = vmatprep.subr.mxu0 0.0
  %1510 = vmatpush1.msra.mxu0 0.0
  %1511 = vmatprep.subr.mxu0 0.0
  %1512 = vmatpush1.msra.mxu0 0.0
  %1513 = vmatprep.subr.mxu0 0.0
  %1514 = vmatpush1.msra.mxu0 0.0
  %1515 = vmatprep.subr.mxu0 0.0
  %1516 = vmatpush1.msra.mxu0 0.0
  %1517 = vmatprep.subr.mxu0 0.0
  %1518 = vmatpush1.msra.mxu0 0.0
  %1519 = vmatprep.subr.mxu0 0.0
  %1520 = vmatpush1.msra.mxu0 0.0
  %1521 = vmatprep.subr.mxu0 0.0
  %1522 = vmatpush1.msra.mxu0 0.0
  %1523 = vmatprep.subr.mxu0 0.0
  %1524 = vmatpush1.msra.mxu0 0.0
  %1525 = vmatprep.mubr.f32.mxu0 0.0
  %1526 = vmatmul.mubr.f32.gmra.mrb[0].mxu0 %v1459
  %v1527 = vpop.f32.mrb[0].mxu0
  %v1528 = vadd.f32 0.0, %v1527
  %v1529 = vpop.f32.mrb[0].mxu0
  %1530 = vdwg.mxu0
  %1531 = vmatprep.subr.mxu0 0.0
  %1532 = vmatpush1.msra.mxu0 %v450
  %1533 = vmatprep.subr.mxu0 0.0
  %1534 = vmatpush1.msra.mxu0 %v451
  %1535 = vmatprep.subr.mxu0 0.0
  %1536 = vmatpush1.msra.mxu0 %v452
  %1537 = vmatprep.subr.mxu0 0.0
  %1538 = vmatpush1.msra.mxu0 %v453
  %1539 = vmatprep.subr.mxu0 0.0
  %1540 = vmatpush1.msra.mxu0 0.0
  %1541 = vmatprep.subr.mxu0 0.0
  %1542 = vmatpush1.msra.mxu0 0.0
  %1543 = vmatprep.subr.mxu0 0.0
  %1544 = vmatpush1.msra.mxu0 0.0
  %1545 = vmatprep.subr.mxu0 0.0
  %1546 = vmatpush1.msra.mxu0 0.0
  %1547 = vmatprep.subr.mxu0 0.0
  %1548 = vmatpush1.msra.mxu0 0.0
  %1549 = vmatprep.subr.mxu0 0.0
  %1550 = vmatpush1.msra.mxu0 0.0
  %1551 = vmatprep.subr.mxu0 0.0
  %1552 = vmatpush1.msra.mxu0 0.0
  %1553 = vmatprep.subr.mxu0 0.0
  %1554 = vmatpush1.msra.mxu0 0.0
  %1555 = vmatprep.subr.mxu0 0.0
  %1556 = vmatpush1.msra.mxu0 0.0
  %1557 = vmatprep.subr.mxu0 0.0
  %1558 = vmatpush1.msra.mxu0 0.0
  %1559 = vmatprep.subr.mxu0 0.0
  %1560 = vmatpush1.msra.mxu0 0.0
  %1561 = vmatprep.subr.mxu0 0.0
  %1562 = vmatpush1.msra.mxu0 0.0
  %1563 = vmatprep.subr.mxu0 0.0
  %1564 = vmatpush1.msra.mxu0 0.0
  %1565 = vmatprep.subr.mxu0 0.0
  %1566 = vmatpush1.msra.mxu0 0.0
  %1567 = vmatprep.subr.mxu0 0.0
  %1568 = vmatpush1.msra.mxu0 0.0
  %1569 = vmatprep.subr.mxu0 0.0
  %1570 = vmatpush1.msra.mxu0 0.0
  %1571 = vmatprep.subr.mxu0 0.0
  %1572 = vmatpush1.msra.mxu0 0.0
  %1573 = vmatprep.subr.mxu0 0.0
  %1574 = vmatpush1.msra.mxu0 0.0
  %1575 = vmatprep.subr.mxu0 0.0
  %1576 = vmatpush1.msra.mxu0 0.0
  %1577 = vmatprep.subr.mxu0 0.0
  %1578 = vmatpush1.msra.mxu0 0.0
  %1579 = vmatprep.subr.mxu0 0.0
  %1580 = vmatpush1.msra.mxu0 0.0
  %1581 = vmatprep.subr.mxu0 0.0
  %1582 = vmatpush1.msra.mxu0 0.0
  %1583 = vmatprep.subr.mxu0 0.0
  %1584 = vmatpush1.msra.mxu0 0.0
  %1585 = vmatprep.subr.mxu0 0.0
  %1586 = vmatpush1.msra.mxu0 0.0
  %1587 = vmatprep.subr.mxu0 0.0
  %1588 = vmatpush1.msra.mxu0 0.0
  %1589 = vmatprep.subr.mxu0 0.0
  %1590 = vmatpush1.msra.mxu0 0.0
  %1591 = vmatprep.subr.mxu0 0.0
  %1592 = vmatpush1.msra.mxu0 0.0
  %1593 = vmatprep.subr.mxu0 0.0
  %1594 = vmatpush1.msra.mxu0 0.0
  %1595 = vmatprep.mubr.f32.mxu0 0.0
  %1596 = vmatmul.mubr.f32.gmra.mrb[0].mxu0 %v1459
  %v1597 = vpop.f32.mrb[0].mxu0
  %v1598 = vadd.f32 0.0, %v1597
  %v1599 = vpop.f32.mrb[0].mxu0
  %1600 = vdwg.mxu0
  %1601 = vmatprep.subr.mxu0 0.0
  %1602 = vmatpush1.msra.mxu0 %v454
  %1603 = vmatprep.subr.mxu0 0.0
  %1604 = vmatpush1.msra.mxu0 %v455
  %1605 = vmatprep.subr.mxu0 0.0
  %1606 = vmatpush1.msra.mxu0 %v456
  %1607 = vmatprep.subr.mxu0 0.0
  %1608 = vmatpush1.msra.mxu0 %v457
  %1609 = vmatprep.subr.mxu0 0.0
  %1610 = vmatpush1.msra.mxu0 0.0
  %1611 = vmatprep.subr.mxu0 0.0
  %1612 = vmatpush1.msra.mxu0 0.0
  %1613 = vmatprep.subr.mxu0 0.0
  %1614 = vmatpush1.msra.mxu0 0.0
  %1615 = vmatprep.subr.mxu0 0.0
  %1616 = vmatpush1.msra.mxu0 0.0
  %1617 = vmatprep.subr.mxu0 0.0
  %1618 = vmatpush1.msra.mxu0 0.0
  %1619 = vmatprep.subr.mxu0 0.0
  %1620 = vmatpush1.msra.mxu0 0.0
  %1621 = vmatprep.subr.mxu0 0.0
  %1622 = vmatpush1.msra.mxu0 0.0
  %1623 = vmatprep.subr.mxu0 0.0
  %1624 = vmatpush1.msra.mxu0 0.0
  %1625 = vmatprep.subr.mxu0 0.0
  %1626 = vmatpush1.msra.mxu0 0.0
  %1627 = vmatprep.subr.mxu0 0.0
  %1628 = vmatpush1.msra.mxu0 0.0
  %1629 = vmatprep.subr.mxu0 0.0
  %1630 = vmatpush1.msra.mxu0 0.0
  %1631 = vmatprep.subr.mxu0 0.0
  %1632 = vmatpush1.msra.mxu0 0.0
  %1633 = vmatprep.subr.mxu0 0.0
  %1634 = vmatpush1.msra.mxu0 0.0
  %1635 = vmatprep.subr.mxu0 0.0
  %1636 = vmatpush1.msra.mxu0 0.0
  %1637 = vmatprep.subr.mxu0 0.0
  %1638 = vmatpush1.msra.mxu0 0.0
  %1639 = vmatprep.subr.mxu0 0.0
  %1640 = vmatpush1.msra.mxu0 0.0
  %1641 = vmatprep.subr.mxu0 0.0
  %1642 = vmatpush1.msra.mxu0 0.0
  %1643 = vmatprep.subr.mxu0 0.0
  %1644 = vmatpush1.msra.mxu0 0.0
  %1645 = vmatprep.subr.mxu0 0.0
  %1646 = vmatpush1.msra.mxu0 0.0
  %1647 = vmatprep.subr.mxu0 0.0
  %1648 = vmatpush1.msra.mxu0 0.0
  %1649 = vmatprep.subr.mxu0 0.0
  %1650 = vmatpush1.msra.mxu0 0.0
  %1651 = vmatprep.subr.mxu0 0.0
  %1652 = vmatpush1.msra.mxu0 0.0
  %1653 = vmatprep.subr.mxu0 0.0
  %1654 = vmatpush1.msra.mxu0 0.0
  %1655 = vmatprep.subr.mxu0 0.0
  %1656 = vmatpush1.msra.mxu0 0.0
  %1657 = vmatprep.subr.mxu0 0.0
  %1658 = vmatpush1.msra.mxu0 0.0
  %1659 = vmatprep.subr.mxu0 0.0
  %1660 = vmatpush1.msra.mxu0 0.0
  %1661 = vmatprep.subr.mxu0 0.0
  %1662 = vmatpush1.msra.mxu0 0.0
  %1663 = vmatprep.subr.mxu0 0.0
  %1664 = vmatpush1.msra.mxu0 0.0
  %1665 = vmatprep.mubr.f32.mxu0 0.0
  %1666 = vmatmul.mubr.f32.gmra.mrb[0].mxu0 %v1459
  %v1667 = vpop.f32.mrb[0].mxu0
  %v1668 = vadd.f32 %v463, %v1667
  %v1669 = vpop.f32.mrb[0].mxu0
  %1670 = vdwg.mxu0
  %v1671 = vadd.f32 %v1453, %v1528
  %v1672 = vxor.u32 %v1671, 2147483648
  %v1673 = vmul.f32 %v1672, 1.442695
  %v1674 = vpow.pop %v1673
  %v1675 = vadd.f32 %v1674, 1.0
  %v1676 = vrcp.pop %v1675
  %v1677 = vmul.f32 1.0, %v1676
  %v1678 = vadd.f32 %v1455, %v1598
  %v1679 = vxor.u32 %v1678, 2147483648
  %v1680 = vmul.f32 %v1679, 1.442695
  %v1681 = vpow.pop %v1680
  %v1682 = vadd.f32 %v1681, 1.0
  %v1683 = vrcp.pop %v1682
  %v1684 = vmul.f32 1.0, %v1683
  %v1685 = vmul.f32 %v1677, %v1668
  %v1686 = vadd.f32 %v1457, %v1685
  %v1687 = vtanh.pop %v1686
  %v1688 = vsub.f32 1.0, %v1684
  %v1689 = vmul.f32 %v1688, %v1687
  %v1690 = vmul.f32 %v1684, %v1444
  %v1691 = vadd.f32 %v1689, %v1690
  %vm1692 = vcmp.eq.s32.totalorder %v466, 4
  %v1693 = vsel %vm1692, 1, 0
  %1694 = vset.pattern.permute.xlu0 0
  %1695 = vperm.xlu0 %1694, %v1693
  %v1696 = vpop.permute.xlu0 %1695
  %vm1697 = vcmp.eq.s32.totalorder %v1696, 1
  %v1698 = vsel %vm1697, %v1691, %v1451
  %s1699 = scalar_lea.vmem [#allocation2], 40
  %v1700 = vld [vmem:[%s1699] sm:$0xff]
  %s1701 = scalar_lea.vmem [#allocation3], 40
  %v1702 = vld [vmem:[%s1701] sm:$0xff]
  %s1703 = scalar_lea.vmem [#allocation4], 40
  %v1704 = vld [vmem:[%s1703] sm:$0xff]
  %v1706 = vsel %vm60, %v1691, 0
  %1708 = vmatprep.subr.mxu0 0.0
  %1709 = vmatpush1.msra.mxu0 %v446
  %1710 = vmatprep.subr.mxu0 0.0
  %1711 = vmatpush1.msra.mxu0 %v447
  %1712 = vmatprep.subr.mxu0 0.0
  %1713 = vmatpush1.msra.mxu0 %v448
  %1714 = vmatprep.subr.mxu0 0.0
  %1715 = vmatpush1.msra.mxu0 %v449
  %1716 = vmatprep.subr.mxu0 0.0
  %1717 = vmatpush1.msra.mxu0 0.0
  %1718 = vmatprep.subr.mxu0 0.0
  %1719 = vmatpush1.msra.mxu0 0.0
  %1720 = vmatprep.subr.mxu0 0.0
  %1721 = vmatpush1.msra.mxu0 0.0
  %1722 = vmatprep.subr.mxu0 0.0
  %1723 = vmatpush1.msra.mxu0 0.0
  %1724 = vmatprep.subr.mxu0 0.0
  %1725 = vmatpush1.msra.mxu0 0.0
  %1726 = vmatprep.subr.mxu0 0.0
  %1727 = vmatpush1.msra.mxu0 0.0
  %1728 = vmatprep.subr.mxu0 0.0
  %1729 = vmatpush1.msra.mxu0 0.0
  %1730 = vmatprep.subr.mxu0 0.0
  %1731 = vmatpush1.msra.mxu0 0.0
  %1732 = vmatprep.subr.mxu0 0.0
  %1733 = vmatpush1.msra.mxu0 0.0
  %1734 = vmatprep.subr.mxu0 0.0
  %1735 = vmatpush1.msra.mxu0 0.0
  %1736 = vmatprep.subr.mxu0 0.0
  %1737 = vmatpush1.msra.mxu0 0.0
  %1738 = vmatprep.subr.mxu0 0.0
  %1739 = vmatpush1.msra.mxu0 0.0
  %1740 = vmatprep.subr.mxu0 0.0
  %1741 = vmatpush1.msra.mxu0 0.0
  %1742 = vmatprep.subr.mxu0 0.0
  %1743 = vmatpush1.msra.mxu0 0.0
  %1744 = vmatprep.subr.mxu0 0.0
  %1745 = vmatpush1.msra.mxu0 0.0
  %1746 = vmatprep.subr.mxu0 0.0
  %1747 = vmatpush1.msra.mxu0 0.0
  %1748 = vmatprep.subr.mxu0 0.0
  %1749 = vmatpush1.msra.mxu0 0.0
  %1750 = vmatprep.subr.mxu0 0.0
  %1751 = vmatpush1.msra.mxu0 0.0
  %1752 = vmatprep.subr.mxu0 0.0
  %1753 = vmatpush1.msra.mxu0 0.0
  %1754 = vmatprep.subr.mxu0 0.0
  %1755 = vmatpush1.msra.mxu0 0.0
  %1756 = vmatprep.subr.mxu0 0.0
  %1757 = vmatpush1.msra.mxu0 0.0
  %1758 = vmatprep.subr.mxu0 0.0
  %1759 = vmatpush1.msra.mxu0 0.0
  %1760 = vmatprep.subr.mxu0 0.0
  %1761 = vmatpush1.msra.mxu0 0.0
  %1762 = vmatprep.subr.mxu0 0.0
  %1763 = vmatpush1.msra.mxu0 0.0
  %1764 = vmatprep.subr.mxu0 0.0
  %1765 = vmatpush1.msra.mxu0 0.0
  %1766 = vmatprep.subr.mxu0 0.0
  %1767 = vmatpush1.msra.mxu0 0.0
  %1768 = vmatprep.subr.mxu0 0.0
  %1769 = vmatpush1.msra.mxu0 0.0
  %1770 = vmatprep.subr.mxu0 0.0
  %1771 = vmatpush1.msra.mxu0 0.0
  %1772 = vmatprep.mubr.f32.mxu0 0.0
  %1773 = vmatmul.mubr.f32.gmra.mrb[0].mxu0 %v1706
  %v1774 = vpop.f32.mrb[0].mxu0
  %v1775 = vadd.f32 0.0, %v1774
  %v1776 = vpop.f32.mrb[0].mxu0
  %1777 = vdwg.mxu0
  %1778 = vmatprep.subr.mxu0 0.0
  %1779 = vmatpush1.msra.mxu0 %v450
  %1780 = vmatprep.subr.mxu0 0.0
  %1781 = vmatpush1.msra.mxu0 %v451
  %1782 = vmatprep.subr.mxu0 0.0
  %1783 = vmatpush1.msra.mxu0 %v452
  %1784 = vmatprep.subr.mxu0 0.0
  %1785 = vmatpush1.msra.mxu0 %v453
  %1786 = vmatprep.subr.mxu0 0.0
  %1787 = vmatpush1.msra.mxu0 0.0
  %1788 = vmatprep.subr.mxu0 0.0
  %1789 = vmatpush1.msra.mxu0 0.0
  %1790 = vmatprep.subr.mxu0 0.0
  %1791 = vmatpush1.msra.mxu0 0.0
  %1792 = vmatprep.subr.mxu0 0.0
  %1793 = vmatpush1.msra.mxu0 0.0
  %1794 = vmatprep.subr.mxu0 0.0
  %1795 = vmatpush1.msra.mxu0 0.0
  %1796 = vmatprep.subr.mxu0 0.0
  %1797 = vmatpush1.msra.mxu0 0.0
  %1798 = vmatprep.subr.mxu0 0.0
  %1799 = vmatpush1.msra.mxu0 0.0
  %1800 = vmatprep.subr.mxu0 0.0
  %1801 = vmatpush1.msra.mxu0 0.0
  %1802 = vmatprep.subr.mxu0 0.0
  %1803 = vmatpush1.msra.mxu0 0.0
  %1804 = vmatprep.subr.mxu0 0.0
  %1805 = vmatpush1.msra.mxu0 0.0
  %1806 = vmatprep.subr.mxu0 0.0
  %1807 = vmatpush1.msra.mxu0 0.0
  %1808 = vmatprep.subr.mxu0 0.0
  %1809 = vmatpush1.msra.mxu0 0.0
  %1810 = vmatprep.subr.mxu0 0.0
  %1811 = vmatpush1.msra.mxu0 0.0
  %1812 = vmatprep.subr.mxu0 0.0
  %1813 = vmatpush1.msra.mxu0 0.0
  %1814 = vmatprep.subr.mxu0 0.0
  %1815 = vmatpush1.msra.mxu0 0.0
  %1816 = vmatprep.subr.mxu0 0.0
  %1817 = vmatpush1.msra.mxu0 0.0
  %1818 = vmatprep.subr.mxu0 0.0
  %1819 = vmatpush1.msra.mxu0 0.0
  %1820 = vmatprep.subr.mxu0 0.0
  %1821 = vmatpush1.msra.mxu0 0.0
  %1822 = vmatprep.subr.mxu0 0.0
  %1823 = vmatpush1.msra.mxu0 0.0
  %1824 = vmatprep.subr.mxu0 0.0
  %1825 = vmatpush1.msra.mxu0 0.0
  %1826 = vmatprep.subr.mxu0 0.0
  %1827 = vmatpush1.msra.mxu0 0.0
  %1828 = vmatprep.subr.mxu0 0.0
  %1829 = vmatpush1.msra.mxu0 0.0
  %1830 = vmatprep.subr.mxu0 0.0
  %1831 = vmatpush1.msra.mxu0 0.0
  %1832 = vmatprep.subr.mxu0 0.0
  %1833 = vmatpush1.msra.mxu0 0.0
  %1834 = vmatprep.subr.mxu0 0.0
  %1835 = vmatpush1.msra.mxu0 0.0
  %1836 = vmatprep.subr.mxu0 0.0
  %1837 = vmatpush1.msra.mxu0 0.0
  %1838 = vmatprep.subr.mxu0 0.0
  %1839 = vmatpush1.msra.mxu0 0.0
  %1840 = vmatprep.subr.mxu0 0.0
  %1841 = vmatpush1.msra.mxu0 0.0
  %1842 = vmatprep.mubr.f32.mxu0 0.0
  %1843 = vmatmul.mubr.f32.gmra.mrb[0].mxu0 %v1706
  %v1844 = vpop.f32.mrb[0].mxu0
  %v1845 = vadd.f32 0.0, %v1844
  %v1846 = vpop.f32.mrb[0].mxu0
  %1847 = vdwg.mxu0
  %1848 = vmatprep.subr.mxu0 0.0
  %1849 = vmatpush1.msra.mxu0 %v454
  %1850 = vmatprep.subr.mxu0 0.0
  %1851 = vmatpush1.msra.mxu0 %v455
  %1852 = vmatprep.subr.mxu0 0.0
  %1853 = vmatpush1.msra.mxu0 %v456
  %1854 = vmatprep.subr.mxu0 0.0
  %1855 = vmatpush1.msra.mxu0 %v457
  %1856 = vmatprep.subr.mxu0 0.0
  %1857 = vmatpush1.msra.mxu0 0.0
  %1858 = vmatprep.subr.mxu0 0.0
  %1859 = vmatpush1.msra.mxu0 0.0
  %1860 = vmatprep.subr.mxu0 0.0
  %1861 = vmatpush1.msra.mxu0 0.0
  %1862 = vmatprep.subr.mxu0 0.0
  %1863 = vmatpush1.msra.mxu0 0.0
  %1864 = vmatprep.subr.mxu0 0.0
  %1865 = vmatpush1.msra.mxu0 0.0
  %1866 = vmatprep.subr.mxu0 0.0
  %1867 = vmatpush1.msra.mxu0 0.0
  %1868 = vmatprep.subr.mxu0 0.0
  %1869 = vmatpush1.msra.mxu0 0.0
  %1870 = vmatprep.subr.mxu0 0.0
  %1871 = vmatpush1.msra.mxu0 0.0
  %1872 = vmatprep.subr.mxu0 0.0
  %1873 = vmatpush1.msra.mxu0 0.0
  %1874 = vmatprep.subr.mxu0 0.0
  %1875 = vmatpush1.msra.mxu0 0.0
  %1876 = vmatprep.subr.mxu0 0.0
  %1877 = vmatpush1.msra.mxu0 0.0
  %1878 = vmatprep.subr.mxu0 0.0
  %1879 = vmatpush1.msra.mxu0 0.0
  %1880 = vmatprep.subr.mxu0 0.0
  %1881 = vmatpush1.msra.mxu0 0.0
  %1882 = vmatprep.subr.mxu0 0.0
  %1883 = vmatpush1.msra.mxu0 0.0
  %1884 = vmatprep.subr.mxu0 0.0
  %1885 = vmatpush1.msra.mxu0 0.0
  %1886 = vmatprep.subr.mxu0 0.0
  %1887 = vmatpush1.msra.mxu0 0.0
  %1888 = vmatprep.subr.mxu0 0.0
  %1889 = vmatpush1.msra.mxu0 0.0
  %1890 = vmatprep.subr.mxu0 0.0
  %1891 = vmatpush1.msra.mxu0 0.0
  %1892 = vmatprep.subr.mxu0 0.0
  %1893 = vmatpush1.msra.mxu0 0.0
  %1894 = vmatprep.subr.mxu0 0.0
  %1895 = vmatpush1.msra.mxu0 0.0
  %1896 = vmatprep.subr.mxu0 0.0
  %1897 = vmatpush1.msra.mxu0 0.0
  %1898 = vmatprep.subr.mxu0 0.0
  %1899 = vmatpush1.msra.mxu0 0.0
  %1900 = vmatprep.subr.mxu0 0.0
  %1901 = vmatpush1.msra.mxu0 0.0
  %1902 = vmatprep.subr.mxu0 0.0
  %1903 = vmatpush1.msra.mxu0 0.0
  %1904 = vmatprep.subr.mxu0 0.0
  %1905 = vmatpush1.msra.mxu0 0.0
  %1906 = vmatprep.subr.mxu0 0.0
  %1907 = vmatpush1.msra.mxu0 0.0
  %1908 = vmatprep.subr.mxu0 0.0
  %1909 = vmatpush1.msra.mxu0 0.0
  %1910 = vmatprep.subr.mxu0 0.0
  %1911 = vmatpush1.msra.mxu0 0.0
  %1912 = vmatprep.mubr.f32.mxu0 0.0
  %1913 = vmatmul.mubr.f32.gmra.mrb[0].mxu0 %v1706
  %v1914 = vpop.f32.mrb[0].mxu0
  %v1915 = vadd.f32 %v463, %v1914
  %v1916 = vpop.f32.mrb[0].mxu0
  %1917 = vdwg.mxu0
  %v1918 = vadd.f32 %v1700, %v1775
  %v1919 = vxor.u32 %v1918, 2147483648
  %v1920 = vmul.f32 %v1919, 1.442695
  %v1921 = vpow.pop %v1920
  %v1922 = vadd.f32 %v1921, 1.0
  %v1923 = vrcp.pop %v1922
  %v1924 = vmul.f32 1.0, %v1923
  %v1925 = vadd.f32 %v1702, %v1845
  %v1926 = vxor.u32 %v1925, 2147483648
  %v1927 = vmul.f32 %v1926, 1.442695
  %v1928 = vpow.pop %v1927
  %v1929 = vadd.f32 %v1928, 1.0
  %v1930 = vrcp.pop %v1929
  %v1931 = vmul.f32 1.0, %v1930
  %v1932 = vmul.f32 %v1924, %v1915
  %v1933 = vadd.f32 %v1704, %v1932
  %v1934 = vtanh.pop %v1933
  %v1935 = vsub.f32 1.0, %v1931
  %v1936 = vmul.f32 %v1935, %v1934
  %v1937 = vmul.f32 %v1931, %v1691
  %v1938 = vadd.f32 %v1936, %v1937
  %vm1939 = vcmp.eq.s32.totalorder %v466, 5
  %v1940 = vsel %vm1939, 1, 0
  %1941 = vset.pattern.permute.xlu0 0
  %1942 = vperm.xlu0 %1941, %v1940
  %v1943 = vpop.permute.xlu0 %1942
  %vm1944 = vcmp.eq.s32.totalorder %v1943, 1
  %v1945 = vsel %vm1944, %v1938, %v1698
  %s1946 = scalar_lea.vmem [#allocation2], 48
  %v1947 = vld [vmem:[%s1946] sm:$0xff]
  %s1948 = scalar_lea.vmem [#allocation3], 48
  %v1949 = vld [vmem:[%s1948] sm:$0xff]
  %s1950 = scalar_lea.vmem [#allocation4], 48
  %v1951 = vld [vmem:[%s1950] sm:$0xff]
  %v1953 = vsel %vm60, %v1938, 0
  %1955 = vmatprep.subr.mxu0 0.0
  %1956 = vmatpush1.msra.mxu0 %v446
  %1957 = vmatprep.subr.mxu0 0.0
  %1958 = vmatpush1.msra.mxu0 %v447
  %1959 = vmatprep.subr.mxu0 0.0
  %1960 = vmatpush1.msra.mxu0 %v448
  %1961 = vmatprep.subr.mxu0 0.0
  %1962 = vmatpush1.msra.mxu0 %v449
  %1963 = vmatprep.subr.mxu0 0.0
  %1964 = vmatpush1.msra.mxu0 0.0
  %1965 = vmatprep.subr.mxu0 0.0
  %1966 = vmatpush1.msra.mxu0 0.0
  %1967 = vmatprep.subr.mxu0 0.0
  %1968 = vmatpush1.msra.mxu0 0.0
  %1969 = vmatprep.subr.mxu0 0.0
  %1970 = vmatpush1.msra.mxu0 0.0
  %1971 = vmatprep.subr.mxu0 0.0
  %1972 = vmatpush1.msra.mxu0 0.0
  %1973 = vmatprep.subr.mxu0 0.0
  %1974 = vmatpush1.msra.mxu0 0.0
  %1975 = vmatprep.subr.mxu0 0.0
  %1976 = vmatpush1.msra.mxu0 0.0
  %1977 = vmatprep.subr.mxu0 0.0
  %1978 = vmatpush1.msra.mxu0 0.0
  %1979 = vmatprep.subr.mxu0 0.0
  %1980 = vmatpush1.msra.mxu0 0.0
  %1981 = vmatprep.subr.mxu0 0.0
  %1982 = vmatpush1.msra.mxu0 0.0
  %1983 = vmatprep.subr.mxu0 0.0
  %1984 = vmatpush1.msra.mxu0 0.0
  %1985 = vmatprep.subr.mxu0 0.0
  %1986 = vmatpush1.msra.mxu0 0.0
  %1987 = vmatprep.subr.mxu0 0.0
  %1988 = vmatpush1.msra.mxu0 0.0
  %1989 = vmatprep.subr.mxu0 0.0
  %1990 = vmatpush1.msra.mxu0 0.0
  %1991 = vmatprep.subr.mxu0 0.0
  %1992 = vmatpush1.msra.mxu0 0.0
  %1993 = vmatprep.subr.mxu0 0.0
  %1994 = vmatpush1.msra.mxu0 0.0
  %1995 = vmatprep.subr.mxu0 0.0
  %1996 = vmatpush1.msra.mxu0 0.0
  %1997 = vmatprep.subr.mxu0 0.0
  %1998 = vmatpush1.msra.mxu0 0.0
  %1999 = vmatprep.subr.mxu0 0.0
  %2000 = vmatpush1.msra.mxu0 0.0
  %2001 = vmatprep.subr.mxu0 0.0
  %2002 = vmatpush1.msra.mxu0 0.0
  %2003 = vmatprep.subr.mxu0 0.0
  %2004 = vmatpush1.msra.mxu0 0.0
  %2005 = vmatprep.subr.mxu0 0.0
  %2006 = vmatpush1.msra.mxu0 0.0
  %2007 = vmatprep.subr.mxu0 0.0
  %2008 = vmatpush1.msra.mxu0 0.0
  %2009 = vmatprep.subr.mxu0 0.0
  %2010 = vmatpush1.msra.mxu0 0.0
  %2011 = vmatprep.subr.mxu0 0.0
  %2012 = vmatpush1.msra.mxu0 0.0
  %2013 = vmatprep.subr.mxu0 0.0
  %2014 = vmatpush1.msra.mxu0 0.0
  %2015 = vmatprep.subr.mxu0 0.0
  %2016 = vmatpush1.msra.mxu0 0.0
  %2017 = vmatprep.subr.mxu0 0.0
  %2018 = vmatpush1.msra.mxu0 0.0
  %2019 = vmatprep.mubr.f32.mxu0 0.0
  %2020 = vmatmul.mubr.f32.gmra.mrb[0].mxu0 %v1953
  %v2021 = vpop.f32.mrb[0].mxu0
  %v2022 = vadd.f32 0.0, %v2021
  %v2023 = vpop.f32.mrb[0].mxu0
  %2024 = vdwg.mxu0
  %2025 = vmatprep.subr.mxu0 0.0
  %2026 = vmatpush1.msra.mxu0 %v450
  %2027 = vmatprep.subr.mxu0 0.0
  %2028 = vmatpush1.msra.mxu0 %v451
  %2029 = vmatprep.subr.mxu0 0.0
  %2030 = vmatpush1.msra.mxu0 %v452
  %2031 = vmatprep.subr.mxu0 0.0
  %2032 = vmatpush1.msra.mxu0 %v453
  %2033 = vmatprep.subr.mxu0 0.0
  %2034 = vmatpush1.msra.mxu0 0.0
  %2035 = vmatprep.subr.mxu0 0.0
  %2036 = vmatpush1.msra.mxu0 0.0
  %2037 = vmatprep.subr.mxu0 0.0
  %2038 = vmatpush1.msra.mxu0 0.0
  %2039 = vmatprep.subr.mxu0 0.0
  %2040 = vmatpush1.msra.mxu0 0.0
  %2041 = vmatprep.subr.mxu0 0.0
  %2042 = vmatpush1.msra.mxu0 0.0
  %2043 = vmatprep.subr.mxu0 0.0
  %2044 = vmatpush1.msra.mxu0 0.0
  %2045 = vmatprep.subr.mxu0 0.0
  %2046 = vmatpush1.msra.mxu0 0.0
  %2047 = vmatprep.subr.mxu0 0.0
  %2048 = vmatpush1.msra.mxu0 0.0
  %2049 = vmatprep.subr.mxu0 0.0
  %2050 = vmatpush1.msra.mxu0 0.0
  %2051 = vmatprep.subr.mxu0 0.0
  %2052 = vmatpush1.msra.mxu0 0.0
  %2053 = vmatprep.subr.mxu0 0.0
  %2054 = vmatpush1.msra.mxu0 0.0
  %2055 = vmatprep.subr.mxu0 0.0
  %2056 = vmatpush1.msra.mxu0 0.0
  %2057 = vmatprep.subr.mxu0 0.0
  %2058 = vmatpush1.msra.mxu0 0.0
  %2059 = vmatprep.subr.mxu0 0.0
  %2060 = vmatpush1.msra.mxu0 0.0
  %2061 = vmatprep.subr.mxu0 0.0
  %2062 = vmatpush1.msra.mxu0 0.0
  %2063 = vmatprep.subr.mxu0 0.0
  %2064 = vmatpush1.msra.mxu0 0.0
  %2065 = vmatprep.subr.mxu0 0.0
  %2066 = vmatpush1.msra.mxu0 0.0
  %2067 = vmatprep.subr.mxu0 0.0
  %2068 = vmatpush1.msra.mxu0 0.0
  %2069 = vmatprep.subr.mxu0 0.0
  %2070 = vmatpush1.msra.mxu0 0.0
  %2071 = vmatprep.subr.mxu0 0.0
  %2072 = vmatpush1.msra.mxu0 0.0
  %2073 = vmatprep.subr.mxu0 0.0
  %2074 = vmatpush1.msra.mxu0 0.0
  %2075 = vmatprep.subr.mxu0 0.0
  %2076 = vmatpush1.msra.mxu0 0.0
  %2077 = vmatprep.subr.mxu0 0.0
  %2078 = vmatpush1.msra.mxu0 0.0
  %2079 = vmatprep.subr.mxu0 0.0
  %2080 = vmatpush1.msra.mxu0 0.0
  %2081 = vmatprep.subr.mxu0 0.0
  %2082 = vmatpush1.msra.mxu0 0.0
  %2083 = vmatprep.subr.mxu0 0.0
  %2084 = vmatpush1.msra.mxu0 0.0
  %2085 = vmatprep.subr.mxu0 0.0
  %2086 = vmatpush1.msra.mxu0 0.0
  %2087 = vmatprep.subr.mxu0 0.0
  %2088 = vmatpush1.msra.mxu0 0.0
  %2089 = vmatprep.mubr.f32.mxu0 0.0
  %2090 = vmatmul.mubr.f32.gmra.mrb[0].mxu0 %v1953
  %v2091 = vpop.f32.mrb[0].mxu0
  %v2092 = vadd.f32 0.0, %v2091
  %v2093 = vpop.f32.mrb[0].mxu0
  %2094 = vdwg.mxu0
  %2095 = vmatprep.subr.mxu0 0.0
  %2096 = vmatpush1.msra.mxu0 %v454
  %2097 = vmatprep.subr.mxu0 0.0
  %2098 = vmatpush1.msra.mxu0 %v455
  %2099 = vmatprep.subr.mxu0 0.0
  %2100 = vmatpush1.msra.mxu0 %v456
  %2101 = vmatprep.subr.mxu0 0.0
  %2102 = vmatpush1.msra.mxu0 %v457
  %2103 = vmatprep.subr.mxu0 0.0
  %2104 = vmatpush1.msra.mxu0 0.0
  %2105 = vmatprep.subr.mxu0 0.0
  %2106 = vmatpush1.msra.mxu0 0.0
  %2107 = vmatprep.subr.mxu0 0.0
  %2108 = vmatpush1.msra.mxu0 0.0
  %2109 = vmatprep.subr.mxu0 0.0
  %2110 = vmatpush1.msra.mxu0 0.0
  %2111 = vmatprep.subr.mxu0 0.0
  %2112 = vmatpush1.msra.mxu0 0.0
  %2113 = vmatprep.subr.mxu0 0.0
  %2114 = vmatpush1.msra.mxu0 0.0
  %2115 = vmatprep.subr.mxu0 0.0
  %2116 = vmatpush1.msra.mxu0 0.0
  %2117 = vmatprep.subr.mxu0 0.0
  %2118 = vmatpush1.msra.mxu0 0.0
  %2119 = vmatprep.subr.mxu0 0.0
  %2120 = vmatpush1.msra.mxu0 0.0
  %2121 = vmatprep.subr.mxu0 0.0
  %2122 = vmatpush1.msra.mxu0 0.0
  %2123 = vmatprep.subr.mxu0 0.0
  %2124 = vmatpush1.msra.mxu0 0.0
  %2125 = vmatprep.subr.mxu0 0.0
  %2126 = vmatpush1.msra.mxu0 0.0
  %2127 = vmatprep.subr.mxu0 0.0
  %2128 = vmatpush1.msra.mxu0 0.0
  %2129 = vmatprep.subr.mxu0 0.0
  %2130 = vmatpush1.msra.mxu0 0.0
  %2131 = vmatprep.subr.mxu0 0.0
  %2132 = vmatpush1.msra.mxu0 0.0
  %2133 = vmatprep.subr.mxu0 0.0
  %2134 = vmatpush1.msra.mxu0 0.0
  %2135 = vmatprep.subr.mxu0 0.0
  %2136 = vmatpush1.msra.mxu0 0.0
  %2137 = vmatprep.subr.mxu0 0.0
  %2138 = vmatpush1.msra.mxu0 0.0
  %2139 = vmatprep.subr.mxu0 0.0
  %2140 = vmatpush1.msra.mxu0 0.0
  %2141 = vmatprep.subr.mxu0 0.0
  %2142 = vmatpush1.msra.mxu0 0.0
  %2143 = vmatprep.subr.mxu0 0.0
  %2144 = vmatpush1.msra.mxu0 0.0
  %2145 = vmatprep.subr.mxu0 0.0
  %2146 = vmatpush1.msra.mxu0 0.0
  %2147 = vmatprep.subr.mxu0 0.0
  %2148 = vmatpush1.msra.mxu0 0.0
  %2149 = vmatprep.subr.mxu0 0.0
  %2150 = vmatpush1.msra.mxu0 0.0
  %2151 = vmatprep.subr.mxu0 0.0
  %2152 = vmatpush1.msra.mxu0 0.0
  %2153 = vmatprep.subr.mxu0 0.0
  %2154 = vmatpush1.msra.mxu0 0.0
  %2155 = vmatprep.subr.mxu0 0.0
  %2156 = vmatpush1.msra.mxu0 0.0
  %2157 = vmatprep.subr.mxu0 0.0
  %2158 = vmatpush1.msra.mxu0 0.0
  %2159 = vmatprep.mubr.f32.mxu0 0.0
  %2160 = vmatmul.mubr.f32.gmra.mrb[0].mxu0 %v1953
  %v2161 = vpop.f32.mrb[0].mxu0
  %v2162 = vadd.f32 %v463, %v2161
  %v2163 = vpop.f32.mrb[0].mxu0
  %2164 = vdwg.mxu0
  %v2165 = vadd.f32 %v1947, %v2022
  %v2166 = vxor.u32 %v2165, 2147483648
  %v2167 = vmul.f32 %v2166, 1.442695
  %v2168 = vpow.pop %v2167
  %v2169 = vadd.f32 %v2168, 1.0
  %v2170 = vrcp.pop %v2169
  %v2171 = vmul.f32 1.0, %v2170
  %v2172 = vadd.f32 %v1949, %v2092
  %v2173 = vxor.u32 %v2172, 2147483648
  %v2174 = vmul.f32 %v2173, 1.442695
  %v2175 = vpow.pop %v2174
  %v2176 = vadd.f32 %v2175, 1.0
  %v2177 = vrcp.pop %v2176
  %v2178 = vmul.f32 1.0, %v2177
  %v2179 = vmul.f32 %v2171, %v2162
  %v2180 = vadd.f32 %v1951, %v2179
  %v2181 = vtanh.pop %v2180
  %v2182 = vsub.f32 1.0, %v2178
  %v2183 = vmul.f32 %v2182, %v2181
  %v2184 = vmul.f32 %v2178, %v1938
  %v2185 = vadd.f32 %v2183, %v2184
  %vm2186 = vcmp.eq.s32.totalorder %v466, 6
  %v2187 = vsel %vm2186, 1, 0
  %2188 = vset.pattern.permute.xlu0 0
  %2189 = vperm.xlu0 %2188, %v2187
  %v2190 = vpop.permute.xlu0 %2189
  %vm2191 = vcmp.eq.s32.totalorder %v2190, 1
  %v2192 = vsel %vm2191, %v2185, %v1945
  %s2193 = scalar_lea.vmem [#allocation2], 56
  %v2194 = vld [vmem:[%s2193] sm:$0xff]
  %s2195 = scalar_lea.vmem [#allocation3], 56
  %v2196 = vld [vmem:[%s2195] sm:$0xff]
  %s2197 = scalar_lea.vmem [#allocation4], 56
  %v2198 = vld [vmem:[%s2197] sm:$0xff]
  %v2200 = vsel %vm60, %v2185, 0
  %2202 = vmatprep.subr.mxu0 0.0
  %2203 = vmatpush1.msra.mxu0 %v446
  %2204 = vmatprep.subr.mxu0 0.0
  %2205 = vmatpush1.msra.mxu0 %v447
  %2206 = vmatprep.subr.mxu0 0.0
  %2207 = vmatpush1.msra.mxu0 %v448
  %2208 = vmatprep.subr.mxu0 0.0
  %2209 = vmatpush1.msra.mxu0 %v449
  %2210 = vmatprep.subr.mxu0 0.0
  %2211 = vmatpush1.msra.mxu0 0.0
  %2212 = vmatprep.subr.mxu0 0.0
  %2213 = vmatpush1.msra.mxu0 0.0
  %2214 = vmatprep.subr.mxu0 0.0
  %2215 = vmatpush1.msra.mxu0 0.0
  %2216 = vmatprep.subr.mxu0 0.0
  %2217 = vmatpush1.msra.mxu0 0.0
  %2218 = vmatprep.subr.mxu0 0.0
  %2219 = vmatpush1.msra.mxu0 0.0
  %2220 = vmatprep.subr.mxu0 0.0
  %2221 = vmatpush1.msra.mxu0 0.0
  %2222 = vmatprep.subr.mxu0 0.0
  %2223 = vmatpush1.msra.mxu0 0.0
  %2224 = vmatprep.subr.mxu0 0.0
  %2225 = vmatpush1.msra.mxu0 0.0
  %2226 = vmatprep.subr.mxu0 0.0
  %2227 = vmatpush1.msra.mxu0 0.0
  %2228 = vmatprep.subr.mxu0 0.0
  %2229 = vmatpush1.msra.mxu0 0.0
  %2230 = vmatprep.subr.mxu0 0.0
  %2231 = vmatpush1.msra.mxu0 0.0
  %2232 = vmatprep.subr.mxu0 0.0
  %2233 = vmatpush1.msra.mxu0 0.0
  %2234 = vmatprep.subr.mxu0 0.0
  %2235 = vmatpush1.msra.mxu0 0.0
  %2236 = vmatprep.subr.mxu0 0.0
  %2237 = vmatpush1.msra.mxu0 0.0
  %2238 = vmatprep.subr.mxu0 0.0
  %2239 = vmatpush1.msra.mxu0 0.0
  %2240 = vmatprep.subr.mxu0 0.0
  %2241 = vmatpush1.msra.mxu0 0.0
  %2242 = vmatprep.subr.mxu0 0.0
  %2243 = vmatpush1.msra.mxu0 0.0
  %2244 = vmatprep.subr.mxu0 0.0
  %2245 = vmatpush1.msra.mxu0 0.0
  %2246 = vmatprep.subr.mxu0 0.0
  %2247 = vmatpush1.msra.mxu0 0.0
  %2248 = vmatprep.subr.mxu0 0.0
  %2249 = vmatpush1.msra.mxu0 0.0
  %2250 = vmatprep.subr.mxu0 0.0
  %2251 = vmatpush1.msra.mxu0 0.0
  %2252 = vmatprep.subr.mxu0 0.0
  %2253 = vmatpush1.msra.mxu0 0.0
  %2254 = vmatprep.subr.mxu0 0.0
  %2255 = vmatpush1.msra.mxu0 0.0
  %2256 = vmatprep.subr.mxu0 0.0
  %2257 = vmatpush1.msra.mxu0 0.0
  %2258 = vmatprep.subr.mxu0 0.0
  %2259 = vmatpush1.msra.mxu0 0.0
  %2260 = vmatprep.subr.mxu0 0.0
  %2261 = vmatpush1.msra.mxu0 0.0
  %2262 = vmatprep.subr.mxu0 0.0
  %2263 = vmatpush1.msra.mxu0 0.0
  %2264 = vmatprep.subr.mxu0 0.0
  %2265 = vmatpush1.msra.mxu0 0.0
  %2266 = vmatprep.mubr.f32.mxu0 0.0
  %2267 = vmatmul.mubr.f32.gmra.mrb[0].mxu0 %v2200
  %v2268 = vpop.f32.mrb[0].mxu0
  %v2269 = vadd.f32 0.0, %v2268
  %v2270 = vpop.f32.mrb[0].mxu0
  %2271 = vdwg.mxu0
  %2272 = vmatprep.subr.mxu0 0.0
  %2273 = vmatpush1.msra.mxu0 %v450
  %2274 = vmatprep.subr.mxu0 0.0
  %2275 = vmatpush1.msra.mxu0 %v451
  %2276 = vmatprep.subr.mxu0 0.0
  %2277 = vmatpush1.msra.mxu0 %v452
  %2278 = vmatprep.subr.mxu0 0.0
  %2279 = vmatpush1.msra.mxu0 %v453
  %2280 = vmatprep.subr.mxu0 0.0
  %2281 = vmatpush1.msra.mxu0 0.0
  %2282 = vmatprep.subr.mxu0 0.0
  %2283 = vmatpush1.msra.mxu0 0.0
  %2284 = vmatprep.subr.mxu0 0.0
  %2285 = vmatpush1.msra.mxu0 0.0
  %2286 = vmatprep.subr.mxu0 0.0
  %2287 = vmatpush1.msra.mxu0 0.0
  %2288 = vmatprep.subr.mxu0 0.0
  %2289 = vmatpush1.msra.mxu0 0.0
  %2290 = vmatprep.subr.mxu0 0.0
  %2291 = vmatpush1.msra.mxu0 0.0
  %2292 = vmatprep.subr.mxu0 0.0
  %2293 = vmatpush1.msra.mxu0 0.0
  %2294 = vmatprep.subr.mxu0 0.0
  %2295 = vmatpush1.msra.mxu0 0.0
  %2296 = vmatprep.subr.mxu0 0.0
  %2297 = vmatpush1.msra.mxu0 0.0
  %2298 = vmatprep.subr.mxu0 0.0
  %2299 = vmatpush1.msra.mxu0 0.0
  %2300 = vmatprep.subr.mxu0 0.0
  %2301 = vmatpush1.msra.mxu0 0.0
  %2302 = vmatprep.subr.mxu0 0.0
  %2303 = vmatpush1.msra.mxu0 0.0
  %2304 = vmatprep.subr.mxu0 0.0
  %2305 = vmatpush1.msra.mxu0 0.0
  %2306 = vmatprep.subr.mxu0 0.0
  %2307 = vmatpush1.msra.mxu0 0.0
  %2308 = vmatprep.subr.mxu0 0.0
  %2309 = vmatpush1.msra.mxu0 0.0
  %2310 = vmatprep.subr.mxu0 0.0
  %2311 = vmatpush1.msra.mxu0 0.0
  %2312 = vmatprep.subr.mxu0 0.0
  %2313 = vmatpush1.msra.mxu0 0.0
  %2314 = vmatprep.subr.mxu0 0.0
  %2315 = vmatpush1.msra.mxu0 0.0
  %2316 = vmatprep.subr.mxu0 0.0
  %2317 = vmatpush1.msra.mxu0 0.0
  %2318 = vmatprep.subr.mxu0 0.0
  %2319 = vmatpush1.msra.mxu0 0.0
  %2320 = vmatprep.subr.mxu0 0.0
  %2321 = vmatpush1.msra.mxu0 0.0
  %2322 = vmatprep.subr.mxu0 0.0
  %2323 = vmatpush1.msra.mxu0 0.0
  %2324 = vmatprep.subr.mxu0 0.0
  %2325 = vmatpush1.msra.mxu0 0.0
  %2326 = vmatprep.subr.mxu0 0.0
  %2327 = vmatpush1.msra.mxu0 0.0
  %2328 = vmatprep.subr.mxu0 0.0
  %2329 = vmatpush1.msra.mxu0 0.0
  %2330 = vmatprep.subr.mxu0 0.0
  %2331 = vmatpush1.msra.mxu0 0.0
  %2332 = vmatprep.subr.mxu0 0.0
  %2333 = vmatpush1.msra.mxu0 0.0
  %2334 = vmatprep.subr.mxu0 0.0
  %2335 = vmatpush1.msra.mxu0 0.0
  %2336 = vmatprep.mubr.f32.mxu0 0.0
  %2337 = vmatmul.mubr.f32.gmra.mrb[0].mxu0 %v2200
  %v2338 = vpop.f32.mrb[0].mxu0
  %v2339 = vadd.f32 0.0, %v2338
  %v2340 = vpop.f32.mrb[0].mxu0
  %2341 = vdwg.mxu0
  %2342 = vmatprep.subr.mxu0 0.0
  %2343 = vmatpush1.msra.mxu0 %v454
  %2344 = vmatprep.subr.mxu0 0.0
  %2345 = vmatpush1.msra.mxu0 %v455
  %2346 = vmatprep.subr.mxu0 0.0
  %2347 = vmatpush1.msra.mxu0 %v456
  %2348 = vmatprep.subr.mxu0 0.0
  %2349 = vmatpush1.msra.mxu0 %v457
  %2350 = vmatprep.subr.mxu0 0.0
  %2351 = vmatpush1.msra.mxu0 0.0
  %2352 = vmatprep.subr.mxu0 0.0
  %2353 = vmatpush1.msra.mxu0 0.0
  %2354 = vmatprep.subr.mxu0 0.0
  %2355 = vmatpush1.msra.mxu0 0.0
  %2356 = vmatprep.subr.mxu0 0.0
  %2357 = vmatpush1.msra.mxu0 0.0
  %2358 = vmatprep.subr.mxu0 0.0
  %2359 = vmatpush1.msra.mxu0 0.0
  %2360 = vmatprep.subr.mxu0 0.0
  %2361 = vmatpush1.msra.mxu0 0.0
  %2362 = vmatprep.subr.mxu0 0.0
  %2363 = vmatpush1.msra.mxu0 0.0
  %2364 = vmatprep.subr.mxu0 0.0
  %2365 = vmatpush1.msra.mxu0 0.0
  %2366 = vmatprep.subr.mxu0 0.0
  %2367 = vmatpush1.msra.mxu0 0.0
  %2368 = vmatprep.subr.mxu0 0.0
  %2369 = vmatpush1.msra.mxu0 0.0
  %2370 = vmatprep.subr.mxu0 0.0
  %2371 = vmatpush1.msra.mxu0 0.0
  %2372 = vmatprep.subr.mxu0 0.0
  %2373 = vmatpush1.msra.mxu0 0.0
  %2374 = vmatprep.subr.mxu0 0.0
  %2375 = vmatpush1.msra.mxu0 0.0
  %2376 = vmatprep.subr.mxu0 0.0
  %2377 = vmatpush1.msra.mxu0 0.0
  %2378 = vmatprep.subr.mxu0 0.0
  %2379 = vmatpush1.msra.mxu0 0.0
  %2380 = vmatprep.subr.mxu0 0.0
  %2381 = vmatpush1.msra.mxu0 0.0
  %2382 = vmatprep.subr.mxu0 0.0
  %2383 = vmatpush1.msra.mxu0 0.0
  %2384 = vmatprep.subr.mxu0 0.0
  %2385 = vmatpush1.msra.mxu0 0.0
  %2386 = vmatprep.subr.mxu0 0.0
  %2387 = vmatpush1.msra.mxu0 0.0
  %2388 = vmatprep.subr.mxu0 0.0
  %2389 = vmatpush1.msra.mxu0 0.0
  %2390 = vmatprep.subr.mxu0 0.0
  %2391 = vmatpush1.msra.mxu0 0.0
  %2392 = vmatprep.subr.mxu0 0.0
  %2393 = vmatpush1.msra.mxu0 0.0
  %2394 = vmatprep.subr.mxu0 0.0
  %2395 = vmatpush1.msra.mxu0 0.0
  %2396 = vmatprep.subr.mxu0 0.0
  %2397 = vmatpush1.msra.mxu0 0.0
  %2398 = vmatprep.subr.mxu0 0.0
  %2399 = vmatpush1.msra.mxu0 0.0
  %2400 = vmatprep.subr.mxu0 0.0
  %2401 = vmatpush1.msra.mxu0 0.0
  %2402 = vmatprep.subr.mxu0 0.0
  %2403 = vmatpush1.msra.mxu0 0.0
  %2404 = vmatprep.subr.mxu0 0.0
  %2405 = vmatpush1.msra.mxu0 0.0
  %2406 = vmatprep.mubr.f32.mxu0 0.0
  %2407 = vmatmul.mubr.f32.gmra.mrb[0].mxu0 %v2200
  %v2408 = vpop.f32.mrb[0].mxu0
  %v2409 = vadd.f32 %v463, %v2408
  %v2410 = vpop.f32.mrb[0].mxu0
  %2411 = vdwg.mxu0
  %v2412 = vadd.f32 %v2194, %v2269
  %v2413 = vxor.u32 %v2412, 2147483648
  %v2414 = vmul.f32 %v2413, 1.442695
  %v2415 = vpow.pop %v2414
  %v2416 = vadd.f32 %v2415, 1.0
  %v2417 = vrcp.pop %v2416
  %v2418 = vmul.f32 1.0, %v2417
  %v2419 = vadd.f32 %v2196, %v2339
  %v2420 = vxor.u32 %v2419, 2147483648
  %v2421 = vmul.f32 %v2420, 1.442695
  %v2422 = vpow.pop %v2421
  %v2423 = vadd.f32 %v2422, 1.0
  %v2424 = vrcp.pop %v2423
  %v2425 = vmul.f32 1.0, %v2424
  %v2426 = vmul.f32 %v2418, %v2409
  %v2427 = vadd.f32 %v2198, %v2426
  %v2428 = vtanh.pop %v2427
  %v2429 = vsub.f32 1.0, %v2425
  %v2430 = vmul.f32 %v2429, %v2428
  %v2431 = vmul.f32 %v2425, %v2185
  %v2432 = vadd.f32 %v2430, %v2431
  %vm2433 = vcmp.eq.s32.totalorder %v466, 7
  %v2434 = vsel %vm2433, 1, 0
  %2435 = vset.pattern.permute.xlu0 0
  %2436 = vperm.xlu0 %2435, %v2434
  %v2437 = vpop.permute.xlu0 %2436
  %vm2438 = vcmp.eq.s32.totalorder %v2437, 1
  %v2439 = vsel %vm2438, %v2432, %v2192
  %2440 = vst.msk [vmem:[%s12] sm:$0xff] %vm60, %v2439
  // Predicated region
  $region50: #{e2e_forward.2} parent=0 // pred_check
    _
  $region51: #{e2e_forward.2} parent=0 // pred_check_branch
    %2442 = sbr.rel (0) target = $region53
  $region52: #{e2e_forward.2} parent=0 // pred_region
    _
  $region53: #{e2e_forward.2} parent=0 // pred_fallthru
    _
  // Predicated region
  $region54: #{e2e_forward.2} parent=0 // pred_check
    _
  $region55: #{e2e_forward.2} parent=0 // pred_check_branch
    %2444 = sbr.rel (0) target = $region57
  $region56: #{e2e_forward.2} parent=0 // pred_region
    _
  $region57: #{e2e_forward.2} parent=0 // pred_fallthru
    _

</llo_original>
